<compile_context>
chip_gen: v6e
topology: v6e:2x2x1
jax: 0.10.0
libtpu: 0.0.40
codegen_flags: <defaults>
</compile_context>

<pallas_src>
import jax
import jax.numpy as jnp
import numpy as np
from jax.experimental import pallas as pl
from jax.experimental.pallas import tpu as pltpu

_EPS = 1e-5                              # PyTorch BatchNorm2d default eps
_VMEM_LIMIT = 32 * 1024 * 1024           # safe on v5e / v6e / v7x
_TARGET_BLOCK_BYTES = 4 * 1024 * 1024    # ~4 MiB activation blocks


def _largest_divisor(n, cap, multiple=1):
    """Largest d <= cap with n % d == 0 and d % multiple == 0 (None if none)."""
    cap = max(1, min(n, cap))
    for d in range(cap, 0, -1):
        if n % d == 0 and d % multiple == 0:
            return d
    return None


def _params(ndims):
    return pltpu.CompilerParams(
        dimension_semantics=("parallel",) * ndims,
        vmem_limit_bytes=_VMEM_LIMIT)


# ----------------------------------------------------------------------------
# Kernel 1: (1,7) conv along W, straight off the NCHW input.
# Taps + 'same' padding are folded into a banded weight (Cin, W, W*C1) built
# once in the wrapper, so the kernel is just Cin accumulated dots with a
# lane-dense (.., W*C1) store plus one packed BN-stats tile per block.
# ----------------------------------------------------------------------------
def conv1x7_bn_stats(x_nchw, w1, b1):
    """x_nchw: (N, Cin, H, W) f32; w1: (7, Cin, C1); b1: (C1,).

    Returns raw conv output stored as (N, H, W*C1) plus per-channel
    sum / sum-of-squares for the following BatchNorm."""
    N, Cin, H, W = x_nchw.shape
    C1 = w1.shape[-1]
    D = W * C1

    # Banded (Toeplitz) weight: band[cin, w_in, w_out*C1 + c1] =
    #   w1[w_in - w_out + 3, cin, c1] inside the 7-tap band, 0 outside
    # (the zeros implement the 'same' zero padding).
    wi = jnp.arange(W)[:, None]
    wo = jnp.arange(W)[None, :]
    tap = wi - wo + 3
    valid = (tap >= 0) & (tap < 7)
    taps = jnp.where(valid[:, :, None, None], w1[jnp.clip(tap, 0, 6)], 0.0)
    band = jnp.transpose(taps, (2, 0, 1, 3)).reshape(Cin, W, D)
    b_row = jnp.tile(b1, W).reshape(1, D)          # column order is (w, c1)

    # Tiling: full-image contiguous slabs; >= 2 blocks when possible (v7x).
    img_bytes = Cin * H * W * 4
    tn = _largest_divisor(N, max(1, _TARGET_BLOCK_BYTES // img_bytes)) or 1
    if N // tn < 2 and N > 1:
        tn = _largest_divisor(N, N // 2) or 1
    th = H
    if N // tn < 2 and H % 16 == 0:
        th = H // 2
    gn, gh = N // tn, H // th
    nblk = gn * gh

    def kernel(x_ref, wb_ref, b_ref, y_ref, st_ref):
        x = x_ref[...]                              # (tn, Cin, th, W)
        m = tn * th
        acc = jnp.zeros((m, D), jnp.float32)
        for cin in range(Cin):                      # small accumulated dots
            lhs = x[:, cin, :, :].reshape(m, W)
            acc = acc + jnp.dot(lhs, wb_ref[cin],
                                preferred_element_type=jnp.float32)
        acc = acc + b_ref[...]
        y_ref[...] = acc.reshape(tn, th, D)         # lane-dense store
        st_ref[...] = jnp.concatenate(              # packed BN partial stats
            [jnp.sum(acc, axis=0, keepdims=True),
             jnp.sum(acc * acc, axis=0, keepdims=True)],
            axis=0).reshape(1, 2, D)

    y, st = pl.pallas_call(
        kernel,
        out_shape=(jax.ShapeDtypeStruct((N, H, D), jnp.float32),
                   jax.ShapeDtypeStruct((nblk, 2, D), jnp.float32)),
        grid=(gn, gh),
        in_specs=[pl.BlockSpec((tn, Cin, th, W), lambda i, j: (i, 0, j, 0)),
                  pl.BlockSpec((Cin, W, D), lambda i, j: (0, 0, 0)),
                  pl.BlockSpec((1, D), lambda i, j: (0, 0))],
        out_specs=(pl.BlockSpec((tn, th, D), lambda i, j: (i, j, 0)),
                   pl.BlockSpec((1, 2, D), lambda i, j: (i * gh + j, 0, 0))),
        compiler_params=_params(2),
    )(x_nchw, band, b_row)

    st = jnp.sum(st, axis=0).reshape(2, W, C1).sum(axis=1)   # (2, C1)
    return y, st[0], st[1]


# ----------------------------------------------------------------------------
# Kernel 2: fused BN1-affine + ReLU1 -> (7,1) conv along H.
# Reads one image per step as a (H*W, C1) slab (free reshape of kernel 1's
# output), pads along H in VMEM, accumulates 7 small dots, then does ONE
# aligned (H*W, 128) -> (128, H*W) XLU transpose so the store is directly in
# NCHW element order (lane-dense (C2, H*W) block of an (N*C2, H*W) array).
# ----------------------------------------------------------------------------
def conv7x1_bn_stats_fused(y1, scale1, shift1, w2, b2):
    """y1: (N, H, W*C1) raw conv1 output; w2: (7, C1, C2); b2: (C2,)."""
    N, H, D1 = y1.shape
    C1, C2 = w2.shape[1], w2.shape[2]
    W = D1 // C1
    M = H * W
    spad = ((C2 + 127) // 128) * 128
    assert C2 % 8 == 0, "C2 must be a multiple of 8 for the NCHW store"
    assert M % 8 == 0, "H*W must be a multiple of 8 for the aligned transpose"

    y1v = y1.reshape(N, M, C1)                     # free contiguous view
    sc = scale1.reshape(1, C1)
    sh = shift1.reshape(1, C1)
    b_row = b2.reshape(1, C2)

    def kernel(x_ref, sc_ref, sh_ref, w_ref, b_ref, y_ref, st_ref):
        x = x_ref[0]                               # (H*W, C1)
        x = jnp.maximum(x * sc_ref[...] + sh_ref[...], 0.0)   # BN1 + ReLU1
        zpad = jnp.zeros((3 * W, C1), x.dtype)
        xp = jnp.concatenate([zpad, x, zpad], axis=0)          # 'same' pad (H)
        acc = jnp.zeros((M, C2), jnp.float32)
        for k in range(7):                         # 7 accumulated small dots
            acc = acc + jnp.dot(xp[k * W:k * W + M, :], w_ref[k],
                                preferred_element_type=jnp.float32)
        acc = acc + b_ref[...]
        if spad > C2:                              # pad channels to 128 lanes
            acc = jnp.concatenate(
                [acc, jnp.zeros((M, spad - C2), jnp.float32)], axis=-1)
        st_ref[...] = jnp.concatenate(             # packed BN2 partial stats
            [jnp.sum(acc, axis=0, keepdims=True),
             jnp.sum(acc * acc, axis=0, keepdims=True)],
            axis=0).reshape(1, 2, spad)
        # Aligned XLU transpose -> direct NCHW-order, lane-dense store.
        y_ref[...] = jnp.transpose(acc)[:C2, :]

    y, st = pl.pallas_call(
        kernel,
        out_shape=(jax.ShapeDtypeStruct((N * C2, M), jnp.float32),
                   jax.ShapeDtypeStruct((N, 2, spad), jnp.float32)),
        grid=(N,),
        in_specs=[pl.BlockSpec((1, M, C1), lambda n: (n, 0, 0)),
                  pl.BlockSpec((1, C1), lambda n: (0, 0)),
                  pl.BlockSpec((1, C1), lambda n: (0, 0)),
                  pl.BlockSpec((7, C1, C2), lambda n: (0, 0, 0)),
                  pl.BlockSpec((1, C2), lambda n: (0, 0))],
        out_specs=(pl.BlockSpec((C2, M), lambda n: (n, 0)),
                   pl.BlockSpec((1, 2, spad), lambda n: (n, 0, 0))),
        compiler_params=_params(1),
    )(y1v, sc, sh, w2, b_row)

    st = jnp.sum(st, axis=0)                       # (2, spad)
    return y, st[0, :C2], st[1, :C2]


# ----------------------------------------------------------------------------
# Kernel 3: lane-dense elementwise BN2 affine + ReLU2 on the NCHW-ordered
# (N*C2, H*W) tensor (per-row scale/shift). Output is already NCHW.
# ----------------------------------------------------------------------------
def bn_relu_rows(y, scale_rows, shift_rows):
    R, D = y.shape
    cap = max(8, _TARGET_BLOCK_BYTES // (D * 4))
    tr = _largest_divisor(R, cap, multiple=8) or R
    if R // tr < 2:
        tr = _largest_divisor(R, R // 2, multiple=8) or tr
    g = R // tr

    def kernel(y_ref, sc_ref, sh_ref, o_ref):
        o_ref[...] = jnp.maximum(y_ref[...] * sc_ref[...] + sh_ref[...], 0.0)

    return pl.pallas_call(
        kernel,
        out_shape=jax.ShapeDtypeStruct((R, D), jnp.float32),
        grid=(g,),
        in_specs=[pl.BlockSpec((tr, D), lambda i: (i, 0)),
                  pl.BlockSpec((tr, 1), lambda i: (i, 0)),
                  pl.BlockSpec((tr, 1), lambda i: (i, 0))],
        out_specs=pl.BlockSpec((tr, D), lambda i: (i, 0)),
        compiler_params=_params(1),
    )(y, scale_rows, shift_rows)


def _bn_scale_shift(s, q, count, gamma, beta, eps=_EPS):
    mean = s / count
    var = q / count - mean * mean                  # biased (training-mode) var
    scale = gamma * jax.lax.rsqrt(var + eps)
    shift = beta - mean * scale
    return scale, shift


# ----------------------------------------------------------------------------
# Full Stacked_conv forward (stride_list = [1, 1], padding 'same').
# ----------------------------------------------------------------------------
def stacked_conv_forward(x_nchw, params):
    N, Cin, H, W = x_nchw.shape
    w1, b1, g1, be1 = params["conv1"]
    w2, b2, g2, be2 = params["conv2"]
    C2 = w2.shape[-1]

    # Conv (1,7) along W, read straight off NCHW (no HBM layout pass).
    y1, s1, q1 = conv1x7_bn_stats(x_nchw, w1, b1)
    scale1, shift1 = _bn_scale_shift(s1, q1, N * H * W, g1, be1)

    # BN1+ReLU1 fused into the (7,1) conv along H; result already in NCHW
    # element order as (N*C2, H*W).
    y2, s2, q2 = conv7x1_bn_stats_fused(y1, scale1, shift1, w2, b2)
    scale2, shift2 = _bn_scale_shift(s2, q2, N * H * W, g2, be2)

    sc_rows = jnp.tile(scale2, N).reshape(N * C2, 1)
    sh_rows = jnp.tile(shift2, N).reshape(N * C2, 1)
    out = bn_relu_rows(y2, sc_rows, sh_rows)
    return out.reshape(N, C2, H, W)                # free (contiguous) reshape


# ----------------------------------------------------------------------------
# Pure-JAX reference (for correctness check only).
# ----------------------------------------------------------------------------
def _reference(x_nchw, params, eps=_EPS):
    x = jnp.transpose(x_nchw, (0, 2, 3, 1))
    for key, is_w_axis in (("conv1", True), ("conv2", False)):
        w, b, g, be = params[key]
        whwio = w[None, :, :, :] if is_w_axis else w[:, None, :, :]
        y = jax.lax.conv_general_dilated(
            x, whwio, window_strides=(1, 1), padding="SAME",
            dimension_numbers=("NHWC", "HWIO", "NHWC")) + b
        mean = y.mean(axis=(0, 1, 2))
        var = y.var(axis=(0, 1, 2))
        y = (y - mean) / jnp.sqrt(var + eps) * g + be
        x = jnp.maximum(y, 0.0)
    return jnp.transpose(x, (0, 3, 1, 2))


if __name__ == "__main__":
    key = jax.random.PRNGKey(0)
    kx, k1, k2, k3, k4 = jax.random.split(key, 5)

    N, Cin, H, W = 2, 4, 16, 16
    channel_list = [8, 16]          # Stacked_conv([8, 16], [1, 1])
    C1, C2 = channel_list

    x = jax.random.normal(kx, (N, Cin, H, W), jnp.float32)
    params = {
        # conv weight stored as (7 taps, Cin, Cout):
        #   == PyTorch weight[:, :, 0, k].T (conv1) / weight[:, :, k, 0].T (conv2)
        "conv1": (jax.random.normal(k1, (7, Cin, C1), jnp.float32) * 0.2,
                  jax.random.normal(k2, (C1,), jnp.float32) * 0.1,
                  jnp.ones((C1,), jnp.float32),     # BN gamma (PyTorch init)
                  jnp.zeros((C1,), jnp.float32)),   # BN beta
        "conv2": (jax.random.normal(k3, (7, C1, C2), jnp.float32) * 0.2,
                  jax.random.normal(k4, (C2,), jnp.float32) * 0.1,
                  jnp.ones((C2,), jnp.float32),
                  jnp.zeros((C2,), jnp.float32)),
    }

    out = jax.jit(stacked_conv_forward)(x, params)
    out = jax.block_until_ready(out)

    assert out.shape == (N, C2, H, W), out.shape
    ref = _reference(x, params)
    np.testing.assert_allclose(np.asarray(out), np.asarray(ref),
                               rtol=5e-4, atol=5e-4)

    print("KERNEL_OK")
</pallas_src>

<mosaic_0001>
module attributes {stable_mosaic.version = 11 : i64} {
  func.func @kernel(%arg0: i32, %arg1: i32, %arg2: memref<1x4x16x16xf32, #tpu.memory_space<vmem>>, %arg3: memref<4x16x128xf32, #tpu.memory_space<vmem>>, %arg4: memref<1x128xf32, #tpu.memory_space<vmem>>, %arg5: memref<1x16x128xf32, #tpu.memory_space<vmem>>, %arg6: memref<1x2x128xf32, #tpu.memory_space<vmem>>) attributes {dimension_semantics = [#tpu.dimension_semantics<parallel>, #tpu.dimension_semantics<parallel>], iteration_bounds = array<i64: 2, 1>, scalar_prefetch = 0 : i64, scratch_operands = 0 : i64, tpu.core_type = #tpu.core_type<tc>, window_params = [{transform_indices = @transform_0, window_bounds = array<i64: 1, 4, 16, 16>}, {pipeline_mode = #tpu.pipeline_mode<synchronous>, transform_indices = @transform_1, window_bounds = array<i64: 4, 16, 128>}, {pipeline_mode = #tpu.pipeline_mode<synchronous>, transform_indices = @transform_2, window_bounds = array<i64: 1, 128>}, {transform_indices = @transform_3, window_bounds = array<i64: 1, 16, 128>}, {transform_indices = @transform_4, window_bounds = array<i64: 1, 2, 128>}]} {
    %c0 = arith.constant 0 : index
    %c0_0 = arith.constant 0 : index
    %c0_1 = arith.constant 0 : index
    %c0_2 = arith.constant 0 : index
    %0 = vector.load %arg2[%c0, %c0_0, %c0_1, %c0_2] : memref<1x4x16x16xf32, #tpu.memory_space<vmem>>, vector<1x4x16x16xf32>
    %cst = arith.constant 0.000000e+00 : f32
    %1 = vector.broadcast %cst : f32 to vector<16x128xf32>
    %2 = vector.extract_strided_slice %0 {offsets = [0, 0, 0, 0], sizes = [1, 1, 16, 16], strides = [1, 1, 1, 1]} : vector<1x4x16x16xf32> to vector<1x1x16x16xf32>
    %3 = vector.shape_cast %2 : vector<1x1x16x16xf32> to vector<1x16x16xf32>
    %4 = vector.shape_cast %3 : vector<1x16x16xf32> to vector<16x16xf32>
    %c0_3 = arith.constant 0 : index
    %c0_4 = arith.constant 0 : index
    %c0_5 = arith.constant 0 : index
    %5 = vector.load %arg3[%c0_3, %c0_4, %c0_5] : memref<4x16x128xf32, #tpu.memory_space<vmem>>, vector<1x16x128xf32>
    %6 = vector.shape_cast %5 : vector<1x16x128xf32> to vector<16x128xf32>
    %cst_6 = arith.constant dense<0.000000e+00> : vector<16x128xf32>
    %7 = tpu.matmul %4, %6, %cst_6 {dimension_numbers = #tpu.dot_dimension_numbers<[1], [0], [0], [1], [0, 0, 1, 1], [], []>} : vector<16x16xf32>, vector<16x128xf32>, vector<16x128xf32> -> vector<16x128xf32>
    %8 = arith.addf %1, %7 : vector<16x128xf32>
    %9 = vector.extract_strided_slice %0 {offsets = [0, 1, 0, 0], sizes = [1, 1, 16, 16], strides = [1, 1, 1, 1]} : vector<1x4x16x16xf32> to vector<1x1x16x16xf32>
    %10 = vector.shape_cast %9 : vector<1x1x16x16xf32> to vector<1x16x16xf32>
    %11 = vector.shape_cast %10 : vector<1x16x16xf32> to vector<16x16xf32>
    %c1 = arith.constant 1 : index
    %c0_7 = arith.constant 0 : index
    %c0_8 = arith.constant 0 : index
    %12 = vector.load %arg3[%c1, %c0_7, %c0_8] : memref<4x16x128xf32, #tpu.memory_space<vmem>>, vector<1x16x128xf32>
    %13 = vector.shape_cast %12 : vector<1x16x128xf32> to vector<16x128xf32>
    %cst_9 = arith.constant dense<0.000000e+00> : vector<16x128xf32>
    %14 = tpu.matmul %11, %13, %cst_9 {dimension_numbers = #tpu.dot_dimension_numbers<[1], [0], [0], [1], [0, 0, 1, 1], [], []>} : vector<16x16xf32>, vector<16x128xf32>, vector<16x128xf32> -> vector<16x128xf32>
    %15 = arith.addf %8, %14 : vector<16x128xf32>
    %16 = vector.extract_strided_slice %0 {offsets = [0, 2, 0, 0], sizes = [1, 1, 16, 16], strides = [1, 1, 1, 1]} : vector<1x4x16x16xf32> to vector<1x1x16x16xf32>
    %17 = vector.shape_cast %16 : vector<1x1x16x16xf32> to vector<1x16x16xf32>
    %18 = vector.shape_cast %17 : vector<1x16x16xf32> to vector<16x16xf32>
    %c2 = arith.constant 2 : index
    %c0_10 = arith.constant 0 : index
    %c0_11 = arith.constant 0 : index
    %19 = vector.load %arg3[%c2, %c0_10, %c0_11] : memref<4x16x128xf32, #tpu.memory_space<vmem>>, vector<1x16x128xf32>
    %20 = vector.shape_cast %19 : vector<1x16x128xf32> to vector<16x128xf32>
    %cst_12 = arith.constant dense<0.000000e+00> : vector<16x128xf32>
    %21 = tpu.matmul %18, %20, %cst_12 {dimension_numbers = #tpu.dot_dimension_numbers<[1], [0], [0], [1], [0, 0, 1, 1], [], []>} : vector<16x16xf32>, vector<16x128xf32>, vector<16x128xf32> -> vector<16x128xf32>
    %22 = arith.addf %15, %21 : vector<16x128xf32>
    %23 = vector.extract_strided_slice %0 {offsets = [0, 3, 0, 0], sizes = [1, 1, 16, 16], strides = [1, 1, 1, 1]} : vector<1x4x16x16xf32> to vector<1x1x16x16xf32>
    %24 = vector.shape_cast %23 : vector<1x1x16x16xf32> to vector<1x16x16xf32>
    %25 = vector.shape_cast %24 : vector<1x16x16xf32> to vector<16x16xf32>
    %c3 = arith.constant 3 : index
    %c0_13 = arith.constant 0 : index
    %c0_14 = arith.constant 0 : index
    %26 = vector.load %arg3[%c3, %c0_13, %c0_14] : memref<4x16x128xf32, #tpu.memory_space<vmem>>, vector<1x16x128xf32>
    %27 = vector.shape_cast %26 : vector<1x16x128xf32> to vector<16x128xf32>
    %cst_15 = arith.constant dense<0.000000e+00> : vector<16x128xf32>
    %28 = tpu.matmul %25, %27, %cst_15 {dimension_numbers = #tpu.dot_dimension_numbers<[1], [0], [0], [1], [0, 0, 1, 1], [], []>} : vector<16x16xf32>, vector<16x128xf32>, vector<16x128xf32> -> vector<16x128xf32>
    %29 = arith.addf %22, %28 : vector<16x128xf32>
    %c0_16 = arith.constant 0 : index
    %c0_17 = arith.constant 0 : index
    %30 = vector.load %arg4[%c0_16, %c0_17] : memref<1x128xf32, #tpu.memory_space<vmem>>, vector<1x128xf32>
    %31 = vector.broadcast %30 : vector<1x128xf32> to vector<16x128xf32>
    %32 = arith.addf %29, %31 : vector<16x128xf32>
    %33 = vector.shape_cast %32 : vector<16x128xf32> to vector<1x16x128xf32>
    %c0_18 = arith.constant 0 : index
    %c0_19 = arith.constant 0 : index
    %c0_20 = arith.constant 0 : index
    %34 = vector.load %arg5[%c0_18, %c0_19, %c0_20] : memref<1x16x128xf32, #tpu.memory_space<vmem>>, vector<1x16x128xf32>
    tpu.vector_store %arg5[%c0_18, %c0_19, %c0_20], %33 {strides = array<i32>} : memref<1x16x128xf32, #tpu.memory_space<vmem>>, vector<1x16x128xf32>,
    %cst_21 = arith.constant dense<0.000000e+00> : vector<128xf32>
    %35 = vector.multi_reduction <add>, %32, %cst_21 [0] : vector<16x128xf32> to vector<128xf32>
    %36 = vector.shape_cast %35 : vector<128xf32> to vector<1x128xf32>
    %37 = arith.mulf %32, %32 : vector<16x128xf32>
    %cst_22 = arith.constant dense<0.000000e+00> : vector<128xf32>
    %38 = vector.multi_reduction <add>, %37, %cst_22 [0] : vector<16x128xf32> to vector<128xf32>
    %39 = vector.shape_cast %38 : vector<128xf32> to vector<1x128xf32>
    %40 = tpu.concatenate %36, %39 in 0 : vector<1x128xf32>, vector<1x128xf32> -> vector<2x128xf32>
    %41 = vector.shape_cast %40 : vector<2x128xf32> to vector<1x2x128xf32>
    %c0_23 = arith.constant 0 : index
    %c0_24 = arith.constant 0 : index
    %c0_25 = arith.constant 0 : index
    %42 = vector.load %arg6[%c0_23, %c0_24, %c0_25] : memref<1x2x128xf32, #tpu.memory_space<vmem>>, vector<1x2x128xf32>
    tpu.vector_store %arg6[%c0_23, %c0_24, %c0_25], %41 {strides = array<i32>} : memref<1x2x128xf32, #tpu.memory_space<vmem>>, vector<1x2x128xf32>,
    return
  }
  func.func @transform_0(%arg0: i32, %arg1: i32) -> (i32, i32, i32, i32) {
    %c0_i32 = arith.constant 0 : i32
    %c0_i32_0 = arith.constant 0 : i32
    %c0_i32_1 = arith.constant 0 : i32
    return %arg0, %c0_i32, %arg1, %c0_i32_0 : i32, i32, i32, i32
  }
  func.func @transform_1(%arg0: i32, %arg1: i32) -> (i32, i32, i32) {
    %c0_i32 = arith.constant 0 : i32
    %c0_i32_0 = arith.constant 0 : i32
    %c0_i32_1 = arith.constant 0 : i32
    %c0_i32_2 = arith.constant 0 : i32
    return %c0_i32, %c0_i32_0, %c0_i32_1 : i32, i32, i32
  }
  func.func @transform_2(%arg0: i32, %arg1: i32) -> (i32, i32) {
    %c0_i32 = arith.constant 0 : i32
    %c0_i32_0 = arith.constant 0 : i32
    %c0_i32_1 = arith.constant 0 : i32
    return %c0_i32, %c0_i32_0 : i32, i32
  }
  func.func @transform_3(%arg0: i32, %arg1: i32) -> (i32, i32, i32) {
    %c0_i32 = arith.constant 0 : i32
    %c0_i32_0 = arith.constant 0 : i32
    return %arg0, %arg1, %c0_i32 : i32, i32, i32
  }
  func.func @transform_4(%arg0: i32, %arg1: i32) -> (i32, i32, i32) {
    %c1_i32 = arith.constant 1 : i32
    %0 = arith.muli %arg0, %c1_i32 : i32
    %1 = arith.addi %0, %arg1 : i32
    %c0_i32 = arith.constant 0 : i32
    %c0_i32_0 = arith.constant 0 : i32
    %c0_i32_1 = arith.constant 0 : i32
    return %1, %c0_i32, %c0_i32_0 : i32, i32, i32
  }
}

module attributes {stable_mosaic.version = 11 : i64} {
  func.func @kernel(%arg0: i32, %arg1: memref<1x256x8xf32, #tpu.memory_space<vmem>>, %arg2: memref<1x8xf32, #tpu.memory_space<vmem>>, %arg3: memref<1x8xf32, #tpu.memory_space<vmem>>, %arg4: memref<7x8x16xf32, #tpu.memory_space<vmem>>, %arg5: memref<1x16xf32, #tpu.memory_space<vmem>>, %arg6: memref<16x256xf32, #tpu.memory_space<vmem>>, %arg7: memref<1x2x128xf32, #tpu.memory_space<vmem>>) attributes {dimension_semantics = [#tpu.dimension_semantics<parallel>], iteration_bounds = array<i64: 2>, scalar_prefetch = 0 : i64, scratch_operands = 0 : i64, tpu.core_type = #tpu.core_type<tc>, window_params = [{transform_indices = @transform_0, window_bounds = array<i64: 1, 256, 8>}, {pipeline_mode = #tpu.pipeline_mode<synchronous>, transform_indices = @transform_1, window_bounds = array<i64: 1, 8>}, {pipeline_mode = #tpu.pipeline_mode<synchronous>, transform_indices = @transform_2, window_bounds = array<i64: 1, 8>}, {pipeline_mode = #tpu.pipeline_mode<synchronous>, transform_indices = @transform_3, window_bounds = array<i64: 7, 8, 16>}, {pipeline_mode = #tpu.pipeline_mode<synchronous>, transform_indices = @transform_4, window_bounds = array<i64: 1, 16>}, {transform_indices = @transform_5, window_bounds = array<i64: 16, 256>}, {transform_indices = @transform_6, window_bounds = array<i64: 1, 2, 128>}]} {
    %c0 = arith.constant 0 : index
    %c0_0 = arith.constant 0 : index
    %c0_1 = arith.constant 0 : index
    %0 = vector.load %arg1[%c0, %c0_0, %c0_1] : memref<1x256x8xf32, #tpu.memory_space<vmem>>, vector<1x256x8xf32>
    %1 = vector.shape_cast %0 : vector<1x256x8xf32> to vector<256x8xf32>
    %c0_2 = arith.constant 0 : index
    %c0_3 = arith.constant 0 : index
    %2 = vector.load %arg2[%c0_2, %c0_3] : memref<1x8xf32, #tpu.memory_space<vmem>>, vector<1x8xf32>
    %3 = vector.broadcast %2 : vector<1x8xf32> to vector<256x8xf32>
    %4 = arith.mulf %1, %3 : vector<256x8xf32>
    %c0_4 = arith.constant 0 : index
    %c0_5 = arith.constant 0 : index
    %5 = vector.load %arg3[%c0_4, %c0_5] : memref<1x8xf32, #tpu.memory_space<vmem>>, vector<1x8xf32>
    %6 = vector.broadcast %5 : vector<1x8xf32> to vector<256x8xf32>
    %7 = arith.addf %4, %6 : vector<256x8xf32>
    %cst = arith.constant 0.000000e+00 : f32
    %8 = vector.broadcast %cst : f32 to vector<256x8xf32>
    %9 = arith.maximumf %7, %8 : vector<256x8xf32>
    %cst_6 = arith.constant 0.000000e+00 : f32
    %10 = vector.broadcast %cst_6 : f32 to vector<48x8xf32>
    %11 = tpu.concatenate %10, %9, %10 in 0 : vector<48x8xf32>, vector<256x8xf32>, vector<48x8xf32> -> vector<352x8xf32>
    %cst_7 = arith.constant 0.000000e+00 : f32
    %12 = vector.broadcast %cst_7 : f32 to vector<256x16xf32>
    %13 = vector.extract_strided_slice %11 {offsets = [0, 0], sizes = [256, 8], strides = [1, 1]} : vector<352x8xf32> to vector<256x8xf32>
    %c0_8 = arith.constant 0 : index
    %c0_9 = arith.constant 0 : index
    %c0_10 = arith.constant 0 : index
    %14 = vector.load %arg4[%c0_8, %c0_9, %c0_10] : memref<7x8x16xf32, #tpu.memory_space<vmem>>, vector<1x8x16xf32>
    %15 = vector.shape_cast %14 : vector<1x8x16xf32> to vector<8x16xf32>
    %cst_11 = arith.constant dense<0.000000e+00> : vector<256x16xf32>
    %16 = tpu.matmul %13, %15, %cst_11 {dimension_numbers = #tpu.dot_dimension_numbers<[1], [0], [0], [1], [0, 0, 1, 1], [], []>} : vector<256x8xf32>, vector<8x16xf32>, vector<256x16xf32> -> vector<256x16xf32>
    %17 = arith.addf %12, %16 : vector<256x16xf32>
    %18 = vector.extract_strided_slice %11 {offsets = [16, 0], sizes = [256, 8], strides = [1, 1]} : vector<352x8xf32> to vector<256x8xf32>
    %c1 = arith.constant 1 : index
    %c0_12 = arith.constant 0 : index
    %c0_13 = arith.constant 0 : index
    %19 = vector.load %arg4[%c1, %c0_12, %c0_13] : memref<7x8x16xf32, #tpu.memory_space<vmem>>, vector<1x8x16xf32>
    %20 = vector.shape_cast %19 : vector<1x8x16xf32> to vector<8x16xf32>
    %cst_14 = arith.constant dense<0.000000e+00> : vector<256x16xf32>
    %21 = tpu.matmul %18, %20, %cst_14 {dimension_numbers = #tpu.dot_dimension_numbers<[1], [0], [0], [1], [0, 0, 1, 1], [], []>} : vector<256x8xf32>, vector<8x16xf32>, vector<256x16xf32> -> vector<256x16xf32>
    %22 = arith.addf %17, %21 : vector<256x16xf32>
    %23 = vector.extract_strided_slice %11 {offsets = [32, 0], sizes = [256, 8], strides = [1, 1]} : vector<352x8xf32> to vector<256x8xf32>
    %c2 = arith.constant 2 : index
    %c0_15 = arith.constant 0 : index
    %c0_16 = arith.constant 0 : index
    %24 = vector.load %arg4[%c2, %c0_15, %c0_16] : memref<7x8x16xf32, #tpu.memory_space<vmem>>, vector<1x8x16xf32>
    %25 = vector.shape_cast %24 : vector<1x8x16xf32> to vector<8x16xf32>
    %cst_17 = arith.constant dense<0.000000e+00> : vector<256x16xf32>
    %26 = tpu.matmul %23, %25, %cst_17 {dimension_numbers = #tpu.dot_dimension_numbers<[1], [0], [0], [1], [0, 0, 1, 1], [], []>} : vector<256x8xf32>, vector<8x16xf32>, vector<256x16xf32> -> vector<256x16xf32>
    %27 = arith.addf %22, %26 : vector<256x16xf32>
    %28 = vector.extract_strided_slice %11 {offsets = [48, 0], sizes = [256, 8], strides = [1, 1]} : vector<352x8xf32> to vector<256x8xf32>
    %c3 = arith.constant 3 : index
    %c0_18 = arith.constant 0 : index
    %c0_19 = arith.constant 0 : index
    %29 = vector.load %arg4[%c3, %c0_18, %c0_19] : memref<7x8x16xf32, #tpu.memory_space<vmem>>, vector<1x8x16xf32>
    %30 = vector.shape_cast %29 : vector<1x8x16xf32> to vector<8x16xf32>
    %cst_20 = arith.constant dense<0.000000e+00> : vector<256x16xf32>
    %31 = tpu.matmul %28, %30, %cst_20 {dimension_numbers = #tpu.dot_dimension_numbers<[1], [0], [0], [1], [0, 0, 1, 1], [], []>} : vector<256x8xf32>, vector<8x16xf32>, vector<256x16xf32> -> vector<256x16xf32>
    %32 = arith.addf %27, %31 : vector<256x16xf32>
    %33 = vector.extract_strided_slice %11 {offsets = [64, 0], sizes = [256, 8], strides = [1, 1]} : vector<352x8xf32> to vector<256x8xf32>
    %c4 = arith.constant 4 : index
    %c0_21 = arith.constant 0 : index
    %c0_22 = arith.constant 0 : index
    %34 = vector.load %arg4[%c4, %c0_21, %c0_22] : memref<7x8x16xf32, #tpu.memory_space<vmem>>, vector<1x8x16xf32>
    %35 = vector.shape_cast %34 : vector<1x8x16xf32> to vector<8x16xf32>
    %cst_23 = arith.constant dense<0.000000e+00> : vector<256x16xf32>
    %36 = tpu.matmul %33, %35, %cst_23 {dimension_numbers = #tpu.dot_dimension_numbers<[1], [0], [0], [1], [0, 0, 1, 1], [], []>} : vector<256x8xf32>, vector<8x16xf32>, vector<256x16xf32> -> vector<256x16xf32>
    %37 = arith.addf %32, %36 : vector<256x16xf32>
    %38 = vector.extract_strided_slice %11 {offsets = [80, 0], sizes = [256, 8], strides = [1, 1]} : vector<352x8xf32> to vector<256x8xf32>
    %c5 = arith.constant 5 : index
    %c0_24 = arith.constant 0 : index
    %c0_25 = arith.constant 0 : index
    %39 = vector.load %arg4[%c5, %c0_24, %c0_25] : memref<7x8x16xf32, #tpu.memory_space<vmem>>, vector<1x8x16xf32>
    %40 = vector.shape_cast %39 : vector<1x8x16xf32> to vector<8x16xf32>
    %cst_26 = arith.constant dense<0.000000e+00> : vector<256x16xf32>
    %41 = tpu.matmul %38, %40, %cst_26 {dimension_numbers = #tpu.dot_dimension_numbers<[1], [0], [0], [1], [0, 0, 1, 1], [], []>} : vector<256x8xf32>, vector<8x16xf32>, vector<256x16xf32> -> vector<256x16xf32>
    %42 = arith.addf %37, %41 : vector<256x16xf32>
    %43 = vector.extract_strided_slice %11 {offsets = [96, 0], sizes = [256, 8], strides = [1, 1]} : vector<352x8xf32> to vector<256x8xf32>
    %c6 = arith.constant 6 : index
    %c0_27 = arith.constant 0 : index
    %c0_28 = arith.constant 0 : index
    %44 = vector.load %arg4[%c6, %c0_27, %c0_28] : memref<7x8x16xf32, #tpu.memory_space<vmem>>, vector<1x8x16xf32>
    %45 = vector.shape_cast %44 : vector<1x8x16xf32> to vector<8x16xf32>
    %cst_29 = arith.constant dense<0.000000e+00> : vector<256x16xf32>
    %46 = tpu.matmul %43, %45, %cst_29 {dimension_numbers = #tpu.dot_dimension_numbers<[1], [0], [0], [1], [0, 0, 1, 1], [], []>} : vector<256x8xf32>, vector<8x16xf32>, vector<256x16xf32> -> vector<256x16xf32>
    %47 = arith.addf %42, %46 : vector<256x16xf32>
    %c0_30 = arith.constant 0 : index
    %c0_31 = arith.constant 0 : index
    %48 = vector.load %arg5[%c0_30, %c0_31] : memref<1x16xf32, #tpu.memory_space<vmem>>, vector<1x16xf32>
    %49 = vector.broadcast %48 : vector<1x16xf32> to vector<256x16xf32>
    %50 = arith.addf %47, %49 : vector<256x16xf32>
    %cst_32 = arith.constant 0.000000e+00 : f32
    %51 = vector.broadcast %cst_32 : f32 to vector<256x112xf32>
    %52 = tpu.concatenate %50, %51 in 1 : vector<256x16xf32>, vector<256x112xf32> -> vector<256x128xf32>
    %cst_33 = arith.constant dense<0.000000e+00> : vector<128xf32>
    %53 = vector.multi_reduction <add>, %52, %cst_33 [0] : vector<256x128xf32> to vector<128xf32>
    %54 = vector.shape_cast %53 : vector<128xf32> to vector<1x128xf32>
    %55 = arith.mulf %52, %52 : vector<256x128xf32>
    %cst_34 = arith.constant dense<0.000000e+00> : vector<128xf32>
    %56 = vector.multi_reduction <add>, %55, %cst_34 [0] : vector<256x128xf32> to vector<128xf32>
    %57 = vector.shape_cast %56 : vector<128xf32> to vector<1x128xf32>
    %58 = tpu.concatenate %54, %57 in 0 : vector<1x128xf32>, vector<1x128xf32> -> vector<2x128xf32>
    %59 = vector.shape_cast %58 : vector<2x128xf32> to vector<1x2x128xf32>
    %c0_35 = arith.constant 0 : index
    %c0_36 = arith.constant 0 : index
    %c0_37 = arith.constant 0 : index
    %60 = vector.load %arg7[%c0_35, %c0_36, %c0_37] : memref<1x2x128xf32, #tpu.memory_space<vmem>>, vector<1x2x128xf32>
    tpu.vector_store %arg7[%c0_35, %c0_36, %c0_37], %59 {strides = array<i32>} : memref<1x2x128xf32, #tpu.memory_space<vmem>>, vector<1x2x128xf32>,
    %61 = tpu.transpose %52, [1, 0] : vector<256x128xf32> -> vector<128x256xf32>
    %62 = vector.extract_strided_slice %61 {offsets = [0, 0], sizes = [16, 256], strides = [1, 1]} : vector<128x256xf32> to vector<16x256xf32>
    %c0_38 = arith.constant 0 : index
    %c0_39 = arith.constant 0 : index
    %63 = vector.load %arg6[%c0_38, %c0_39] : memref<16x256xf32, #tpu.memory_space<vmem>>, vector<16x256xf32>
    tpu.vector_store %arg6[%c0_38, %c0_39], %62 {strides = array<i32>} : memref<16x256xf32, #tpu.memory_space<vmem>>, vector<16x256xf32>,
    return
  }
  func.func @transform_0(%arg0: i32) -> (i32, i32, i32) {
    %c0_i32 = arith.constant 0 : i32
    %c0_i32_0 = arith.constant 0 : i32
    %c0_i32_1 = arith.constant 0 : i32
    return %arg0, %c0_i32, %c0_i32_0 : i32, i32, i32
  }
  func.func @transform_1(%arg0: i32) -> (i32, i32) {
    %c0_i32 = arith.constant 0 : i32
    %c0_i32_0 = arith.constant 0 : i32
    %c0_i32_1 = arith.constant 0 : i32
    return %c0_i32, %c0_i32_0 : i32, i32
  }
  func.func @transform_2(%arg0: i32) -> (i32, i32) {
    %c0_i32 = arith.constant 0 : i32
    %c0_i32_0 = arith.constant 0 : i32
    %c0_i32_1 = arith.constant 0 : i32
    return %c0_i32, %c0_i32_0 : i32, i32
  }
  func.func @transform_3(%arg0: i32) -> (i32, i32, i32) {
    %c0_i32 = arith.constant 0 : i32
    %c0_i32_0 = arith.constant 0 : i32
    %c0_i32_1 = arith.constant 0 : i32
    %c0_i32_2 = arith.constant 0 : i32
    return %c0_i32, %c0_i32_0, %c0_i32_1 : i32, i32, i32
  }
  func.func @transform_4(%arg0: i32) -> (i32, i32) {
    %c0_i32 = arith.constant 0 : i32
    %c0_i32_0 = arith.constant 0 : i32
    %c0_i32_1 = arith.constant 0 : i32
    return %c0_i32, %c0_i32_0 : i32, i32
  }
  func.func @transform_5(%arg0: i32) -> (i32, i32) {
    %c0_i32 = arith.constant 0 : i32
    %c0_i32_0 = arith.constant 0 : i32
    return %arg0, %c0_i32 : i32, i32
  }
  func.func @transform_6(%arg0: i32) -> (i32, i32, i32) {
    %c0_i32 = arith.constant 0 : i32
    %c0_i32_0 = arith.constant 0 : i32
    %c0_i32_1 = arith.constant 0 : i32
    return %arg0, %c0_i32, %c0_i32_0 : i32, i32, i32
  }
}

module attributes {stable_mosaic.version = 11 : i64} {
  func.func @kernel(%arg0: i32, %arg1: memref<16x256xf32, #tpu.memory_space<vmem>>, %arg2: memref<16x1xf32, #tpu.memory_space<vmem>>, %arg3: memref<16x1xf32, #tpu.memory_space<vmem>>, %arg4: memref<16x256xf32, #tpu.memory_space<vmem>>) attributes {dimension_semantics = [#tpu.dimension_semantics<parallel>], iteration_bounds = array<i64: 2>, scalar_prefetch = 0 : i64, scratch_operands = 0 : i64, tpu.core_type = #tpu.core_type<tc>, window_params = [{transform_indices = @transform_0, window_bounds = array<i64: 16, 256>}, {transform_indices = @transform_1, window_bounds = array<i64: 16, 1>}, {transform_indices = @transform_2, window_bounds = array<i64: 16, 1>}, {transform_indices = @transform_3, window_bounds = array<i64: 16, 256>}]} {
    %c0 = arith.constant 0 : index
    %c0_0 = arith.constant 0 : index
    %0 = vector.load %arg1[%c0, %c0_0] : memref<16x256xf32, #tpu.memory_space<vmem>>, vector<16x256xf32>
    %c0_1 = arith.constant 0 : index
    %c0_2 = arith.constant 0 : index
    %1 = vector.load %arg2[%c0_1, %c0_2] : memref<16x1xf32, #tpu.memory_space<vmem>>, vector<16x1xf32>
    %2 = vector.broadcast %1 : vector<16x1xf32> to vector<16x256xf32>
    %3 = arith.mulf %0, %2 : vector<16x256xf32>
    %c0_3 = arith.constant 0 : index
    %c0_4 = arith.constant 0 : index
    %4 = vector.load %arg3[%c0_3, %c0_4] : memref<16x1xf32, #tpu.memory_space<vmem>>, vector<16x1xf32>
    %5 = vector.broadcast %4 : vector<16x1xf32> to vector<16x256xf32>
    %6 = arith.addf %3, %5 : vector<16x256xf32>
    %cst = arith.constant 0.000000e+00 : f32
    %7 = vector.broadcast %cst : f32 to vector<16x256xf32>
    %8 = arith.maximumf %6, %7 : vector<16x256xf32>
    %c0_5 = arith.constant 0 : index
    %c0_6 = arith.constant 0 : index
    %9 = vector.load %arg4[%c0_5, %c0_6] : memref<16x256xf32, #tpu.memory_space<vmem>>, vector<16x256xf32>
    tpu.vector_store %arg4[%c0_5, %c0_6], %8 {strides = array<i32>} : memref<16x256xf32, #tpu.memory_space<vmem>>, vector<16x256xf32>,
    return
  }
  func.func @transform_0(%arg0: i32) -> (i32, i32) {
    %c0_i32 = arith.constant 0 : i32
    %c0_i32_0 = arith.constant 0 : i32
    return %arg0, %c0_i32 : i32, i32
  }
  func.func @transform_1(%arg0: i32) -> (i32, i32) {
    %c0_i32 = arith.constant 0 : i32
    %c0_i32_0 = arith.constant 0 : i32
    return %arg0, %c0_i32 : i32, i32
  }
  func.func @transform_2(%arg0: i32) -> (i32, i32) {
    %c0_i32 = arith.constant 0 : i32
    %c0_i32_0 = arith.constant 0 : i32
    return %arg0, %c0_i32 : i32, i32
  }
  func.func @transform_3(%arg0: i32) -> (i32, i32) {
    %c0_i32 = arith.constant 0 : i32
    %c0_i32_0 = arith.constant 0 : i32
    return %arg0, %c0_i32 : i32, i32
  }
}

</mosaic_0001>

<llo_original>
// kernel: tile.18
$region0: #{tile.18}
  #allocation0 [shape = 's32[1]{0}', space=sflag, size = 0x4, scoped, tag = 'scoped memory for tile.18']
  %s0 = inlined_call_operand.vmem [shape: f32[8], index: 0, kind: input, shape index: {}]
  %s1 = inlined_call_operand.vmem [shape: f32[16,8], index: 1, kind: output, shape index: {}]
  // Predicated region
  $region2: #{tile.18} parent=0 // pred_check
    _
  $region3: #{tile.18} parent=0 // pred_check_branch
    %3 = sbr.rel (0) target = $region5
  $region4: #{tile.18} parent=0 // pred_region
    _
  $region5: #{tile.18} parent=0 // pred_fallthru
    _
  %v4 = vld [vmem:[%s0] ss:$0 sm:$0xff]
  %5 = vst [vmem:[%s1] sm:$0xff] %v4
  %s6 = scalar_lea.vmem %s1, 8
  %7 = vst [vmem:[%s6] sm:$0xff] %v4

// kernel: tile.19
$region0: #{tile.19}
  %s0 = inlined_call_operand.vmem [shape: f32[16,8], index: 0, kind: input, shape index: {}]
  %s1 = inlined_call_operand.vmem [shape: f32[1,128], index: 1, kind: output, shape index: {}]
  $region1: #{tile.19} parent=0
    #allocation0 [shape = 'u8[4096]{0}', space=vmem, size = 0x1000, scoped, tag = 'scoped mem for output reshape']
    %v2 = vld [vmem:[%s0] sm:$0x1]
    %vm3 = vcmask 64512
    %4 = vst.msk [vmem:[#allocation0] sm:$0x1] %vm3, %v2
    %s5 = scalar_lea.vmem %s0, 15
    %v6 = vld [vmem:[%s5] sm:$0x1]
    %7 = vrot.lane.b32.xlu0 %v6, 120
    %v8 = vpop.permute.xlu0 %7
    %vm9 = vcmask 1048512
    %10 = vst.msk [vmem:[#allocation0] sm:$0x1] %vm9, %v8
    %s11 = scalar_lea.vmem %s0, 14
    %v12 = vld [vmem:[%s11] sm:$0x1]
    %13 = vrot.lane.b32.xlu0 %v12, 112
    %v14 = vpop.permute.xlu0 %13
    %vm15 = vcmask 982912
    %16 = vst.msk [vmem:[#allocation0] sm:$0x1] %vm15, %v14
    %s17 = scalar_lea.vmem %s0, 13
    %v18 = vld [vmem:[%s17] sm:$0x1]
    %19 = vrot.lane.b32.xlu0 %v18, 104
    %v20 = vpop.permute.xlu0 %19
    %vm21 = vcmask 917312
    %22 = vst.msk [vmem:[#allocation0] sm:$0x1] %vm21, %v20
    %s23 = scalar_lea.vmem %s0, 12
    %v24 = vld [vmem:[%s23] sm:$0x1]
    %25 = vrot.lane.b32.xlu0 %v24, 96
    %v26 = vpop.permute.xlu0 %25
    %vm27 = vcmask 851712
    %28 = vst.msk [vmem:[#allocation0] sm:$0x1] %vm27, %v26
    %s29 = scalar_lea.vmem %s0, 11
    %v30 = vld [vmem:[%s29] sm:$0x1]
    %31 = vrot.lane.b32.xlu0 %v30, 88
    %v32 = vpop.permute.xlu0 %31
    %vm33 = vcmask 786112
    %34 = vst.msk [vmem:[#allocation0] sm:$0x1] %vm33, %v32
    %s35 = scalar_lea.vmem %s0, 10
    %v36 = vld [vmem:[%s35] sm:$0x1]
    %37 = vrot.lane.b32.xlu0 %v36, 80
    %v38 = vpop.permute.xlu0 %37
    %vm39 = vcmask 720512
    %40 = vst.msk [vmem:[#allocation0] sm:$0x1] %vm39, %v38
    %s41 = scalar_lea.vmem %s0, 9
    %v42 = vld [vmem:[%s41] sm:$0x1]
    %43 = vrot.lane.b32.xlu0 %v42, 72
    %v44 = vpop.permute.xlu0 %43
    %vm45 = vcmask 654912
    %46 = vst.msk [vmem:[#allocation0] sm:$0x1] %vm45, %v44
    %s47 = scalar_lea.vmem %s0, 8
    %v48 = vld [vmem:[%s47] sm:$0x1]
    %49 = vrot.lane.b32.xlu0 %v48, 64
    %v50 = vpop.permute.xlu0 %49
    %vm51 = vcmask 589312
    %52 = vst.msk [vmem:[#allocation0] sm:$0x1] %vm51, %v50
    %s53 = scalar_lea.vmem %s0, 7
    %v54 = vld [vmem:[%s53] sm:$0x1]
    %55 = vrot.lane.b32.xlu0 %v54, 56
    %v56 = vpop.permute.xlu0 %55
    %vm57 = vcmask 523712
    %58 = vst.msk [vmem:[#allocation0] sm:$0x1] %vm57, %v56
    %s59 = scalar_lea.vmem %s0, 6
    %v60 = vld [vmem:[%s59] sm:$0x1]
    %61 = vrot.lane.b32.xlu0 %v60, 48
    %v62 = vpop.permute.xlu0 %61
    %vm63 = vcmask 458112
    %64 = vst.msk [vmem:[#allocation0] sm:$0x1] %vm63, %v62
    %s65 = scalar_lea.vmem %s0, 5
    %v66 = vld [vmem:[%s65] sm:$0x1]
    %67 = vrot.lane.b32.xlu0 %v66, 40
    %v68 = vpop.permute.xlu0 %67
    %vm69 = vcmask 392512
    %70 = vst.msk [vmem:[#allocation0] sm:$0x1] %vm69, %v68
    %s71 = scalar_lea.vmem %s0, 4
    %v72 = vld [vmem:[%s71] sm:$0x1]
    %73 = vrot.lane.b32.xlu0 %v72, 32
    %v74 = vpop.permute.xlu0 %73
    %vm75 = vcmask 326912
    %76 = vst.msk [vmem:[#allocation0] sm:$0x1] %vm75, %v74
    %s77 = scalar_lea.vmem %s0, 3
    %v78 = vld [vmem:[%s77] sm:$0x1]
    %79 = vrot.lane.b32.xlu0 %v78, 24
    %v80 = vpop.permute.xlu0 %79
    %vm81 = vcmask 261312
    %82 = vst.msk [vmem:[#allocation0] sm:$0x1] %vm81, %v80
    %s83 = scalar_lea.vmem %s0, 2
    %v84 = vld [vmem:[%s83] sm:$0x1]
    %85 = vrot.lane.b32.xlu0 %v84, 16
    %v86 = vpop.permute.xlu0 %85
    %vm87 = vcmask 195712
    %88 = vst.msk [vmem:[#allocation0] sm:$0x1] %vm87, %v86
    %s89 = scalar_lea.vmem %s0, 1
    %v90 = vld [vmem:[%s89] sm:$0x1]
    %91 = vrot.lane.b32.xlu0 %v90, 8
    %v92 = vpop.permute.xlu0 %91
    %vm93 = vcmask 130112
    %94 = vst.msk [vmem:[#allocation0] sm:$0x1] %vm93, %v92
    %s96 = sshll.u32 1, 1
    %s97 = ssub.s32 %s96, 1
    %v99 = vld [vmem:[#allocation0] sm:%s97]
    %s100 = sshll.u32 1, 1
    %s101 = ssub.s32 %s100, 1
    %102 = vst [vmem:[%s1] sm:%s101] %v99

// kernel: stacked_conv_forward.3
$region0: #{stacked_conv_forward.3}
  #allocation0 [shape = 'u32[]', space=smem, size = 0x4, offset = 0x4, fixed_abs, tag = 'smem constant byte address 0x4 - core index']
  #allocation1 [shape = 'u32[144,128]{1,0:T(1,128)}', space=vmem, size = 0x12000, scoped, tag = 'internal scratch']
  %s0 = inlined_call_operand.vmem [shape: f32[2,4,16,16], index: 0, kind: input, shape index: {}]
  %s1 = inlined_call_operand.vmem [shape: f32[4,16,128], index: 1, kind: input, shape index: {}]
  %s2 = inlined_call_operand.vmem [shape: f32[1,128], index: 2, kind: input, shape index: {}]
  %s3 = inlined_call_operand.vmem [shape: f32[2,16,128], index: 3, kind: output, shape index: {0}]
  %s4 = inlined_call_operand.vmem [shape: f32[2,2,128], index: 4, kind: output, shape index: {1}]
  %5 = xla_tuple %s3, %s4
  %s6 = sld [smem:[#allocation0]]
  $region53: #{stacked_conv_forward.3} parent=0
    _
  %s8 = ssub.s32 1, %s6
  %s9 = scalar_select 0, %s8, %s6
  loop: start=0, step=1, limit=4
  $region2: #{stacked_conv_forward.3} parent=0 // loop_pre_header
    _
  $region3: #{stacked_conv_forward.3} parent=0 // loop_header
    %s11 = sphi 0, %s15
    %p12 = scmp.ge.s32.totalorder %s11, 4
    %s18 = sphi 0, %s30
    %s19 = sphi 0, %s26
    %s20 = sphi 0, %s18
    %s21 = sphi 0, %s19
    %s22 = sphi 0, %s20
    %s23 = sphi 0, %s21
    %s35 = sphi 0, %s37
    %s38 = sphi 0, %s35
    %s39 = sphi 0, %s38
    %s55 = sphi 0, %s39
    %s59 = sphi 0, %s59
    %s61 = sphi 0, %s59
    %s62 = sphi 0, %s61
    %s76 = sphi 0, %s62
    %s80 = sphi 0, %s80
    %s82 = sphi 0, %s80
    %s83 = sphi 0, %s82
    %s97 = sphi 0, %s83
    %s105 = sphi 0, %s107
    %s108 = sphi 0, %s105
    %s109 = sphi 0, %s108
    %s125 = sphi 0, %s109
    %s133 = sphi 0, %s135
    %s136 = sphi 0, %s133
    %s137 = sphi 0, %s136
    %s153 = sphi 0, %s137
  $region4: #{stacked_conv_forward.3} parent=0 // loop_header_branch
    %14 = sbr.rel (%p12) target = $region8
  $region5: #{stacked_conv_forward.3} parent=0 // loop_body
    %s16 = ssub.s32 %s11, 1
    %s17 = ssub.s32 %s11, 2
    %s24 = sadd.s32 1, %s19
    %p25 = scmp.ge.s32.totalorder %s24, 1
    %s26 = scalar_select %p25, 0, %s24
    %s27 = sadd.s32 1, %s18
    %s28 = scalar_select %p25, %s27, %s18
    %p29 = scmp.ge.s32.totalorder %s28, 2
    %s30 = scalar_select %p29, 0, %s28
    %s31 = ssub.s32 %s18, %s30
    %s32 = ssub.s32 %s19, %s26
    %s33 = sor.u32 %s31, %s32
    %p34 = scmp.eq.s32.totalorder %s33, 0
    %s36 = sadd.s32 %s35, 1
    %s37 = scalar_select %p34, %s35, %s36
    %p40 = pneg %p34
    %p41 = scmp.eq.s32.totalorder %s11, 1
    %p42 = por %p40, %p41
    %p43 = scmp.ne.s32.totalorder %s35, %s38
    %p44 = scmp.eq.s32.totalorder %s11, 0
    %p45 = por %p43, %p44
    %p46 = scmp.ne.s32.totalorder %s35, %s38
    %p47 = scmp.eq.s32.totalorder %s16, 1
    %p48 = por %p46, %p47
    %p49 = scmp.ne.s32.totalorder %s38, %s39
    %p50 = scmp.eq.s32.totalorder %s16, 0
    %p51 = por %p49, %p50
    %p52 = scmp.ne.s32.totalorder %s38, %s39
    %p53 = scmp.eq.s32.totalorder %s17, 1
    %p54 = por %p52, %p53
    %p56 = scmp.ne.s32.totalorder %s39, %s55
    %p57 = scmp.eq.s32.totalorder %s17, 0
    %p58 = por %p56, %p57
    %s60 = sadd.s32 %s59, 1
    %p63 = scmp.eq.s32.totalorder %s11, 1
    %p64 = scmp.ne.s32.totalorder %s59, %s61
    %p65 = scmp.eq.s32.totalorder %s11, 0
    %p66 = por %p64, %p65
    %p67 = scmp.ne.s32.totalorder %s59, %s61
    %p68 = scmp.eq.s32.totalorder %s16, 1
    %p69 = por %p67, %p68
    %p70 = scmp.ne.s32.totalorder %s61, %s62
    %p71 = scmp.eq.s32.totalorder %s16, 0
    %p72 = por %p70, %p71
    %p73 = scmp.ne.s32.totalorder %s61, %s62
    %p74 = scmp.eq.s32.totalorder %s17, 1
    %p75 = por %p73, %p74
    %p77 = scmp.ne.s32.totalorder %s62, %s76
    %p78 = scmp.eq.s32.totalorder %s17, 0
    %p79 = por %p77, %p78
    %s81 = sadd.s32 %s80, 1
    %p84 = scmp.eq.s32.totalorder %s11, 1
    %p85 = scmp.ne.s32.totalorder %s80, %s82
    %p86 = scmp.eq.s32.totalorder %s11, 0
    %p87 = por %p85, %p86
    %p88 = scmp.ne.s32.totalorder %s80, %s82
    %p89 = scmp.eq.s32.totalorder %s16, 1
    %p90 = por %p88, %p89
    %p91 = scmp.ne.s32.totalorder %s82, %s83
    %p92 = scmp.eq.s32.totalorder %s16, 0
    %p93 = por %p91, %p92
    %p94 = scmp.ne.s32.totalorder %s82, %s83
    %p95 = scmp.eq.s32.totalorder %s17, 1
    %p96 = por %p94, %p95
    %p98 = scmp.ne.s32.totalorder %s83, %s97
    %p99 = scmp.eq.s32.totalorder %s17, 0
    %p100 = por %p98, %p99
    %s101 = ssub.s32 %s18, %s30
    %s102 = ssub.s32 %s19, %s26
    %s103 = sor.u32 %s101, %s102
    %p104 = scmp.eq.s32.totalorder %s103, 0
    %s106 = sadd.s32 %s105, 1
    %s107 = scalar_select %p104, %s105, %s106
    %p110 = pneg %p104
    %p111 = scmp.eq.s32.totalorder %s11, 1
    %p112 = por %p110, %p111
    %p113 = scmp.ne.s32.totalorder %s105, %s108
    %p114 = scmp.eq.s32.totalorder %s11, 0
    %p115 = por %p113, %p114
    %p116 = scmp.ne.s32.totalorder %s105, %s108
    %p117 = scmp.eq.s32.totalorder %s16, 1
    %p118 = por %p116, %p117
    %p119 = scmp.ne.s32.totalorder %s108, %s109
    %p120 = scmp.eq.s32.totalorder %s16, 0
    %p121 = por %p119, %p120
    %p122 = scmp.ne.s32.totalorder %s108, %s109
    %p123 = scmp.eq.s32.totalorder %s17, 1
    %p124 = por %p122, %p123
    %p126 = scmp.ne.s32.totalorder %s109, %s125
    %p127 = scmp.eq.s32.totalorder %s17, 0
    %p128 = por %p126, %p127
    %s129 = sadd.s32 %s18, %s19
    %s130 = sadd.s32 %s30, %s26
    %s131 = ssub.s32 %s129, %s130
    %p132 = scmp.eq.s32.totalorder %s131, 0
    %s134 = sadd.s32 %s133, 1
    %s135 = scalar_select %p132, %s133, %s134
    %p138 = pneg %p132
    %p139 = scmp.eq.s32.totalorder %s11, 1
    %p140 = por %p138, %p139
    %p141 = scmp.ne.s32.totalorder %s133, %s136
    %p142 = scmp.eq.s32.totalorder %s11, 0
    %p143 = por %p141, %p142
    %p144 = scmp.ne.s32.totalorder %s133, %s136
    %p145 = scmp.eq.s32.totalorder %s16, 1
    %p146 = por %p144, %p145
    %p147 = scmp.ne.s32.totalorder %s136, %s137
    %p148 = scmp.eq.s32.totalorder %s16, 0
    %p149 = por %p147, %p148
    %p150 = scmp.ne.s32.totalorder %s136, %s137
    %p151 = scmp.eq.s32.totalorder %s17, 1
    %p152 = por %p150, %p151
    %p154 = scmp.ne.s32.totalorder %s137, %s153
    %p155 = scmp.eq.s32.totalorder %s17, 0
    %p156 = por %p154, %p155
    %p157 = scmp.le.s32.totalorder 1, %s11
    %p158 = scmp.lt.s32.totalorder %s11, 3
    %p159 = pnand %p157, %p158
    %p160 = pneg %p159
    // Predicated region
    $region9: #{stacked_conv_forward.3} parent=5 // pred_check
      _
    $region10: #{stacked_conv_forward.3} parent=5 // pred_check_branch
      %162 = sbr.rel (%p159) target = $region12
    $region11: #{stacked_conv_forward.3} parent=5 // pred_region
      %s163 = ssub.s32 %s11, 1
      // Predicated region
      $region13: #{stacked_conv_forward.3} parent=11 // pred_check
        %p164 = pneg %p72
      $region14: #{stacked_conv_forward.3} parent=11 // pred_check_branch
        %166 = sbr.rel (%p164) target = $region16
      $region15: #{stacked_conv_forward.3} parent=11 // pred_region
        _
      $region16: #{stacked_conv_forward.3} parent=11 // pred_fallthru
        _
      // Predicated region
      $region17: #{stacked_conv_forward.3} parent=11 // pred_check
        %p167 = pneg %p93
      $region18: #{stacked_conv_forward.3} parent=11 // pred_check_branch
        %169 = sbr.rel (%p167) target = $region20
      $region19: #{stacked_conv_forward.3} parent=11 // pred_region
        _
      $region20: #{stacked_conv_forward.3} parent=11 // pred_fallthru
        _
    $region12: #{stacked_conv_forward.3} parent=5 // pred_fallthru
      _
    %p170 = scmp.lt.s32.totalorder %s11, 2
    // Predicated region
    $region21: #{stacked_conv_forward.3} parent=5 // pred_check
      %p171 = pneg %p170
    $region22: #{stacked_conv_forward.3} parent=5 // pred_check_branch
      %173 = sbr.rel (%p171) target = $region24
    $region23: #{stacked_conv_forward.3} parent=5 // pred_region
      // Predicated region
      $region25: #{stacked_conv_forward.3} parent=23 // pred_check
        %p174 = pneg %p45
      $region26: #{stacked_conv_forward.3} parent=23 // pred_check_branch
        %176 = sbr.rel (%p174) target = $region28
      $region27: #{stacked_conv_forward.3} parent=23 // pred_region
        %s177 = smul.u32 2, %s19
        %p178 = scmp.lt.s32.totalorder %s18, 1
        %s179 = scalar_select %p178, %s18, 1
        %p180 = scmp.lt.s32.totalorder %s177, 1
        %s181 = scalar_select %p180, %s177, 1
        %s182 = smul.addr %s179, 8
        %s183 = sadd.s32 %s181, %s182
        %s184 = smul.addr %s183, 8
        %s185 = scalar_lea.vmem %s0, %s184
        %s186 = smul.u32 2, %s19
      $region28: #{stacked_conv_forward.3} parent=23 // pred_fallthru
        _
    $region24: #{stacked_conv_forward.3} parent=5 // pred_fallthru
      _
    %p187 = scmp.le.s32.totalorder 1, %s11
    %p188 = scmp.lt.s32.totalorder %s11, 3
    %p189 = pnand %p187, %p188
    %p190 = pneg %p189
    // Predicated region
    $region29: #{stacked_conv_forward.3} parent=5 // pred_check
      _
    $region30: #{stacked_conv_forward.3} parent=5 // pred_check_branch
      %192 = sbr.rel (%p189) target = $region32
    $region31: #{stacked_conv_forward.3} parent=5 // pred_region
      %s193 = ssub.s32 %s11, 1
      %s194 = smul.u32 2, %s21
      %p195 = scmp.lt.s32.totalorder %s20, 1
      %s196 = scalar_select %p195, %s20, 1
      %p197 = scmp.lt.s32.totalorder %s194, 1
      %s198 = scalar_select %p197, %s194, 1
      %s199 = smul.addr %s196, 8
      %s200 = sadd.s32 %s198, %s199
      %s201 = smul.addr %s200, 8
      %s202 = scalar_lea.vmem %s0, %s201
      %p203 = pneg %p51
      %p204 = pneg %p48
      %p205 = pneg %p72
      %p206 = pneg %p69
      %p207 = pneg %p93
      %p208 = pneg %p90
      %p209 = pneg %p121
      %p210 = pneg %p118
      %s211 = smul.u32 2, %s21
      %p212 = scmp.lt.s32.totalorder %s20, 1
      %s213 = scalar_select %p212, %s20, 1
      %p214 = scmp.lt.s32.totalorder %s211, 1
      %s215 = scalar_select %p214, %s211, 1
      %s216 = smul.addr %s213, 2
      %s217 = sadd.s32 %s215, %s216
      %s218 = smul.addr %s217, 8
      %s219 = scalar_lea.vmem %s3, %s218
      %p220 = pneg %p149
      %p221 = pneg %p146
      %s222 = sadd.s32 %s20, %s21
      %p223 = scmp.lt.s32.totalorder %s222, 1
      %s224 = scalar_select %p223, %s222, 1
      %s225 = smul.addr %s224, 2
      %s226 = scalar_lea.vmem %s4, %s225
      %s227 = smul.u32 2, %s21
      %p228 = scmp.lt.s32.totalorder %s20, 1
      %s229 = scalar_select %p228, %s20, 1
      %p230 = scmp.lt.s32.totalorder %s227, 1
      %s231 = scalar_select %p230, %s227, 1
      %s232 = smul.addr %s229, 8
      %s233 = sadd.s32 %s231, %s232
      %s234 = smul.addr %s233, 8
      %s235 = scalar_lea.vmem %s0, %s234
      %s236 = smul.u32 2, %s21
      %s237 = smul.u32 2, %s21
      %p238 = scmp.lt.s32.totalorder %s20, 1
      %s239 = scalar_select %p238, %s20, 1
      %p240 = scmp.lt.s32.totalorder %s237, 1
      %s241 = scalar_select %p240, %s237, 1
      %s242 = smul.addr %s239, 2
      %s243 = sadd.s32 %s241, %s242
      %s244 = smul.addr %s243, 8
      %s245 = scalar_lea.vmem %s3, %s244
      %s246 = smul.u32 2, %s21
      %s247 = sadd.s32 %s20, %s21
      %p248 = scmp.lt.s32.totalorder %s247, 1
      %s249 = scalar_select %p248, %s247, 1
      %s250 = smul.addr %s249, 2
      %s251 = scalar_lea.vmem %s4, %s250
      %s252 = sadd.s32 %s20, %s21
      %v253 = vld [vmem:[%s235] sm:$0xff]
      %v254 = vld [vmem:[%s235 + $0x8] sm:$0xff]
      %v255 = vld [vmem:[%s235 + $0x10] sm:$0xff]
      %v256 = vld [vmem:[%s235 + $0x18] sm:$0xff]
      %v257 = vld [vmem:[%s235 + $0x20] sm:$0xff]
      %v258 = vld [vmem:[%s235 + $0x28] sm:$0xff]
      %v259 = vld [vmem:[%s235 + $0x30] sm:$0xff]
      %v260 = vld [vmem:[%s235 + $0x38] sm:$0xff]
      %v261 = vld [vmem:[%s1] sm:$0xff]
      %v262 = vld [vmem:[%s1 + $0x8] sm:$0xff]
      %s263 = scalar_lea.vmem %s1, 16
      %v264 = vld [vmem:[%s263] sm:$0xff]
      %v265 = vld [vmem:[%s263 + $0x8] sm:$0xff]
      %vm266 = vcmask 130048
      %v268 = vsel %vm266, %v255, 0
      %v271 = vsel %vm266, %v256, 0
      %273 = vmatprep.subr.mxu0 0.0
      %274 = vmatpush1.msra.mxu0 0.0
      %275 = vmatprep.subr.mxu0 0.0
      %276 = vmatpush1.msra.mxu0 0.0
      %277 = vmatprep.subr.mxu0 0.0
      %278 = vmatpush1.msra.mxu0 0.0
      %279 = vmatprep.subr.mxu0 0.0
      %280 = vmatpush1.msra.mxu0 0.0
      %281 = vmatprep.subr.mxu0 0.0
      %282 = vmatpush1.msra.mxu0 0.0
      %283 = vmatprep.subr.mxu0 0.0
      %284 = vmatpush1.msra.mxu0 0.0
      %285 = vmatprep.subr.mxu0 0.0
      %286 = vmatpush1.msra.mxu0 0.0
      %287 = vmatprep.subr.mxu0 0.0
      %288 = vmatpush1.msra.mxu0 0.0
      %289 = vmatprep.subr.mxu0 0.0
      %290 = vmatpush1.msra.mxu0 0.0
      %291 = vmatprep.subr.mxu0 0.0
      %292 = vmatpush1.msra.mxu0 0.0
      %293 = vmatprep.subr.mxu0 0.0
      %294 = vmatpush1.msra.mxu0 0.0
      %295 = vmatprep.subr.mxu0 0.0
      %296 = vmatpush1.msra.mxu0 0.0
      %297 = vmatprep.subr.mxu0 0.0
      %298 = vmatpush1.msra.mxu0 0.0
      %299 = vmatprep.subr.mxu0 0.0
      %300 = vmatpush1.msra.mxu0 0.0
      %301 = vmatprep.subr.mxu0 0.0
      %302 = vmatpush1.msra.mxu0 %v265
      %303 = vmatprep.subr.mxu0 0.0
      %304 = vmatpush1.msra.mxu0 %v264
      %305 = vmatprep.subr.mxu0 0.0
      %306 = vmatpush2.msra.mxu0 0.0
      %307 = vmatprep.subr.mxu0 0.0
      %308 = vmatpush2.msra.mxu0 0.0
      %309 = vmatprep.subr.mxu0 0.0
      %310 = vmatpush2.msra.mxu0 0.0
      %311 = vmatprep.subr.mxu0 0.0
      %312 = vmatpush2.msra.mxu0 0.0
      %313 = vmatprep.subr.mxu0 0.0
      %314 = vmatpush2.msra.mxu0 0.0
      %315 = vmatprep.subr.mxu0 0.0
      %316 = vmatpush2.msra.mxu0 0.0
      %317 = vmatprep.subr.mxu0 0.0
      %318 = vmatpush2.msra.mxu0 0.0
      %319 = vmatprep.subr.mxu0 0.0
      %320 = vmatpush2.msra.mxu0 0.0
      %321 = vmatprep.subr.mxu0 0.0
      %322 = vmatpush2.msra.mxu0 0.0
      %323 = vmatprep.subr.mxu0 0.0
      %324 = vmatpush2.msra.mxu0 0.0
      %325 = vmatprep.subr.mxu0 0.0
      %326 = vmatpush2.msra.mxu0 0.0
      %327 = vmatprep.subr.mxu0 0.0
      %328 = vmatpush2.msra.mxu0 0.0
      %329 = vmatprep.subr.mxu0 0.0
      %330 = vmatpush2.msra.mxu0 0.0
      %331 = vmatprep.subr.mxu0 0.0
      %332 = vmatpush2.msra.mxu0 0.0
      %333 = vmatprep.subr.mxu0 0.0
      %334 = vmatpush2.msra.mxu0 0.0
      %335 = vmatprep.subr.mxu0 0.0
      %336 = vmatpush2.msra.mxu0 0.0
      %337 = vmatprep.mubr.f32.mxu0 0.0
      %338 = vmatmul.mubr.f32.gmra.mxu0 %v268
      %v339 = vpop.f32.mrf.mxu0
      %v340 = vadd.f32 0.0, %v339
      %v341 = vpop.f32.mrf.mxu0
      %342 = vmatprep.mubr.f32.mxu0 0.0
      %343 = vmatmul.mubr.f32.gmra.mxu0 %v271
      %v344 = vpop.f32.mrf.mxu0
      %v345 = vadd.f32 0.0, %v344
      %v346 = vpop.f32.mrf.mxu0
      %347 = vdwg.mxu0
      %v349 = vsel %vm266, %v253, 0
      %v352 = vsel %vm266, %v254, 0
      %354 = vmatprep.subr.mxu0 0.0
      %355 = vmatpush1.msra.mxu0 0.0
      %356 = vmatprep.subr.mxu0 0.0
      %357 = vmatpush1.msra.mxu0 0.0
      %358 = vmatprep.subr.mxu0 0.0
      %359 = vmatpush1.msra.mxu0 0.0
      %360 = vmatprep.subr.mxu0 0.0
      %361 = vmatpush1.msra.mxu0 0.0
      %362 = vmatprep.subr.mxu0 0.0
      %363 = vmatpush1.msra.mxu0 0.0
      %364 = vmatprep.subr.mxu0 0.0
      %365 = vmatpush1.msra.mxu0 0.0
      %366 = vmatprep.subr.mxu0 0.0
      %367 = vmatpush1.msra.mxu0 0.0
      %368 = vmatprep.subr.mxu0 0.0
      %369 = vmatpush1.msra.mxu0 0.0
      %370 = vmatprep.subr.mxu0 0.0
      %371 = vmatpush1.msra.mxu0 0.0
      %372 = vmatprep.subr.mxu0 0.0
      %373 = vmatpush1.msra.mxu0 0.0
      %374 = vmatprep.subr.mxu0 0.0
      %375 = vmatpush1.msra.mxu0 0.0
      %376 = vmatprep.subr.mxu0 0.0
      %377 = vmatpush1.msra.mxu0 0.0
      %378 = vmatprep.subr.mxu0 0.0
      %379 = vmatpush1.msra.mxu0 0.0
      %380 = vmatprep.subr.mxu0 0.0
      %381 = vmatpush1.msra.mxu0 0.0
      %382 = vmatprep.subr.mxu0 0.0
      %383 = vmatpush1.msra.mxu0 %v262
      %384 = vmatprep.subr.mxu0 0.0
      %385 = vmatpush1.msra.mxu0 %v261
      %386 = vmatprep.subr.mxu0 0.0
      %387 = vmatpush2.msra.mxu0 0.0
      %388 = vmatprep.subr.mxu0 0.0
      %389 = vmatpush2.msra.mxu0 0.0
      %390 = vmatprep.subr.mxu0 0.0
      %391 = vmatpush2.msra.mxu0 0.0
      %392 = vmatprep.subr.mxu0 0.0
      %393 = vmatpush2.msra.mxu0 0.0
      %394 = vmatprep.subr.mxu0 0.0
      %395 = vmatpush2.msra.mxu0 0.0
      %396 = vmatprep.subr.mxu0 0.0
      %397 = vmatpush2.msra.mxu0 0.0
      %398 = vmatprep.subr.mxu0 0.0
      %399 = vmatpush2.msra.mxu0 0.0
      %400 = vmatprep.subr.mxu0 0.0
      %401 = vmatpush2.msra.mxu0 0.0
      %402 = vmatprep.subr.mxu0 0.0
      %403 = vmatpush2.msra.mxu0 0.0
      %404 = vmatprep.subr.mxu0 0.0
      %405 = vmatpush2.msra.mxu0 0.0
      %406 = vmatprep.subr.mxu0 0.0
      %407 = vmatpush2.msra.mxu0 0.0
      %408 = vmatprep.subr.mxu0 0.0
      %409 = vmatpush2.msra.mxu0 0.0
      %410 = vmatprep.subr.mxu0 0.0
      %411 = vmatpush2.msra.mxu0 0.0
      %412 = vmatprep.subr.mxu0 0.0
      %413 = vmatpush2.msra.mxu0 0.0
      %414 = vmatprep.subr.mxu0 0.0
      %415 = vmatpush2.msra.mxu0 0.0
      %416 = vmatprep.subr.mxu0 0.0
      %417 = vmatpush2.msra.mxu0 0.0
      %418 = vmatprep.mubr.f32.mxu0 0.0
      %419 = vmatmul.mubr.f32.gmra.mxu0 %v349
      %v420 = vpop.f32.mrf.mxu0
      %v421 = vadd.f32 %v340, %v420
      %v422 = vpop.f32.mrf.mxu0
      %423 = vmatprep.mubr.f32.mxu0 0.0
      %424 = vmatmul.mubr.f32.gmra.mxu0 %v352
      %v425 = vpop.f32.mrf.mxu0
      %v426 = vadd.f32 %v345, %v425
      %v427 = vpop.f32.mrf.mxu0
      %428 = vdwg.mxu0
      %s429 = scalar_lea.vmem %s1, 32
      %v430 = vld [vmem:[%s429] sm:$0xff]
      %v431 = vld [vmem:[%s429 + $0x8] sm:$0xff]
      %v433 = vsel %vm266, %v257, 0
      %v436 = vsel %vm266, %v258, 0
      %438 = vmatprep.subr.mxu0 0.0
      %439 = vmatpush1.msra.mxu0 0.0
      %440 = vmatprep.subr.mxu0 0.0
      %441 = vmatpush1.msra.mxu0 0.0
      %442 = vmatprep.subr.mxu0 0.0
      %443 = vmatpush1.msra.mxu0 0.0
      %444 = vmatprep.subr.mxu0 0.0
      %445 = vmatpush1.msra.mxu0 0.0
      %446 = vmatprep.subr.mxu0 0.0
      %447 = vmatpush1.msra.mxu0 0.0
      %448 = vmatprep.subr.mxu0 0.0
      %449 = vmatpush1.msra.mxu0 0.0
      %450 = vmatprep.subr.mxu0 0.0
      %451 = vmatpush1.msra.mxu0 0.0
      %452 = vmatprep.subr.mxu0 0.0
      %453 = vmatpush1.msra.mxu0 0.0
      %454 = vmatprep.subr.mxu0 0.0
      %455 = vmatpush1.msra.mxu0 0.0
      %456 = vmatprep.subr.mxu0 0.0
      %457 = vmatpush1.msra.mxu0 0.0
      %458 = vmatprep.subr.mxu0 0.0
      %459 = vmatpush1.msra.mxu0 0.0
      %460 = vmatprep.subr.mxu0 0.0
      %461 = vmatpush1.msra.mxu0 0.0
      %462 = vmatprep.subr.mxu0 0.0
      %463 = vmatpush1.msra.mxu0 0.0
      %464 = vmatprep.subr.mxu0 0.0
      %465 = vmatpush1.msra.mxu0 0.0
      %466 = vmatprep.subr.mxu0 0.0
      %467 = vmatpush1.msra.mxu0 %v431
      %468 = vmatprep.subr.mxu0 0.0
      %469 = vmatpush1.msra.mxu0 %v430
      %470 = vmatprep.subr.mxu0 0.0
      %471 = vmatpush2.msra.mxu0 0.0
      %472 = vmatprep.subr.mxu0 0.0
      %473 = vmatpush2.msra.mxu0 0.0
      %474 = vmatprep.subr.mxu0 0.0
      %475 = vmatpush2.msra.mxu0 0.0
      %476 = vmatprep.subr.mxu0 0.0
      %477 = vmatpush2.msra.mxu0 0.0
      %478 = vmatprep.subr.mxu0 0.0
      %479 = vmatpush2.msra.mxu0 0.0
      %480 = vmatprep.subr.mxu0 0.0
      %481 = vmatpush2.msra.mxu0 0.0
      %482 = vmatprep.subr.mxu0 0.0
      %483 = vmatpush2.msra.mxu0 0.0
      %484 = vmatprep.subr.mxu0 0.0
      %485 = vmatpush2.msra.mxu0 0.0
      %486 = vmatprep.subr.mxu0 0.0
      %487 = vmatpush2.msra.mxu0 0.0
      %488 = vmatprep.subr.mxu0 0.0
      %489 = vmatpush2.msra.mxu0 0.0
      %490 = vmatprep.subr.mxu0 0.0
      %491 = vmatpush2.msra.mxu0 0.0
      %492 = vmatprep.subr.mxu0 0.0
      %493 = vmatpush2.msra.mxu0 0.0
      %494 = vmatprep.subr.mxu0 0.0
      %495 = vmatpush2.msra.mxu0 0.0
      %496 = vmatprep.subr.mxu0 0.0
      %497 = vmatpush2.msra.mxu0 0.0
      %498 = vmatprep.subr.mxu0 0.0
      %499 = vmatpush2.msra.mxu0 0.0
      %500 = vmatprep.subr.mxu0 0.0
      %501 = vmatpush2.msra.mxu0 0.0
      %502 = vmatprep.mubr.f32.mxu0 0.0
      %503 = vmatmul.mubr.f32.gmra.mxu0 %v433
      %v504 = vpop.f32.mrf.mxu0
      %v505 = vadd.f32 0.0, %v504
      %v506 = vpop.f32.mrf.mxu0
      %507 = vmatprep.mubr.f32.mxu0 0.0
      %508 = vmatmul.mubr.f32.gmra.mxu0 %v436
      %v509 = vpop.f32.mrf.mxu0
      %v510 = vadd.f32 0.0, %v509
      %v511 = vpop.f32.mrf.mxu0
      %512 = vdwg.mxu0
      %v513 = vadd.f32 %v421, %v505
      %v514 = vadd.f32 %v426, %v510
      %s515 = scalar_lea.vmem %s1, 48
      %v516 = vld [vmem:[%s515] sm:$0xff]
      %v517 = vld [vmem:[%s515 + $0x8] sm:$0xff]
      %v519 = vsel %vm266, %v259, 0
      %v522 = vsel %vm266, %v260, 0
      %524 = vmatprep.subr.mxu0 0.0
      %525 = vmatpush1.msra.mxu0 0.0
      %526 = vmatprep.subr.mxu0 0.0
      %527 = vmatpush1.msra.mxu0 0.0
      %528 = vmatprep.subr.mxu0 0.0
      %529 = vmatpush1.msra.mxu0 0.0
      %530 = vmatprep.subr.mxu0 0.0
      %531 = vmatpush1.msra.mxu0 0.0
      %532 = vmatprep.subr.mxu0 0.0
      %533 = vmatpush1.msra.mxu0 0.0
      %534 = vmatprep.subr.mxu0 0.0
      %535 = vmatpush1.msra.mxu0 0.0
      %536 = vmatprep.subr.mxu0 0.0
      %537 = vmatpush1.msra.mxu0 0.0
      %538 = vmatprep.subr.mxu0 0.0
      %539 = vmatpush1.msra.mxu0 0.0
      %540 = vmatprep.subr.mxu0 0.0
      %541 = vmatpush1.msra.mxu0 0.0
      %542 = vmatprep.subr.mxu0 0.0
      %543 = vmatpush1.msra.mxu0 0.0
      %544 = vmatprep.subr.mxu0 0.0
      %545 = vmatpush1.msra.mxu0 0.0
      %546 = vmatprep.subr.mxu0 0.0
      %547 = vmatpush1.msra.mxu0 0.0
      %548 = vmatprep.subr.mxu0 0.0
      %549 = vmatpush1.msra.mxu0 0.0
      %550 = vmatprep.subr.mxu0 0.0
      %551 = vmatpush1.msra.mxu0 0.0
      %552 = vmatprep.subr.mxu0 0.0
      %553 = vmatpush1.msra.mxu0 %v517
      %554 = vmatprep.subr.mxu0 0.0
      %555 = vmatpush1.msra.mxu0 %v516
      %556 = vmatprep.subr.mxu0 0.0
      %557 = vmatpush2.msra.mxu0 0.0
      %558 = vmatprep.subr.mxu0 0.0
      %559 = vmatpush2.msra.mxu0 0.0
      %560 = vmatprep.subr.mxu0 0.0
      %561 = vmatpush2.msra.mxu0 0.0
      %562 = vmatprep.subr.mxu0 0.0
      %563 = vmatpush2.msra.mxu0 0.0
      %564 = vmatprep.subr.mxu0 0.0
      %565 = vmatpush2.msra.mxu0 0.0
      %566 = vmatprep.subr.mxu0 0.0
      %567 = vmatpush2.msra.mxu0 0.0
      %568 = vmatprep.subr.mxu0 0.0
      %569 = vmatpush2.msra.mxu0 0.0
      %570 = vmatprep.subr.mxu0 0.0
      %571 = vmatpush2.msra.mxu0 0.0
      %572 = vmatprep.subr.mxu0 0.0
      %573 = vmatpush2.msra.mxu0 0.0
      %574 = vmatprep.subr.mxu0 0.0
      %575 = vmatpush2.msra.mxu0 0.0
      %576 = vmatprep.subr.mxu0 0.0
      %577 = vmatpush2.msra.mxu0 0.0
      %578 = vmatprep.subr.mxu0 0.0
      %579 = vmatpush2.msra.mxu0 0.0
      %580 = vmatprep.subr.mxu0 0.0
      %581 = vmatpush2.msra.mxu0 0.0
      %582 = vmatprep.subr.mxu0 0.0
      %583 = vmatpush2.msra.mxu0 0.0
      %584 = vmatprep.subr.mxu0 0.0
      %585 = vmatpush2.msra.mxu0 0.0
      %586 = vmatprep.subr.mxu0 0.0
      %587 = vmatpush2.msra.mxu0 0.0
      %588 = vmatprep.mubr.f32.mxu0 0.0
      %589 = vmatmul.mubr.f32.gmra.mxu0 %v519
      %v590 = vpop.f32.mrf.mxu0
      %v591 = vadd.f32 0.0, %v590
      %v592 = vpop.f32.mrf.mxu0
      %593 = vmatprep.mubr.f32.mxu0 0.0
      %594 = vmatmul.mubr.f32.gmra.mxu0 %v522
      %v595 = vpop.f32.mrf.mxu0
      %v596 = vadd.f32 0.0, %v595
      %v597 = vpop.f32.mrf.mxu0
      %598 = vdwg.mxu0
      %v599 = vadd.f32 %v513, %v591
      %v600 = vadd.f32 %v514, %v596
      %v601 = vld [vmem:[%s2] sm:$0x1]
      %v603 = vlaneseq
      %v604 = vshrl.u32 %v603, 7
      %v605 = vsub.s32 0, %v604
      %v606 = vrot.slane %v601, %v605
      %v608 = vadd.f32 %v599, %v606
      %v609 = vadd.f32 %v600, %v606
      %610 = vst [vmem:[%s245] sm:$0xff] %v608
      %611 = vst [vmem:[%s245 + $0x8] sm:$0xff] %v609
      %v612 = vadd.f32 %v608, %v609
      %v613 = vrot.slane %v612, 4
      %v614 = vadd.f32 %v612, %v613
      %v615 = vrot.slane %v614, 2
      %v616 = vadd.f32 %v614, %v615
      %v617 = vrot.slane %v616, 1
      %v618 = vadd.f32 %v616, %v617
      %v619 = vmul.f32 %v608, %v608
      %v620 = vmul.f32 %v609, %v609
      %v621 = vadd.f32 %v619, %v620
      %v622 = vrot.slane %v621, 4
      %v623 = vadd.f32 %v621, %v622
      %v624 = vrot.slane %v623, 2
      %v625 = vadd.f32 %v623, %v624
      %v626 = vrot.slane %v625, 1
      %v627 = vadd.f32 %v625, %v626
      %vm628 = vcmask 1040384
      %v629 = vsel %vm628, %v618, %v627
      %630 = vst [vmem:[%s251] sm:$0x3] %v629
      %s631 = smul.u32 2, %s21
      %p632 = scmp.lt.s32.totalorder %s20, 1
      %s633 = scalar_select %p632, %s20, 1
      %p634 = scmp.lt.s32.totalorder %s631, 1
      %s635 = scalar_select %p634, %s631, 1
      %s636 = smul.addr %s633, 2
      %s637 = sadd.s32 %s635, %s636
      %s638 = smul.addr %s637, 8
      %s639 = scalar_lea.vmem %s3, %s638
      %s640 = sadd.s32 %s20, %s21
      %p641 = scmp.lt.s32.totalorder %s640, 1
      %s642 = scalar_select %p641, %s640, 1
      %s643 = smul.addr %s642, 2
      %s644 = scalar_lea.vmem %s4, %s643
      // Predicated region
      $region33: #{stacked_conv_forward.3} parent=31 // pred_check
        %p645 = pneg %p118
      $region34: #{stacked_conv_forward.3} parent=31 // pred_check_branch
        %647 = sbr.rel (%p645) target = $region36
      $region35: #{stacked_conv_forward.3} parent=31 // pred_region
        %s648 = smul.u32 2, %s21
      $region36: #{stacked_conv_forward.3} parent=31 // pred_fallthru
        _
      // Predicated region
      $region37: #{stacked_conv_forward.3} parent=31 // pred_check
        %p649 = pneg %p146
      $region38: #{stacked_conv_forward.3} parent=31 // pred_check_branch
        %651 = sbr.rel (%p649) target = $region40
      $region39: #{stacked_conv_forward.3} parent=31 // pred_region
        %s652 = sadd.s32 %s20, %s21
      $region40: #{stacked_conv_forward.3} parent=31 // pred_fallthru
        _
    $region32: #{stacked_conv_forward.3} parent=5 // pred_fallthru
      _
    %p653 = scmp.le.s32.totalorder 2, %s11
    // Predicated region
    $region41: #{stacked_conv_forward.3} parent=5 // pred_check
      %p654 = pneg %p653
    $region42: #{stacked_conv_forward.3} parent=5 // pred_check_branch
      %656 = sbr.rel (%p654) target = $region44
    $region43: #{stacked_conv_forward.3} parent=5 // pred_region
      %s657 = ssub.s32 %s11, 2
      // Predicated region
      $region45: #{stacked_conv_forward.3} parent=43 // pred_check
        %p658 = pneg %p124
      $region46: #{stacked_conv_forward.3} parent=43 // pred_check_branch
        %660 = sbr.rel (%p658) target = $region48
      $region47: #{stacked_conv_forward.3} parent=43 // pred_region
        %s661 = smul.u32 2, %s23
        %p662 = scmp.lt.s32.totalorder %s22, 1
        %s663 = scalar_select %p662, %s22, 1
        %p664 = scmp.lt.s32.totalorder %s661, 1
        %s665 = scalar_select %p664, %s661, 1
        %s666 = smul.addr %s663, 2
        %s667 = sadd.s32 %s665, %s666
        %s668 = smul.addr %s667, 8
        %s669 = scalar_lea.vmem %s3, %s668
      $region48: #{stacked_conv_forward.3} parent=43 // pred_fallthru
        _
      // Predicated region
      $region49: #{stacked_conv_forward.3} parent=43 // pred_check
        %p670 = pneg %p152
      $region50: #{stacked_conv_forward.3} parent=43 // pred_check_branch
        %672 = sbr.rel (%p670) target = $region52
      $region51: #{stacked_conv_forward.3} parent=43 // pred_region
        %s673 = sadd.s32 %s22, %s23
        %p674 = scmp.lt.s32.totalorder %s673, 1
        %s675 = scalar_select %p674, %s673, 1
        %s676 = smul.addr %s675, 2
        %s677 = scalar_lea.vmem %s4, %s676
      $region52: #{stacked_conv_forward.3} parent=43 // pred_fallthru
        _
    $region44: #{stacked_conv_forward.3} parent=5 // pred_fallthru
      _
  $region6: #{stacked_conv_forward.3} parent=0 // loop_footer
    %s15 = sadd.s32 1, %s11
  $region7: #{stacked_conv_forward.3} parent=0 // loop_footer_branch
    %10 = sbr.rel target = $region3
  $region8: #{stacked_conv_forward.3} parent=0 // loop_exit
    _

// kernel: tile.23
$region0: #{tile.23}
  #allocation0 [shape = 's32[1]{0}', space=sflag, size = 0x4, scoped, tag = 'scoped memory for tile.23']
  %s0 = inlined_call_operand.vmem [shape: f32[16], index: 0, kind: input, shape index: {}]
  %s1 = inlined_call_operand.vmem [shape: f32[2,16], index: 1, kind: output, shape index: {}]
  // Predicated region
  $region2: #{tile.23} parent=0 // pred_check
    _
  $region3: #{tile.23} parent=0 // pred_check_branch
    %3 = sbr.rel (0) target = $region5
  $region4: #{tile.23} parent=0 // pred_region
    _
  $region5: #{tile.23} parent=0 // pred_fallthru
    _
  %v4 = vld [vmem:[%s0] ss:$0 sm:$0xff]
  %5 = vst [vmem:[%s1] sm:$0x3] %v4

// kernel: tile.0
$region0: #{tile.0}
  %s0 = inlined_call_operand.vmem [shape: f32[2,16], index: 0, kind: input, shape index: {}]
  %s1 = inlined_call_operand.vmem [shape: f32[32,1], index: 1, kind: output, shape index: {}]
  $region1: #{tile.0} parent=0
    #allocation0 [shape = 'u8[4096]{0}', space=vmem, size = 0x1000, scoped, tag = 'scoped mem for input reshape']
    %s3 = sshll.u32 1, 2
    %s4 = ssub.s32 %s3, 1
    %v5 = vld [vmem:[%s0] sm:%s4]
    %6 = vst [vmem:[#allocation0] sm:%s4] %v5
    %v7 = vld [vmem:[#allocation0] sm:$0x3]
    %vm8 = vcmask 7168
    %9 = vst.msk [vmem:[%s1] ss:$16 sm:$0x3] %vm8, %v7
    %v10 = vld [vmem:[#allocation0] sm:$0x3]
    %11 = vrot.lane.b32.xlu0 %v10, 127
    %v12 = vpop.permute.xlu0 %11
    %vm13 = vcmask 7168
    %s14 = scalar_lea.vmem %s1, 1
    %15 = vst.msk [vmem:[%s14] ss:$16 sm:$0x3] %vm13, %v12
    %v16 = vld [vmem:[#allocation0] sm:$0x3]
    %17 = vrot.lane.b32.xlu0 %v16, 126
    %v18 = vpop.permute.xlu0 %17
    %vm19 = vcmask 7168
    %s20 = scalar_lea.vmem %s1, 2
    %21 = vst.msk [vmem:[%s20] ss:$16 sm:$0x3] %vm19, %v18
    %v22 = vld [vmem:[#allocation0] sm:$0x3]
    %23 = vrot.lane.b32.xlu0 %v22, 125
    %v24 = vpop.permute.xlu0 %23
    %vm25 = vcmask 7168
    %s26 = scalar_lea.vmem %s1, 3
    %27 = vst.msk [vmem:[%s26] ss:$16 sm:$0x3] %vm25, %v24
    %v28 = vld [vmem:[#allocation0] sm:$0x3]
    %29 = vrot.lane.b32.xlu0 %v28, 124
    %v30 = vpop.permute.xlu0 %29
    %vm31 = vcmask 7168
    %s32 = scalar_lea.vmem %s1, 4
    %33 = vst.msk [vmem:[%s32] ss:$16 sm:$0x3] %vm31, %v30
    %v34 = vld [vmem:[#allocation0] sm:$0x3]
    %35 = vrot.lane.b32.xlu0 %v34, 123
    %v36 = vpop.permute.xlu0 %35
    %vm37 = vcmask 7168
    %s38 = scalar_lea.vmem %s1, 5
    %39 = vst.msk [vmem:[%s38] ss:$16 sm:$0x3] %vm37, %v36
    %v40 = vld [vmem:[#allocation0] sm:$0x3]
    %41 = vrot.lane.b32.xlu0 %v40, 122
    %v42 = vpop.permute.xlu0 %41
    %vm43 = vcmask 7168
    %s44 = scalar_lea.vmem %s1, 6
    %45 = vst.msk [vmem:[%s44] ss:$16 sm:$0x3] %vm43, %v42
    %v46 = vld [vmem:[#allocation0] sm:$0x3]
    %47 = vrot.lane.b32.xlu0 %v46, 121
    %v48 = vpop.permute.xlu0 %47
    %vm49 = vcmask 7168
    %s50 = scalar_lea.vmem %s1, 7
    %51 = vst.msk [vmem:[%s50] ss:$16 sm:$0x3] %vm49, %v48
    %v52 = vld [vmem:[#allocation0] sm:$0x3]
    %53 = vrot.lane.b32.xlu0 %v52, 120
    %v54 = vpop.permute.xlu0 %53
    %vm55 = vcmask 7168
    %s56 = scalar_lea.vmem %s1, 8
    %57 = vst.msk [vmem:[%s56] ss:$16 sm:$0x3] %vm55, %v54
    %v58 = vld [vmem:[#allocation0] sm:$0x3]
    %59 = vrot.lane.b32.xlu0 %v58, 119
    %v60 = vpop.permute.xlu0 %59
    %vm61 = vcmask 7168
    %s62 = scalar_lea.vmem %s1, 9
    %63 = vst.msk [vmem:[%s62] ss:$16 sm:$0x3] %vm61, %v60
    %v64 = vld [vmem:[#allocation0] sm:$0x3]
    %65 = vrot.lane.b32.xlu0 %v64, 118
    %v66 = vpop.permute.xlu0 %65
    %vm67 = vcmask 7168
    %s68 = scalar_lea.vmem %s1, 10
    %69 = vst.msk [vmem:[%s68] ss:$16 sm:$0x3] %vm67, %v66
    %v70 = vld [vmem:[#allocation0] sm:$0x3]
    %71 = vrot.lane.b32.xlu0 %v70, 117
    %v72 = vpop.permute.xlu0 %71
    %vm73 = vcmask 7168
    %s74 = scalar_lea.vmem %s1, 11
    %75 = vst.msk [vmem:[%s74] ss:$16 sm:$0x3] %vm73, %v72
    %v76 = vld [vmem:[#allocation0] sm:$0x3]
    %77 = vrot.lane.b32.xlu0 %v76, 116
    %v78 = vpop.permute.xlu0 %77
    %vm79 = vcmask 7168
    %s80 = scalar_lea.vmem %s1, 12
    %81 = vst.msk [vmem:[%s80] ss:$16 sm:$0x3] %vm79, %v78
    %v82 = vld [vmem:[#allocation0] sm:$0x3]
    %83 = vrot.lane.b32.xlu0 %v82, 115
    %v84 = vpop.permute.xlu0 %83
    %vm85 = vcmask 7168
    %s86 = scalar_lea.vmem %s1, 13
    %87 = vst.msk [vmem:[%s86] ss:$16 sm:$0x3] %vm85, %v84
    %v88 = vld [vmem:[#allocation0] sm:$0x3]
    %89 = vrot.lane.b32.xlu0 %v88, 114
    %v90 = vpop.permute.xlu0 %89
    %vm91 = vcmask 7168
    %s92 = scalar_lea.vmem %s1, 14
    %93 = vst.msk [vmem:[%s92] ss:$16 sm:$0x3] %vm91, %v90
    %v94 = vld [vmem:[#allocation0] sm:$0x3]
    %95 = vrot.lane.b32.xlu0 %v94, 113
    %v96 = vpop.permute.xlu0 %95
    %vm97 = vcmask 7168
    %s98 = scalar_lea.vmem %s1, 15
    %99 = vst.msk [vmem:[%s98] ss:$16 sm:$0x3] %vm97, %v96

// kernel: stacked_conv_forward.5
$region0: #{stacked_conv_forward.5}
  #allocation0 [shape = 'u32[]', space=smem, size = 0x4, offset = 0x4, fixed_abs, tag = 'smem constant byte address 0x4 - core index']
  #allocation1 [shape = 'u32[144,128]{1,0:T(1,128)}', space=vmem, size = 0x12000, scoped, tag = 'internal scratch']
  %s0 = inlined_call_operand.vmem [shape: f32[32,256], index: 0, kind: input, shape index: {}]
  %s1 = inlined_call_operand.vmem [shape: f32[32,1], index: 1, kind: input, shape index: {}]
  %s2 = inlined_call_operand.vmem [shape: f32[32,1], index: 2, kind: input, shape index: {}]
  %s3 = inlined_call_operand.vmem [shape: f32[32,256], index: 3, kind: output, shape index: {}]
  %s4 = sld [smem:[#allocation0]]
  $region45: #{stacked_conv_forward.5} parent=0
    _
  %s6 = ssub.s32 1, %s4
  %s7 = scalar_select 0, %s6, %s4
  loop: start=0, step=1, limit=4
  $region2: #{stacked_conv_forward.5} parent=0 // loop_pre_header
    _
  $region3: #{stacked_conv_forward.5} parent=0 // loop_header
    %s9 = sphi 0, %s13
    %p10 = scmp.ge.s32.totalorder %s9, 4
    %s19 = sphi 0, %s21
    %s22 = sphi 0, %s19
    %s23 = sphi 0, %s22
    %s39 = sphi 0, %s23
    %s45 = sphi 0, %s47
    %s48 = sphi 0, %s45
    %s49 = sphi 0, %s48
    %s65 = sphi 0, %s49
    %s71 = sphi 0, %s73
    %s74 = sphi 0, %s71
    %s75 = sphi 0, %s74
    %s91 = sphi 0, %s75
    %s97 = sphi 0, %s99
    %s100 = sphi 0, %s97
    %s101 = sphi 0, %s100
    %s117 = sphi 0, %s101
  $region4: #{stacked_conv_forward.5} parent=0 // loop_header_branch
    %12 = sbr.rel (%p10) target = $region8
  $region5: #{stacked_conv_forward.5} parent=0 // loop_body
    %s14 = ssub.s32 %s9, 1
    %s15 = ssub.s32 %s9, 2
    %s16 = sadd.s32 %s9, 1
    %s17 = ssub.s32 %s9, %s16
    %p18 = scmp.eq.s32.totalorder %s17, 0
    %s20 = sadd.s32 %s19, 1
    %s21 = scalar_select %p18, %s19, %s20
    %p24 = pneg %p18
    %p25 = scmp.eq.s32.totalorder %s9, 1
    %p26 = por %p24, %p25
    %p27 = scmp.ne.s32.totalorder %s19, %s22
    %p28 = scmp.eq.s32.totalorder %s9, 0
    %p29 = por %p27, %p28
    %p30 = scmp.ne.s32.totalorder %s19, %s22
    %p31 = scmp.eq.s32.totalorder %s14, 1
    %p32 = por %p30, %p31
    %p33 = scmp.ne.s32.totalorder %s22, %s23
    %p34 = scmp.eq.s32.totalorder %s14, 0
    %p35 = por %p33, %p34
    %p36 = scmp.ne.s32.totalorder %s22, %s23
    %p37 = scmp.eq.s32.totalorder %s15, 1
    %p38 = por %p36, %p37
    %p40 = scmp.ne.s32.totalorder %s23, %s39
    %p41 = scmp.eq.s32.totalorder %s15, 0
    %p42 = por %p40, %p41
    %s43 = ssub.s32 %s9, %s16
    %p44 = scmp.eq.s32.totalorder %s43, 0
    %s46 = sadd.s32 %s45, 1
    %s47 = scalar_select %p44, %s45, %s46
    %p50 = pneg %p44
    %p51 = scmp.eq.s32.totalorder %s9, 1
    %p52 = por %p50, %p51
    %p53 = scmp.ne.s32.totalorder %s45, %s48
    %p54 = scmp.eq.s32.totalorder %s9, 0
    %p55 = por %p53, %p54
    %p56 = scmp.ne.s32.totalorder %s45, %s48
    %p57 = scmp.eq.s32.totalorder %s14, 1
    %p58 = por %p56, %p57
    %p59 = scmp.ne.s32.totalorder %s48, %s49
    %p60 = scmp.eq.s32.totalorder %s14, 0
    %p61 = por %p59, %p60
    %p62 = scmp.ne.s32.totalorder %s48, %s49
    %p63 = scmp.eq.s32.totalorder %s15, 1
    %p64 = por %p62, %p63
    %p66 = scmp.ne.s32.totalorder %s49, %s65
    %p67 = scmp.eq.s32.totalorder %s15, 0
    %p68 = por %p66, %p67
    %s69 = ssub.s32 %s9, %s16
    %p70 = scmp.eq.s32.totalorder %s69, 0
    %s72 = sadd.s32 %s71, 1
    %s73 = scalar_select %p70, %s71, %s72
    %p76 = pneg %p70
    %p77 = scmp.eq.s32.totalorder %s9, 1
    %p78 = por %p76, %p77
    %p79 = scmp.ne.s32.totalorder %s71, %s74
    %p80 = scmp.eq.s32.totalorder %s9, 0
    %p81 = por %p79, %p80
    %p82 = scmp.ne.s32.totalorder %s71, %s74
    %p83 = scmp.eq.s32.totalorder %s14, 1
    %p84 = por %p82, %p83
    %p85 = scmp.ne.s32.totalorder %s74, %s75
    %p86 = scmp.eq.s32.totalorder %s14, 0
    %p87 = por %p85, %p86
    %p88 = scmp.ne.s32.totalorder %s74, %s75
    %p89 = scmp.eq.s32.totalorder %s15, 1
    %p90 = por %p88, %p89
    %p92 = scmp.ne.s32.totalorder %s75, %s91
    %p93 = scmp.eq.s32.totalorder %s15, 0
    %p94 = por %p92, %p93
    %s95 = ssub.s32 %s9, %s16
    %p96 = scmp.eq.s32.totalorder %s95, 0
    %s98 = sadd.s32 %s97, 1
    %s99 = scalar_select %p96, %s97, %s98
    %p102 = pneg %p96
    %p103 = scmp.eq.s32.totalorder %s9, 1
    %p104 = por %p102, %p103
    %p105 = scmp.ne.s32.totalorder %s97, %s100
    %p106 = scmp.eq.s32.totalorder %s9, 0
    %p107 = por %p105, %p106
    %p108 = scmp.ne.s32.totalorder %s97, %s100
    %p109 = scmp.eq.s32.totalorder %s14, 1
    %p110 = por %p108, %p109
    %p111 = scmp.ne.s32.totalorder %s100, %s101
    %p112 = scmp.eq.s32.totalorder %s14, 0
    %p113 = por %p111, %p112
    %p114 = scmp.ne.s32.totalorder %s100, %s101
    %p115 = scmp.eq.s32.totalorder %s15, 1
    %p116 = por %p114, %p115
    %p118 = scmp.ne.s32.totalorder %s101, %s117
    %p119 = scmp.eq.s32.totalorder %s15, 0
    %p120 = por %p118, %p119
    %p121 = scmp.le.s32.totalorder 1, %s9
    %p122 = scmp.lt.s32.totalorder %s9, 3
    %p123 = pnand %p121, %p122
    %p124 = pneg %p123
    // Predicated region
    $region9: #{stacked_conv_forward.5} parent=5 // pred_check
      _
    $region10: #{stacked_conv_forward.5} parent=5 // pred_check_branch
      %126 = sbr.rel (%p123) target = $region12
    $region11: #{stacked_conv_forward.5} parent=5 // pred_region
      %s127 = ssub.s32 %s9, 1
    $region12: #{stacked_conv_forward.5} parent=5 // pred_fallthru
      _
    %p128 = scmp.lt.s32.totalorder %s9, 2
    // Predicated region
    $region13: #{stacked_conv_forward.5} parent=5 // pred_check
      %p129 = pneg %p128
    $region14: #{stacked_conv_forward.5} parent=5 // pred_check_branch
      %131 = sbr.rel (%p129) target = $region16
    $region15: #{stacked_conv_forward.5} parent=5 // pred_region
      // Predicated region
      $region17: #{stacked_conv_forward.5} parent=15 // pred_check
        %p132 = pneg %p29
      $region18: #{stacked_conv_forward.5} parent=15 // pred_check_branch
        %134 = sbr.rel (%p132) target = $region20
      $region19: #{stacked_conv_forward.5} parent=15 // pred_region
        %s135 = smul.u32 2, %s9
        %p136 = scmp.lt.s32.totalorder %s135, 3
        %s137 = scalar_select %p136, %s135, 3
        %s138 = smul.addr %s137, 2
        %s139 = smul.addr %s138, 8
        %s140 = scalar_lea.vmem %s0, %s139
        %s141 = smul.u32 2, %s9
      $region20: #{stacked_conv_forward.5} parent=15 // pred_fallthru
        _
      // Predicated region
      $region21: #{stacked_conv_forward.5} parent=15 // pred_check
        %p142 = pneg %p55
      $region22: #{stacked_conv_forward.5} parent=15 // pred_check_branch
        %144 = sbr.rel (%p142) target = $region24
      $region23: #{stacked_conv_forward.5} parent=15 // pred_region
        %s145 = smul.u32 2, %s9
        %p146 = scmp.lt.s32.totalorder %s145, 3
        %s147 = scalar_select %p146, %s145, 3
        %s148 = smul.addr %s147, 8
        %s149 = scalar_lea.vmem %s1, %s148
        %s150 = smul.u32 2, %s9
      $region24: #{stacked_conv_forward.5} parent=15 // pred_fallthru
        _
      // Predicated region
      $region25: #{stacked_conv_forward.5} parent=15 // pred_check
        %p151 = pneg %p81
      $region26: #{stacked_conv_forward.5} parent=15 // pred_check_branch
        %153 = sbr.rel (%p151) target = $region28
      $region27: #{stacked_conv_forward.5} parent=15 // pred_region
        %s154 = smul.u32 2, %s9
        %p155 = scmp.lt.s32.totalorder %s154, 3
        %s156 = scalar_select %p155, %s154, 3
        %s157 = smul.addr %s156, 8
        %s158 = scalar_lea.vmem %s2, %s157
        %s159 = smul.u32 2, %s9
      $region28: #{stacked_conv_forward.5} parent=15 // pred_fallthru
        _
    $region16: #{stacked_conv_forward.5} parent=5 // pred_fallthru
      _
    %p160 = scmp.le.s32.totalorder 1, %s9
    %p161 = scmp.lt.s32.totalorder %s9, 3
    %p162 = pnand %p160, %p161
    %p163 = pneg %p162
    // Predicated region
    $region29: #{stacked_conv_forward.5} parent=5 // pred_check
      _
    $region30: #{stacked_conv_forward.5} parent=5 // pred_check_branch
      %165 = sbr.rel (%p162) target = $region32
    $region31: #{stacked_conv_forward.5} parent=5 // pred_region
      %s166 = ssub.s32 %s9, 1
      %s167 = smul.u32 2, %s14
      %p168 = scmp.lt.s32.totalorder %s167, 3
      %s169 = scalar_select %p168, %s167, 3
      %s170 = smul.addr %s169, 2
      %s171 = smul.addr %s170, 8
      %s172 = scalar_lea.vmem %s0, %s171
      %p173 = pneg %p35
      %p174 = pneg %p32
      %s175 = smul.u32 2, %s14
      %p176 = scmp.lt.s32.totalorder %s175, 3
      %s177 = scalar_select %p176, %s175, 3
      %s178 = smul.addr %s177, 8
      %s179 = scalar_lea.vmem %s1, %s178
      %p180 = pneg %p61
      %p181 = pneg %p58
      %s182 = smul.u32 2, %s14
      %p183 = scmp.lt.s32.totalorder %s182, 3
      %s184 = scalar_select %p183, %s182, 3
      %s185 = smul.addr %s184, 8
      %s186 = scalar_lea.vmem %s2, %s185
      %p187 = pneg %p87
      %p188 = pneg %p84
      %p189 = pneg %p113
      %p190 = pneg %p110
      %s191 = smul.u32 2, %s14
      %p192 = scmp.lt.s32.totalorder %s191, 3
      %s193 = scalar_select %p192, %s191, 3
      %s194 = smul.addr %s193, 2
      %s195 = smul.addr %s194, 8
      %s196 = scalar_lea.vmem %s3, %s195
      %s197 = smul.u32 2, %s14
      %p198 = scmp.lt.s32.totalorder %s197, 3
      %s199 = scalar_select %p198, %s197, 3
      %s200 = smul.addr %s199, 2
      %s201 = smul.addr %s200, 8
      %s202 = scalar_lea.vmem %s0, %s201
      %s203 = smul.u32 2, %s14
      %s204 = smul.u32 2, %s14
      %p205 = scmp.lt.s32.totalorder %s204, 3
      %s206 = scalar_select %p205, %s204, 3
      %s207 = smul.addr %s206, 8
      %s208 = scalar_lea.vmem %s1, %s207
      %s209 = smul.u32 2, %s14
      %s210 = smul.u32 2, %s14
      %p211 = scmp.lt.s32.totalorder %s210, 3
      %s212 = scalar_select %p211, %s210, 3
      %s213 = smul.addr %s212, 8
      %s214 = scalar_lea.vmem %s2, %s213
      %s215 = smul.u32 2, %s14
      %s216 = smul.u32 2, %s14
      %p217 = scmp.lt.s32.totalorder %s216, 3
      %s218 = scalar_select %p217, %s216, 3
      %s219 = smul.addr %s218, 2
      %s220 = smul.addr %s219, 8
      %s221 = scalar_lea.vmem %s3, %s220
      %s222 = smul.u32 2, %s14
      %v223 = vld [vmem:[%s202] sm:$0xff]
      %v224 = vld [vmem:[%s202 + $0x8] sm:$0xff]
      %v225 = vld [vmem:[%s202 + $0x10] sm:$0xff]
      %v226 = vld [vmem:[%s202 + $0x18] sm:$0xff]
      %v227 = vld [vmem:[%s208] sm:$0xff]
      %v228 = vld [vmem:[%s208 + $0x8] sm:$0xff]
      %230 = vset.pattern.permute.xlu0 0
      %231 = vperm.xlu0 %230, %v227
      %v232 = vpop.permute.xlu0 %231
      %235 = vset.pattern.permute.xlu0 0
      %236 = vperm.xlu0 %235, %v228
      %v237 = vpop.permute.xlu0 %236
      %v239 = vmul.f32 %v223, %v232
      %v240 = vmul.f32 %v224, %v232
      %v241 = vmul.f32 %v225, %v237
      %v242 = vmul.f32 %v226, %v237
      %v243 = vld [vmem:[%s214] sm:$0xff]
      %v244 = vld [vmem:[%s214 + $0x8] sm:$0xff]
      %246 = vset.pattern.permute.xlu0 0
      %247 = vperm.xlu0 %246, %v243
      %v248 = vpop.permute.xlu0 %247
      %251 = vset.pattern.permute.xlu0 0
      %252 = vperm.xlu0 %251, %v244
      %v253 = vpop.permute.xlu0 %252
      %v255 = vadd.f32 %v239, %v248
      %v256 = vadd.f32 %v240, %v248
      %v257 = vadd.f32 %v241, %v253
      %v258 = vadd.f32 %v242, %v253
      %v259 = vmax.f32 %v255, 0.0
      %v260 = vmax.f32 %v256, 0.0
      %v261 = vmax.f32 %v257, 0.0
      %v262 = vmax.f32 %v258, 0.0
      %263 = vst [vmem:[%s221] sm:$0xff] %v259
      %264 = vst [vmem:[%s221 + $0x8] sm:$0xff] %v260
      %265 = vst [vmem:[%s221 + $0x10] sm:$0xff] %v261
      %266 = vst [vmem:[%s221 + $0x18] sm:$0xff] %v262
      %s267 = smul.u32 2, %s14
      %p268 = scmp.lt.s32.totalorder %s267, 3
      %s269 = scalar_select %p268, %s267, 3
      %s270 = smul.addr %s269, 2
      %s271 = smul.addr %s270, 8
      %s272 = scalar_lea.vmem %s3, %s271
      // Predicated region
      $region33: #{stacked_conv_forward.5} parent=31 // pred_check
        %p273 = pneg %p110
      $region34: #{stacked_conv_forward.5} parent=31 // pred_check_branch
        %275 = sbr.rel (%p273) target = $region36
      $region35: #{stacked_conv_forward.5} parent=31 // pred_region
        %s276 = smul.u32 2, %s14
      $region36: #{stacked_conv_forward.5} parent=31 // pred_fallthru
        _
    $region32: #{stacked_conv_forward.5} parent=5 // pred_fallthru
      _
    %p277 = scmp.le.s32.totalorder 2, %s9
    // Predicated region
    $region37: #{stacked_conv_forward.5} parent=5 // pred_check
      %p278 = pneg %p277
    $region38: #{stacked_conv_forward.5} parent=5 // pred_check_branch
      %280 = sbr.rel (%p278) target = $region40
    $region39: #{stacked_conv_forward.5} parent=5 // pred_region
      %s281 = ssub.s32 %s9, 2
      // Predicated region
      $region41: #{stacked_conv_forward.5} parent=39 // pred_check
        %p282 = pneg %p116
      $region42: #{stacked_conv_forward.5} parent=39 // pred_check_branch
        %284 = sbr.rel (%p282) target = $region44
      $region43: #{stacked_conv_forward.5} parent=39 // pred_region
        %s285 = smul.u32 2, %s15
        %p286 = scmp.lt.s32.totalorder %s285, 3
        %s287 = scalar_select %p286, %s285, 3
        %s288 = smul.addr %s287, 2
        %s289 = smul.addr %s288, 8
        %s290 = scalar_lea.vmem %s3, %s289
      $region44: #{stacked_conv_forward.5} parent=39 // pred_fallthru
        _
    $region40: #{stacked_conv_forward.5} parent=5 // pred_fallthru
      _
  $region6: #{stacked_conv_forward.5} parent=0 // loop_footer
    %s13 = sadd.s32 1, %s9
  $region7: #{stacked_conv_forward.5} parent=0 // loop_footer_branch
    %8 = sbr.rel target = $region3
  $region8: #{stacked_conv_forward.5} parent=0 // loop_exit
    _

// kernel: stacked_conv_forward.4
$region0: #{stacked_conv_forward.4}
  #allocation0 [shape = 'u32[]', space=smem, size = 0x4, offset = 0x4, fixed_abs, tag = 'smem constant byte address 0x4 - core index']
  #allocation1 [shape = 'u32[144,128]{1,0:T(1,128)}', space=vmem, size = 0x12000, scoped, tag = 'internal scratch']
  %s0 = inlined_call_operand.vmem [shape: f32[2,256,8], index: 0, kind: input, shape index: {}]
  %s1 = inlined_call_operand.vmem [shape: f32[1,8], index: 1, kind: input, shape index: {}]
  %s2 = inlined_call_operand.vmem [shape: f32[1,8], index: 2, kind: input, shape index: {}]
  %s3 = inlined_call_operand.vmem [shape: f32[7,8,16], index: 3, kind: input, shape index: {}]
  %s4 = inlined_call_operand.vmem [shape: f32[1,16], index: 4, kind: input, shape index: {}]
  %s5 = inlined_call_operand.vmem [shape: f32[32,256], index: 5, kind: output, shape index: {0}]
  %s6 = inlined_call_operand.vmem [shape: f32[2,2,128], index: 6, kind: output, shape index: {1}]
  %7 = xla_tuple %s5, %s6
  %s8 = sld [smem:[#allocation0]]
  $region61: #{stacked_conv_forward.4} parent=0
    _
  %s10 = ssub.s32 1, %s8
  %s11 = scalar_select 0, %s10, %s8
  loop: start=0, step=1, limit=4
  $region2: #{stacked_conv_forward.4} parent=0 // loop_pre_header
    _
  $region3: #{stacked_conv_forward.4} parent=0 // loop_header
    %s13 = sphi 0, %s17
    %p14 = scmp.ge.s32.totalorder %s13, 4
    %s23 = sphi 0, %s25
    %s26 = sphi 0, %s23
    %s27 = sphi 0, %s26
    %s43 = sphi 0, %s27
    %s47 = sphi 0, %s47
    %s49 = sphi 0, %s47
    %s50 = sphi 0, %s49
    %s64 = sphi 0, %s50
    %s68 = sphi 0, %s68
    %s70 = sphi 0, %s68
    %s71 = sphi 0, %s70
    %s85 = sphi 0, %s71
    %s89 = sphi 0, %s89
    %s91 = sphi 0, %s89
    %s92 = sphi 0, %s91
    %s106 = sphi 0, %s92
    %s110 = sphi 0, %s110
    %s112 = sphi 0, %s110
    %s113 = sphi 0, %s112
    %s127 = sphi 0, %s113
    %s133 = sphi 0, %s135
    %s136 = sphi 0, %s133
    %s137 = sphi 0, %s136
    %s153 = sphi 0, %s137
    %s159 = sphi 0, %s161
    %s162 = sphi 0, %s159
    %s163 = sphi 0, %s162
    %s179 = sphi 0, %s163
  $region4: #{stacked_conv_forward.4} parent=0 // loop_header_branch
    %16 = sbr.rel (%p14) target = $region8
  $region5: #{stacked_conv_forward.4} parent=0 // loop_body
    %s18 = ssub.s32 %s13, 1
    %s19 = ssub.s32 %s13, 2
    %s20 = sadd.s32 %s13, 1
    %s21 = ssub.s32 %s13, %s20
    %p22 = scmp.eq.s32.totalorder %s21, 0
    %s24 = sadd.s32 %s23, 1
    %s25 = scalar_select %p22, %s23, %s24
    %p28 = pneg %p22
    %p29 = scmp.eq.s32.totalorder %s13, 1
    %p30 = por %p28, %p29
    %p31 = scmp.ne.s32.totalorder %s23, %s26
    %p32 = scmp.eq.s32.totalorder %s13, 0
    %p33 = por %p31, %p32
    %p34 = scmp.ne.s32.totalorder %s23, %s26
    %p35 = scmp.eq.s32.totalorder %s18, 1
    %p36 = por %p34, %p35
    %p37 = scmp.ne.s32.totalorder %s26, %s27
    %p38 = scmp.eq.s32.totalorder %s18, 0
    %p39 = por %p37, %p38
    %p40 = scmp.ne.s32.totalorder %s26, %s27
    %p41 = scmp.eq.s32.totalorder %s19, 1
    %p42 = por %p40, %p41
    %p44 = scmp.ne.s32.totalorder %s27, %s43
    %p45 = scmp.eq.s32.totalorder %s19, 0
    %p46 = por %p44, %p45
    %s48 = sadd.s32 %s47, 1
    %p51 = scmp.eq.s32.totalorder %s13, 1
    %p52 = scmp.ne.s32.totalorder %s47, %s49
    %p53 = scmp.eq.s32.totalorder %s13, 0
    %p54 = por %p52, %p53
    %p55 = scmp.ne.s32.totalorder %s47, %s49
    %p56 = scmp.eq.s32.totalorder %s18, 1
    %p57 = por %p55, %p56
    %p58 = scmp.ne.s32.totalorder %s49, %s50
    %p59 = scmp.eq.s32.totalorder %s18, 0
    %p60 = por %p58, %p59
    %p61 = scmp.ne.s32.totalorder %s49, %s50
    %p62 = scmp.eq.s32.totalorder %s19, 1
    %p63 = por %p61, %p62
    %p65 = scmp.ne.s32.totalorder %s50, %s64
    %p66 = scmp.eq.s32.totalorder %s19, 0
    %p67 = por %p65, %p66
    %s69 = sadd.s32 %s68, 1
    %p72 = scmp.eq.s32.totalorder %s13, 1
    %p73 = scmp.ne.s32.totalorder %s68, %s70
    %p74 = scmp.eq.s32.totalorder %s13, 0
    %p75 = por %p73, %p74
    %p76 = scmp.ne.s32.totalorder %s68, %s70
    %p77 = scmp.eq.s32.totalorder %s18, 1
    %p78 = por %p76, %p77
    %p79 = scmp.ne.s32.totalorder %s70, %s71
    %p80 = scmp.eq.s32.totalorder %s18, 0
    %p81 = por %p79, %p80
    %p82 = scmp.ne.s32.totalorder %s70, %s71
    %p83 = scmp.eq.s32.totalorder %s19, 1
    %p84 = por %p82, %p83
    %p86 = scmp.ne.s32.totalorder %s71, %s85
    %p87 = scmp.eq.s32.totalorder %s19, 0
    %p88 = por %p86, %p87
    %s90 = sadd.s32 %s89, 1
    %p93 = scmp.eq.s32.totalorder %s13, 1
    %p94 = scmp.ne.s32.totalorder %s89, %s91
    %p95 = scmp.eq.s32.totalorder %s13, 0
    %p96 = por %p94, %p95
    %p97 = scmp.ne.s32.totalorder %s89, %s91
    %p98 = scmp.eq.s32.totalorder %s18, 1
    %p99 = por %p97, %p98
    %p100 = scmp.ne.s32.totalorder %s91, %s92
    %p101 = scmp.eq.s32.totalorder %s18, 0
    %p102 = por %p100, %p101
    %p103 = scmp.ne.s32.totalorder %s91, %s92
    %p104 = scmp.eq.s32.totalorder %s19, 1
    %p105 = por %p103, %p104
    %p107 = scmp.ne.s32.totalorder %s92, %s106
    %p108 = scmp.eq.s32.totalorder %s19, 0
    %p109 = por %p107, %p108
    %s111 = sadd.s32 %s110, 1
    %p114 = scmp.eq.s32.totalorder %s13, 1
    %p115 = scmp.ne.s32.totalorder %s110, %s112
    %p116 = scmp.eq.s32.totalorder %s13, 0
    %p117 = por %p115, %p116
    %p118 = scmp.ne.s32.totalorder %s110, %s112
    %p119 = scmp.eq.s32.totalorder %s18, 1
    %p120 = por %p118, %p119
    %p121 = scmp.ne.s32.totalorder %s112, %s113
    %p122 = scmp.eq.s32.totalorder %s18, 0
    %p123 = por %p121, %p122
    %p124 = scmp.ne.s32.totalorder %s112, %s113
    %p125 = scmp.eq.s32.totalorder %s19, 1
    %p126 = por %p124, %p125
    %p128 = scmp.ne.s32.totalorder %s113, %s127
    %p129 = scmp.eq.s32.totalorder %s19, 0
    %p130 = por %p128, %p129
    %s131 = ssub.s32 %s13, %s20
    %p132 = scmp.eq.s32.totalorder %s131, 0
    %s134 = sadd.s32 %s133, 1
    %s135 = scalar_select %p132, %s133, %s134
    %p138 = pneg %p132
    %p139 = scmp.eq.s32.totalorder %s13, 1
    %p140 = por %p138, %p139
    %p141 = scmp.ne.s32.totalorder %s133, %s136
    %p142 = scmp.eq.s32.totalorder %s13, 0
    %p143 = por %p141, %p142
    %p144 = scmp.ne.s32.totalorder %s133, %s136
    %p145 = scmp.eq.s32.totalorder %s18, 1
    %p146 = por %p144, %p145
    %p147 = scmp.ne.s32.totalorder %s136, %s137
    %p148 = scmp.eq.s32.totalorder %s18, 0
    %p149 = por %p147, %p148
    %p150 = scmp.ne.s32.totalorder %s136, %s137
    %p151 = scmp.eq.s32.totalorder %s19, 1
    %p152 = por %p150, %p151
    %p154 = scmp.ne.s32.totalorder %s137, %s153
    %p155 = scmp.eq.s32.totalorder %s19, 0
    %p156 = por %p154, %p155
    %s157 = ssub.s32 %s13, %s20
    %p158 = scmp.eq.s32.totalorder %s157, 0
    %s160 = sadd.s32 %s159, 1
    %s161 = scalar_select %p158, %s159, %s160
    %p164 = pneg %p158
    %p165 = scmp.eq.s32.totalorder %s13, 1
    %p166 = por %p164, %p165
    %p167 = scmp.ne.s32.totalorder %s159, %s162
    %p168 = scmp.eq.s32.totalorder %s13, 0
    %p169 = por %p167, %p168
    %p170 = scmp.ne.s32.totalorder %s159, %s162
    %p171 = scmp.eq.s32.totalorder %s18, 1
    %p172 = por %p170, %p171
    %p173 = scmp.ne.s32.totalorder %s162, %s163
    %p174 = scmp.eq.s32.totalorder %s18, 0
    %p175 = por %p173, %p174
    %p176 = scmp.ne.s32.totalorder %s162, %s163
    %p177 = scmp.eq.s32.totalorder %s19, 1
    %p178 = por %p176, %p177
    %p180 = scmp.ne.s32.totalorder %s163, %s179
    %p181 = scmp.eq.s32.totalorder %s19, 0
    %p182 = por %p180, %p181
    %p183 = scmp.le.s32.totalorder 1, %s13
    %p184 = scmp.lt.s32.totalorder %s13, 3
    %p185 = pnand %p183, %p184
    %p186 = pneg %p185
    // Predicated region
    $region9: #{stacked_conv_forward.4} parent=5 // pred_check
      _
    $region10: #{stacked_conv_forward.4} parent=5 // pred_check_branch
      %188 = sbr.rel (%p185) target = $region12
    $region11: #{stacked_conv_forward.4} parent=5 // pred_region
      %s189 = ssub.s32 %s13, 1
      // Predicated region
      $region13: #{stacked_conv_forward.4} parent=11 // pred_check
        %p190 = pneg %p60
      $region14: #{stacked_conv_forward.4} parent=11 // pred_check_branch
        %192 = sbr.rel (%p190) target = $region16
      $region15: #{stacked_conv_forward.4} parent=11 // pred_region
        _
      $region16: #{stacked_conv_forward.4} parent=11 // pred_fallthru
        _
      // Predicated region
      $region17: #{stacked_conv_forward.4} parent=11 // pred_check
        %p193 = pneg %p81
      $region18: #{stacked_conv_forward.4} parent=11 // pred_check_branch
        %195 = sbr.rel (%p193) target = $region20
      $region19: #{stacked_conv_forward.4} parent=11 // pred_region
        _
      $region20: #{stacked_conv_forward.4} parent=11 // pred_fallthru
        _
      // Predicated region
      $region21: #{stacked_conv_forward.4} parent=11 // pred_check
        %p196 = pneg %p102
      $region22: #{stacked_conv_forward.4} parent=11 // pred_check_branch
        %198 = sbr.rel (%p196) target = $region24
      $region23: #{stacked_conv_forward.4} parent=11 // pred_region
        _
      $region24: #{stacked_conv_forward.4} parent=11 // pred_fallthru
        _
      // Predicated region
      $region25: #{stacked_conv_forward.4} parent=11 // pred_check
        %p199 = pneg %p123
      $region26: #{stacked_conv_forward.4} parent=11 // pred_check_branch
        %201 = sbr.rel (%p199) target = $region28
      $region27: #{stacked_conv_forward.4} parent=11 // pred_region
        _
      $region28: #{stacked_conv_forward.4} parent=11 // pred_fallthru
        _
    $region12: #{stacked_conv_forward.4} parent=5 // pred_fallthru
      _
    %p202 = scmp.lt.s32.totalorder %s13, 2
    // Predicated region
    $region29: #{stacked_conv_forward.4} parent=5 // pred_check
      %p203 = pneg %p202
    $region30: #{stacked_conv_forward.4} parent=5 // pred_check_branch
      %205 = sbr.rel (%p203) target = $region32
    $region31: #{stacked_conv_forward.4} parent=5 // pred_region
      // Predicated region
      $region33: #{stacked_conv_forward.4} parent=31 // pred_check
        %p206 = pneg %p33
      $region34: #{stacked_conv_forward.4} parent=31 // pred_check_branch
        %208 = sbr.rel (%p206) target = $region36
      $region35: #{stacked_conv_forward.4} parent=31 // pred_region
        %p209 = scmp.lt.s32.totalorder %s13, 1
        %s210 = scalar_select %p209, %s13, 1
        %s211 = smul.addr %s210, 32
        %s212 = smul.addr %s211, 8
        %s213 = scalar_lea.vmem %s0, %s212
      $region36: #{stacked_conv_forward.4} parent=31 // pred_fallthru
        _
    $region32: #{stacked_conv_forward.4} parent=5 // pred_fallthru
      _
    %p214 = scmp.le.s32.totalorder 1, %s13
    %p215 = scmp.lt.s32.totalorder %s13, 3
    %p216 = pnand %p214, %p215
    %p217 = pneg %p216
    // Predicated region
    $region37: #{stacked_conv_forward.4} parent=5 // pred_check
      _
    $region38: #{stacked_conv_forward.4} parent=5 // pred_check_branch
      %219 = sbr.rel (%p216) target = $region40
    $region39: #{stacked_conv_forward.4} parent=5 // pred_region
      %s220 = ssub.s32 %s13, 1
      %p221 = scmp.lt.s32.totalorder %s18, 1
      %s222 = scalar_select %p221, %s18, 1
      %s223 = smul.addr %s222, 32
      %s224 = smul.addr %s223, 8
      %s225 = scalar_lea.vmem %s0, %s224
      %p226 = pneg %p39
      %p227 = pneg %p36
      %p228 = pneg %p60
      %p229 = pneg %p57
      %p230 = pneg %p81
      %p231 = pneg %p78
      %p232 = pneg %p102
      %p233 = pneg %p99
      %p234 = pneg %p123
      %p235 = pneg %p120
      %p236 = pneg %p149
      %p237 = pneg %p146
      %s238 = smul.u32 2, %s18
      %p239 = scmp.lt.s32.totalorder %s238, 3
      %s240 = scalar_select %p239, %s238, 3
      %s241 = smul.addr %s240, 2
      %s242 = smul.addr %s241, 8
      %s243 = scalar_lea.vmem %s5, %s242
      %p244 = pneg %p175
      %p245 = pneg %p172
      %p246 = scmp.lt.s32.totalorder %s18, 1
      %s247 = scalar_select %p246, %s18, 1
      %s248 = smul.addr %s247, 2
      %s249 = scalar_lea.vmem %s6, %s248
      %p250 = scmp.lt.s32.totalorder %s18, 1
      %s251 = scalar_select %p250, %s18, 1
      %s252 = smul.addr %s251, 32
      %s253 = smul.addr %s252, 8
      %s254 = scalar_lea.vmem %s0, %s253
      %s255 = smul.u32 2, %s18
      %p256 = scmp.lt.s32.totalorder %s255, 3
      %s257 = scalar_select %p256, %s255, 3
      %s258 = smul.addr %s257, 2
      %s259 = smul.addr %s258, 8
      %s260 = scalar_lea.vmem %s5, %s259
      %s261 = smul.u32 2, %s18
      %p262 = scmp.lt.s32.totalorder %s18, 1
      %s263 = scalar_select %p262, %s18, 1
      %s264 = smul.addr %s263, 2
      %s265 = scalar_lea.vmem %s6, %s264
      %v266 = vld [vmem:[%s254] sm:$0xff]
      %v267 = vld [vmem:[%s254 + $0x8] sm:$0xff]
      %v268 = vld [vmem:[%s254 + $0x10] sm:$0xff]
      %v269 = vld [vmem:[%s254 + $0x18] sm:$0xff]
      %v270 = vld [vmem:[%s254 + $0x20] sm:$0xff]
      %v271 = vld [vmem:[%s254 + $0x28] sm:$0xff]
      %v272 = vld [vmem:[%s254 + $0x30] sm:$0xff]
      %v273 = vld [vmem:[%s254 + $0x38] sm:$0xff]
      %v274 = vld [vmem:[%s254 + $0x40] sm:$0xff]
      %v275 = vld [vmem:[%s254 + $0x48] sm:$0xff]
      %v276 = vld [vmem:[%s254 + $0x50] sm:$0xff]
      %v277 = vld [vmem:[%s254 + $0x58] sm:$0xff]
      %v278 = vld [vmem:[%s254 + $0x60] sm:$0xff]
      %v279 = vld [vmem:[%s254 + $0x68] sm:$0xff]
      %v280 = vld [vmem:[%s254 + $0x70] sm:$0xff]
      %v281 = vld [vmem:[%s254 + $0x78] sm:$0xff]
      %v282 = vld [vmem:[%s254 + $0x80] sm:$0xff]
      %v283 = vld [vmem:[%s254 + $0x88] sm:$0xff]
      %v284 = vld [vmem:[%s254 + $0x90] sm:$0xff]
      %v285 = vld [vmem:[%s254 + $0x98] sm:$0xff]
      %v286 = vld [vmem:[%s254 + $0xa0] sm:$0xff]
      %v287 = vld [vmem:[%s254 + $0xa8] sm:$0xff]
      %v288 = vld [vmem:[%s254 + $0xb0] sm:$0xff]
      %v289 = vld [vmem:[%s254 + $0xb8] sm:$0xff]
      %v290 = vld [vmem:[%s254 + $0xc0] sm:$0xff]
      %v291 = vld [vmem:[%s254 + $0xc8] sm:$0xff]
      %v292 = vld [vmem:[%s254 + $0xd0] sm:$0xff]
      %v293 = vld [vmem:[%s254 + $0xd8] sm:$0xff]
      %v294 = vld [vmem:[%s254 + $0xe0] sm:$0xff]
      %v295 = vld [vmem:[%s254 + $0xe8] sm:$0xff]
      %v296 = vld [vmem:[%s254 + $0xf0] sm:$0xff]
      %v297 = vld [vmem:[%s254 + $0xf8] sm:$0xff]
      %v298 = vld [vmem:[%s1] sm:$0x1]
      %v300 = vlaneseq
      %v301 = vshrl.u32 %v300, 7
      %v302 = vsub.s32 0, %v301
      %v303 = vrot.slane %v298, %v302
      %v305 = vmul.f32 %v266, %v303
      %v306 = vmul.f32 %v267, %v303
      %v307 = vmul.f32 %v268, %v303
      %v308 = vmul.f32 %v269, %v303
      %v309 = vmul.f32 %v270, %v303
      %v310 = vmul.f32 %v271, %v303
      %v311 = vmul.f32 %v272, %v303
      %v312 = vmul.f32 %v273, %v303
      %v313 = vmul.f32 %v274, %v303
      %v314 = vmul.f32 %v275, %v303
      %v315 = vmul.f32 %v276, %v303
      %v316 = vmul.f32 %v277, %v303
      %v317 = vmul.f32 %v278, %v303
      %v318 = vmul.f32 %v279, %v303
      %v319 = vmul.f32 %v280, %v303
      %v320 = vmul.f32 %v281, %v303
      %v321 = vmul.f32 %v282, %v303
      %v322 = vmul.f32 %v283, %v303
      %v323 = vmul.f32 %v284, %v303
      %v324 = vmul.f32 %v285, %v303
      %v325 = vmul.f32 %v286, %v303
      %v326 = vmul.f32 %v287, %v303
      %v327 = vmul.f32 %v288, %v303
      %v328 = vmul.f32 %v289, %v303
      %v329 = vmul.f32 %v290, %v303
      %v330 = vmul.f32 %v291, %v303
      %v331 = vmul.f32 %v292, %v303
      %v332 = vmul.f32 %v293, %v303
      %v333 = vmul.f32 %v294, %v303
      %v334 = vmul.f32 %v295, %v303
      %v335 = vmul.f32 %v296, %v303
      %v336 = vmul.f32 %v297, %v303
      %v337 = vld [vmem:[%s2] sm:$0x1]
      %v339 = vlaneseq
      %v340 = vshrl.u32 %v339, 7
      %v341 = vsub.s32 0, %v340
      %v342 = vrot.slane %v337, %v341
      %v344 = vadd.f32 %v305, %v342
      %v345 = vadd.f32 %v306, %v342
      %v346 = vadd.f32 %v307, %v342
      %v347 = vadd.f32 %v308, %v342
      %v348 = vadd.f32 %v309, %v342
      %v349 = vadd.f32 %v310, %v342
      %v350 = vadd.f32 %v311, %v342
      %v351 = vadd.f32 %v312, %v342
      %v352 = vadd.f32 %v313, %v342
      %v353 = vadd.f32 %v314, %v342
      %v354 = vadd.f32 %v315, %v342
      %v355 = vadd.f32 %v316, %v342
      %v356 = vadd.f32 %v317, %v342
      %v357 = vadd.f32 %v318, %v342
      %v358 = vadd.f32 %v319, %v342
      %v359 = vadd.f32 %v320, %v342
      %v360 = vadd.f32 %v321, %v342
      %v361 = vadd.f32 %v322, %v342
      %v362 = vadd.f32 %v323, %v342
      %v363 = vadd.f32 %v324, %v342
      %v364 = vadd.f32 %v325, %v342
      %v365 = vadd.f32 %v326, %v342
      %v366 = vadd.f32 %v327, %v342
      %v367 = vadd.f32 %v328, %v342
      %v368 = vadd.f32 %v329, %v342
      %v369 = vadd.f32 %v330, %v342
      %v370 = vadd.f32 %v331, %v342
      %v371 = vadd.f32 %v332, %v342
      %v372 = vadd.f32 %v333, %v342
      %v373 = vadd.f32 %v334, %v342
      %v374 = vadd.f32 %v335, %v342
      %v375 = vadd.f32 %v336, %v342
      %v376 = vmax.f32 %v344, 0.0
      %v377 = vmax.f32 %v345, 0.0
      %v378 = vmax.f32 %v346, 0.0
      %v379 = vmax.f32 %v347, 0.0
      %v380 = vmax.f32 %v348, 0.0
      %v381 = vmax.f32 %v349, 0.0
      %v382 = vmax.f32 %v350, 0.0
      %v383 = vmax.f32 %v351, 0.0
      %v384 = vmax.f32 %v352, 0.0
      %v385 = vmax.f32 %v353, 0.0
      %v386 = vmax.f32 %v354, 0.0
      %v387 = vmax.f32 %v355, 0.0
      %v388 = vmax.f32 %v356, 0.0
      %v389 = vmax.f32 %v357, 0.0
      %v390 = vmax.f32 %v358, 0.0
      %v391 = vmax.f32 %v359, 0.0
      %v392 = vmax.f32 %v360, 0.0
      %v393 = vmax.f32 %v361, 0.0
      %v394 = vmax.f32 %v362, 0.0
      %v395 = vmax.f32 %v363, 0.0
      %v396 = vmax.f32 %v364, 0.0
      %v397 = vmax.f32 %v365, 0.0
      %v398 = vmax.f32 %v366, 0.0
      %v399 = vmax.f32 %v367, 0.0
      %v400 = vmax.f32 %v368, 0.0
      %v401 = vmax.f32 %v369, 0.0
      %v402 = vmax.f32 %v370, 0.0
      %v403 = vmax.f32 %v371, 0.0
      %v404 = vmax.f32 %v372, 0.0
      %v405 = vmax.f32 %v373, 0.0
      %v406 = vmax.f32 %v374, 0.0
      %v407 = vmax.f32 %v375, 0.0
      %v408 = vld [vmem:[%s3] sm:$0xff]
      %s409 = scalar_lea.vmem %s3, 8
      %v410 = vld [vmem:[%s409] sm:$0xff]
      %vm411 = vcmask 64512
      %v413 = vsel %vm411, 0.0, 0
      %v416 = vsel %vm411, %v376, 0
      %v419 = vsel %vm411, %v377, 0
      %v422 = vsel %vm411, %v378, 0
      %v425 = vsel %vm411, %v379, 0
      %v428 = vsel %vm411, %v380, 0
      %v431 = vsel %vm411, %v381, 0
      %v434 = vsel %vm411, %v382, 0
      %v437 = vsel %vm411, %v383, 0
      %v440 = vsel %vm411, %v384, 0
      %v443 = vsel %vm411, %v385, 0
      %v446 = vsel %vm411, %v386, 0
      %v449 = vsel %vm411, %v387, 0
      %v452 = vsel %vm411, %v388, 0
      %v455 = vsel %vm411, %v389, 0
      %v458 = vsel %vm411, %v390, 0
      %v461 = vsel %vm411, %v391, 0
      %v464 = vsel %vm411, %v392, 0
      %v467 = vsel %vm411, %v393, 0
      %v470 = vsel %vm411, %v394, 0
      %v473 = vsel %vm411, %v395, 0
      %v476 = vsel %vm411, %v396, 0
      %v479 = vsel %vm411, %v397, 0
      %v482 = vsel %vm411, %v398, 0
      %v485 = vsel %vm411, %v399, 0
      %v488 = vsel %vm411, %v400, 0
      %v491 = vsel %vm411, %v401, 0
      %v494 = vsel %vm411, %v402, 0
      %v497 = vsel %vm411, %v403, 0
      %499 = vmatprep.subr.mxu0 0.0
      %500 = vmatpush1.msra.mxu0 0.0
      %501 = vmatprep.subr.mxu0 0.0
      %502 = vmatpush1.msra.mxu0 0.0
      %503 = vmatprep.subr.mxu0 0.0
      %504 = vmatpush1.msra.mxu0 0.0
      %505 = vmatprep.subr.mxu0 0.0
      %506 = vmatpush1.msra.mxu0 0.0
      %507 = vmatprep.subr.mxu0 0.0
      %508 = vmatpush1.msra.mxu0 0.0
      %509 = vmatprep.subr.mxu0 0.0
      %510 = vmatpush1.msra.mxu0 0.0
      %511 = vmatprep.subr.mxu0 0.0
      %512 = vmatpush1.msra.mxu0 0.0
      %513 = vmatprep.subr.mxu0 0.0
      %514 = vmatpush1.msra.mxu0 0.0
      %515 = vmatprep.subr.mxu0 0.0
      %516 = vmatpush1.msra.mxu0 0.0
      %517 = vmatprep.subr.mxu0 0.0
      %518 = vmatpush1.msra.mxu0 0.0
      %519 = vmatprep.subr.mxu0 0.0
      %520 = vmatpush1.msra.mxu0 0.0
      %521 = vmatprep.subr.mxu0 0.0
      %522 = vmatpush1.msra.mxu0 0.0
      %523 = vmatprep.subr.mxu0 0.0
      %524 = vmatpush1.msra.mxu0 0.0
      %525 = vmatprep.subr.mxu0 0.0
      %526 = vmatpush1.msra.mxu0 0.0
      %527 = vmatprep.subr.mxu0 0.0
      %528 = vmatpush1.msra.mxu0 0.0
      %529 = vmatprep.subr.mxu0 0.0
      %530 = vmatpush1.msra.mxu0 %v410
      %531 = vmatprep.subr.mxu0 0.0
      %532 = vmatpush2.msra.mxu0 0.0
      %533 = vmatprep.subr.mxu0 0.0
      %534 = vmatpush2.msra.mxu0 0.0
      %535 = vmatprep.subr.mxu0 0.0
      %536 = vmatpush2.msra.mxu0 0.0
      %537 = vmatprep.subr.mxu0 0.0
      %538 = vmatpush2.msra.mxu0 0.0
      %539 = vmatprep.subr.mxu0 0.0
      %540 = vmatpush2.msra.mxu0 0.0
      %541 = vmatprep.subr.mxu0 0.0
      %542 = vmatpush2.msra.mxu0 0.0
      %543 = vmatprep.subr.mxu0 0.0
      %544 = vmatpush2.msra.mxu0 0.0
      %545 = vmatprep.subr.mxu0 0.0
      %546 = vmatpush2.msra.mxu0 0.0
      %547 = vmatprep.subr.mxu0 0.0
      %548 = vmatpush2.msra.mxu0 0.0
      %549 = vmatprep.subr.mxu0 0.0
      %550 = vmatpush2.msra.mxu0 0.0
      %551 = vmatprep.subr.mxu0 0.0
      %552 = vmatpush2.msra.mxu0 0.0
      %553 = vmatprep.subr.mxu0 0.0
      %554 = vmatpush2.msra.mxu0 0.0
      %555 = vmatprep.subr.mxu0 0.0
      %556 = vmatpush2.msra.mxu0 0.0
      %557 = vmatprep.subr.mxu0 0.0
      %558 = vmatpush2.msra.mxu0 0.0
      %559 = vmatprep.subr.mxu0 0.0
      %560 = vmatpush2.msra.mxu0 0.0
      %561 = vmatprep.subr.mxu0 0.0
      %562 = vmatpush2.msra.mxu0 0.0
      %563 = vmatprep.mubr.f32.mxu0 0.0
      %564 = vmatmul.mubr.f32.gmra.mxu0 %v413
      %v565 = vpop.f32.mrf.mxu0
      %v566 = vadd.f32 0.0, %v565
      %v567 = vpop.f32.mrf.mxu0
      %568 = vmatprep.mubr.f32.mxu0 0.0
      %569 = vmatmul.mubr.f32.gmra.mxu0 %v413
      %v570 = vpop.f32.mrf.mxu0
      %v571 = vadd.f32 0.0, %v570
      %v572 = vpop.f32.mrf.mxu0
      %573 = vmatprep.mubr.f32.mxu0 0.0
      %574 = vmatmul.mubr.f32.gmra.mxu0 %v413
      %v575 = vpop.f32.mrf.mxu0
      %v576 = vadd.f32 0.0, %v575
      %v577 = vpop.f32.mrf.mxu0
      %578 = vmatprep.mubr.f32.mxu0 0.0
      %579 = vmatmul.mubr.f32.gmra.mxu0 %v413
      %v580 = vpop.f32.mrf.mxu0
      %v581 = vadd.f32 0.0, %v580
      %v582 = vpop.f32.mrf.mxu0
      %583 = vmatprep.mubr.f32.mxu0 0.0
      %584 = vmatmul.mubr.f32.gmra.mxu0 %v416
      %v585 = vpop.f32.mrf.mxu0
      %v586 = vadd.f32 0.0, %v585
      %v587 = vpop.f32.mrf.mxu0
      %588 = vmatprep.mubr.f32.mxu0 0.0
      %589 = vmatmul.mubr.f32.gmra.mxu0 %v419
      %v590 = vpop.f32.mrf.mxu0
      %v591 = vadd.f32 0.0, %v590
      %v592 = vpop.f32.mrf.mxu0
      %593 = vmatprep.mubr.f32.mxu0 0.0
      %594 = vmatmul.mubr.f32.gmra.mxu0 %v422
      %v595 = vpop.f32.mrf.mxu0
      %v596 = vadd.f32 0.0, %v595
      %v597 = vpop.f32.mrf.mxu0
      %598 = vmatprep.mubr.f32.mxu0 0.0
      %599 = vmatmul.mubr.f32.gmra.mxu0 %v425
      %v600 = vpop.f32.mrf.mxu0
      %v601 = vadd.f32 0.0, %v600
      %v602 = vpop.f32.mrf.mxu0
      %603 = vmatprep.mubr.f32.mxu0 0.0
      %604 = vmatmul.mubr.f32.gmra.mxu0 %v428
      %v605 = vpop.f32.mrf.mxu0
      %v606 = vadd.f32 0.0, %v605
      %v607 = vpop.f32.mrf.mxu0
      %608 = vmatprep.mubr.f32.mxu0 0.0
      %609 = vmatmul.mubr.f32.gmra.mxu0 %v431
      %v610 = vpop.f32.mrf.mxu0
      %v611 = vadd.f32 0.0, %v610
      %v612 = vpop.f32.mrf.mxu0
      %613 = vmatprep.mubr.f32.mxu0 0.0
      %614 = vmatmul.mubr.f32.gmra.mxu0 %v434
      %v615 = vpop.f32.mrf.mxu0
      %v616 = vadd.f32 0.0, %v615
      %v617 = vpop.f32.mrf.mxu0
      %618 = vmatprep.mubr.f32.mxu0 0.0
      %619 = vmatmul.mubr.f32.gmra.mxu0 %v437
      %v620 = vpop.f32.mrf.mxu0
      %v621 = vadd.f32 0.0, %v620
      %v622 = vpop.f32.mrf.mxu0
      %623 = vmatprep.mubr.f32.mxu0 0.0
      %624 = vmatmul.mubr.f32.gmra.mxu0 %v440
      %v625 = vpop.f32.mrf.mxu0
      %v626 = vadd.f32 0.0, %v625
      %v627 = vpop.f32.mrf.mxu0
      %628 = vmatprep.mubr.f32.mxu0 0.0
      %629 = vmatmul.mubr.f32.gmra.mxu0 %v443
      %v630 = vpop.f32.mrf.mxu0
      %v631 = vadd.f32 0.0, %v630
      %v632 = vpop.f32.mrf.mxu0
      %633 = vmatprep.mubr.f32.mxu0 0.0
      %634 = vmatmul.mubr.f32.gmra.mxu0 %v446
      %v635 = vpop.f32.mrf.mxu0
      %v636 = vadd.f32 0.0, %v635
      %v637 = vpop.f32.mrf.mxu0
      %638 = vmatprep.mubr.f32.mxu0 0.0
      %639 = vmatmul.mubr.f32.gmra.mxu0 %v449
      %v640 = vpop.f32.mrf.mxu0
      %v641 = vadd.f32 0.0, %v640
      %v642 = vpop.f32.mrf.mxu0
      %643 = vmatprep.mubr.f32.mxu0 0.0
      %644 = vmatmul.mubr.f32.gmra.mxu0 %v452
      %v645 = vpop.f32.mrf.mxu0
      %v646 = vadd.f32 0.0, %v645
      %v647 = vpop.f32.mrf.mxu0
      %648 = vmatprep.mubr.f32.mxu0 0.0
      %649 = vmatmul.mubr.f32.gmra.mxu0 %v455
      %v650 = vpop.f32.mrf.mxu0
      %v651 = vadd.f32 0.0, %v650
      %v652 = vpop.f32.mrf.mxu0
      %653 = vmatprep.mubr.f32.mxu0 0.0
      %654 = vmatmul.mubr.f32.gmra.mxu0 %v458
      %v655 = vpop.f32.mrf.mxu0
      %v656 = vadd.f32 0.0, %v655
      %v657 = vpop.f32.mrf.mxu0
      %658 = vmatprep.mubr.f32.mxu0 0.0
      %659 = vmatmul.mubr.f32.gmra.mxu0 %v461
      %v660 = vpop.f32.mrf.mxu0
      %v661 = vadd.f32 0.0, %v660
      %v662 = vpop.f32.mrf.mxu0
      %663 = vmatprep.mubr.f32.mxu0 0.0
      %664 = vmatmul.mubr.f32.gmra.mxu0 %v464
      %v665 = vpop.f32.mrf.mxu0
      %v666 = vadd.f32 0.0, %v665
      %v667 = vpop.f32.mrf.mxu0
      %668 = vmatprep.mubr.f32.mxu0 0.0
      %669 = vmatmul.mubr.f32.gmra.mxu0 %v467
      %v670 = vpop.f32.mrf.mxu0
      %v671 = vadd.f32 0.0, %v670
      %v672 = vpop.f32.mrf.mxu0
      %673 = vmatprep.mubr.f32.mxu0 0.0
      %674 = vmatmul.mubr.f32.gmra.mxu0 %v470
      %v675 = vpop.f32.mrf.mxu0
      %v676 = vadd.f32 0.0, %v675
      %v677 = vpop.f32.mrf.mxu0
      %678 = vmatprep.mubr.f32.mxu0 0.0
      %679 = vmatmul.mubr.f32.gmra.mxu0 %v473
      %v680 = vpop.f32.mrf.mxu0
      %v681 = vadd.f32 0.0, %v680
      %v682 = vpop.f32.mrf.mxu0
      %683 = vmatprep.mubr.f32.mxu0 0.0
      %684 = vmatmul.mubr.f32.gmra.mxu0 %v476
      %v685 = vpop.f32.mrf.mxu0
      %v686 = vadd.f32 0.0, %v685
      %v687 = vpop.f32.mrf.mxu0
      %688 = vmatprep.mubr.f32.mxu0 0.0
      %689 = vmatmul.mubr.f32.gmra.mxu0 %v479
      %v690 = vpop.f32.mrf.mxu0
      %v691 = vadd.f32 0.0, %v690
      %v692 = vpop.f32.mrf.mxu0
      %693 = vmatprep.mubr.f32.mxu0 0.0
      %694 = vmatmul.mubr.f32.gmra.mxu0 %v482
      %v695 = vpop.f32.mrf.mxu0
      %v696 = vadd.f32 0.0, %v695
      %v697 = vpop.f32.mrf.mxu0
      %698 = vmatprep.mubr.f32.mxu0 0.0
      %699 = vmatmul.mubr.f32.gmra.mxu0 %v485
      %v700 = vpop.f32.mrf.mxu0
      %v701 = vadd.f32 0.0, %v700
      %v702 = vpop.f32.mrf.mxu0
      %703 = vmatprep.mubr.f32.mxu0 0.0
      %704 = vmatmul.mubr.f32.gmra.mxu0 %v488
      %v705 = vpop.f32.mrf.mxu0
      %v706 = vadd.f32 0.0, %v705
      %v707 = vpop.f32.mrf.mxu0
      %708 = vmatprep.mubr.f32.mxu0 0.0
      %709 = vmatmul.mubr.f32.gmra.mxu0 %v491
      %v710 = vpop.f32.mrf.mxu0
      %v711 = vadd.f32 0.0, %v710
      %v712 = vpop.f32.mrf.mxu0
      %713 = vmatprep.mubr.f32.mxu0 0.0
      %714 = vmatmul.mubr.f32.gmra.mxu0 %v494
      %v715 = vpop.f32.mrf.mxu0
      %v716 = vadd.f32 0.0, %v715
      %v717 = vpop.f32.mrf.mxu0
      %718 = vmatprep.mubr.f32.mxu0 0.0
      %719 = vmatmul.mubr.f32.gmra.mxu0 %v497
      %v720 = vpop.f32.mrf.mxu0
      %v721 = vadd.f32 0.0, %v720
      %v722 = vpop.f32.mrf.mxu0
      %723 = vdwg.mxu0
      %724 = vmatprep.subr.mxu0 0.0
      %725 = vmatpush1.msra.mxu0 0.0
      %726 = vmatprep.subr.mxu0 0.0
      %727 = vmatpush1.msra.mxu0 0.0
      %728 = vmatprep.subr.mxu0 0.0
      %729 = vmatpush1.msra.mxu0 0.0
      %730 = vmatprep.subr.mxu0 0.0
      %731 = vmatpush1.msra.mxu0 0.0
      %732 = vmatprep.subr.mxu0 0.0
      %733 = vmatpush1.msra.mxu0 0.0
      %734 = vmatprep.subr.mxu0 0.0
      %735 = vmatpush1.msra.mxu0 0.0
      %736 = vmatprep.subr.mxu0 0.0
      %737 = vmatpush1.msra.mxu0 0.0
      %738 = vmatprep.subr.mxu0 0.0
      %739 = vmatpush1.msra.mxu0 0.0
      %740 = vmatprep.subr.mxu0 0.0
      %741 = vmatpush1.msra.mxu0 0.0
      %742 = vmatprep.subr.mxu0 0.0
      %743 = vmatpush1.msra.mxu0 0.0
      %744 = vmatprep.subr.mxu0 0.0
      %745 = vmatpush1.msra.mxu0 0.0
      %746 = vmatprep.subr.mxu0 0.0
      %747 = vmatpush1.msra.mxu0 0.0
      %748 = vmatprep.subr.mxu0 0.0
      %749 = vmatpush1.msra.mxu0 0.0
      %750 = vmatprep.subr.mxu0 0.0
      %751 = vmatpush1.msra.mxu0 0.0
      %752 = vmatprep.subr.mxu0 0.0
      %753 = vmatpush1.msra.mxu0 0.0
      %754 = vmatprep.subr.mxu0 0.0
      %755 = vmatpush1.msra.mxu0 %v408
      %756 = vmatprep.subr.mxu0 0.0
      %757 = vmatpush2.msra.mxu0 0.0
      %758 = vmatprep.subr.mxu0 0.0
      %759 = vmatpush2.msra.mxu0 0.0
      %760 = vmatprep.subr.mxu0 0.0
      %761 = vmatpush2.msra.mxu0 0.0
      %762 = vmatprep.subr.mxu0 0.0
      %763 = vmatpush2.msra.mxu0 0.0
      %764 = vmatprep.subr.mxu0 0.0
      %765 = vmatpush2.msra.mxu0 0.0
      %766 = vmatprep.subr.mxu0 0.0
      %767 = vmatpush2.msra.mxu0 0.0
      %768 = vmatprep.subr.mxu0 0.0
      %769 = vmatpush2.msra.mxu0 0.0
      %770 = vmatprep.subr.mxu0 0.0
      %771 = vmatpush2.msra.mxu0 0.0
      %772 = vmatprep.subr.mxu0 0.0
      %773 = vmatpush2.msra.mxu0 0.0
      %774 = vmatprep.subr.mxu0 0.0
      %775 = vmatpush2.msra.mxu0 0.0
      %776 = vmatprep.subr.mxu0 0.0
      %777 = vmatpush2.msra.mxu0 0.0
      %778 = vmatprep.subr.mxu0 0.0
      %779 = vmatpush2.msra.mxu0 0.0
      %780 = vmatprep.subr.mxu0 0.0
      %781 = vmatpush2.msra.mxu0 0.0
      %782 = vmatprep.subr.mxu0 0.0
      %783 = vmatpush2.msra.mxu0 0.0
      %784 = vmatprep.subr.mxu0 0.0
      %785 = vmatpush2.msra.mxu0 0.0
      %786 = vmatprep.subr.mxu0 0.0
      %787 = vmatpush2.msra.mxu0 0.0
      %788 = vmatprep.mubr.f32.mxu0 0.0
      %789 = vmatmul.mubr.f32.gmra.mxu0 %v413
      %v790 = vpop.f32.mrf.mxu0
      %v791 = vadd.f32 %v566, %v790
      %v792 = vpop.f32.mrf.mxu0
      %793 = vmatprep.mubr.f32.mxu0 0.0
      %794 = vmatmul.mubr.f32.gmra.mxu0 %v413
      %v795 = vpop.f32.mrf.mxu0
      %v796 = vadd.f32 %v571, %v795
      %v797 = vpop.f32.mrf.mxu0
      %798 = vmatprep.mubr.f32.mxu0 0.0
      %799 = vmatmul.mubr.f32.gmra.mxu0 %v413
      %v800 = vpop.f32.mrf.mxu0
      %v801 = vadd.f32 %v576, %v800
      %v802 = vpop.f32.mrf.mxu0
      %803 = vmatprep.mubr.f32.mxu0 0.0
      %804 = vmatmul.mubr.f32.gmra.mxu0 %v413
      %v805 = vpop.f32.mrf.mxu0
      %v806 = vadd.f32 %v581, %v805
      %v807 = vpop.f32.mrf.mxu0
      %808 = vmatprep.mubr.f32.mxu0 0.0
      %809 = vmatmul.mubr.f32.gmra.mxu0 %v413
      %v810 = vpop.f32.mrf.mxu0
      %v811 = vadd.f32 %v586, %v810
      %v812 = vpop.f32.mrf.mxu0
      %813 = vmatprep.mubr.f32.mxu0 0.0
      %814 = vmatmul.mubr.f32.gmra.mxu0 %v413
      %v815 = vpop.f32.mrf.mxu0
      %v816 = vadd.f32 %v591, %v815
      %v817 = vpop.f32.mrf.mxu0
      %818 = vmatprep.mubr.f32.mxu0 0.0
      %819 = vmatmul.mubr.f32.gmra.mxu0 %v416
      %v820 = vpop.f32.mrf.mxu0
      %v821 = vadd.f32 %v596, %v820
      %v822 = vpop.f32.mrf.mxu0
      %823 = vmatprep.mubr.f32.mxu0 0.0
      %824 = vmatmul.mubr.f32.gmra.mxu0 %v419
      %v825 = vpop.f32.mrf.mxu0
      %v826 = vadd.f32 %v601, %v825
      %v827 = vpop.f32.mrf.mxu0
      %828 = vmatprep.mubr.f32.mxu0 0.0
      %829 = vmatmul.mubr.f32.gmra.mxu0 %v422
      %v830 = vpop.f32.mrf.mxu0
      %v831 = vadd.f32 %v606, %v830
      %v832 = vpop.f32.mrf.mxu0
      %833 = vmatprep.mubr.f32.mxu0 0.0
      %834 = vmatmul.mubr.f32.gmra.mxu0 %v425
      %v835 = vpop.f32.mrf.mxu0
      %v836 = vadd.f32 %v611, %v835
      %v837 = vpop.f32.mrf.mxu0
      %838 = vmatprep.mubr.f32.mxu0 0.0
      %839 = vmatmul.mubr.f32.gmra.mxu0 %v428
      %v840 = vpop.f32.mrf.mxu0
      %v841 = vadd.f32 %v616, %v840
      %v842 = vpop.f32.mrf.mxu0
      %843 = vmatprep.mubr.f32.mxu0 0.0
      %844 = vmatmul.mubr.f32.gmra.mxu0 %v431
      %v845 = vpop.f32.mrf.mxu0
      %v846 = vadd.f32 %v621, %v845
      %v847 = vpop.f32.mrf.mxu0
      %848 = vmatprep.mubr.f32.mxu0 0.0
      %849 = vmatmul.mubr.f32.gmra.mxu0 %v434
      %v850 = vpop.f32.mrf.mxu0
      %v851 = vadd.f32 %v626, %v850
      %v852 = vpop.f32.mrf.mxu0
      %853 = vmatprep.mubr.f32.mxu0 0.0
      %854 = vmatmul.mubr.f32.gmra.mxu0 %v437
      %v855 = vpop.f32.mrf.mxu0
      %v856 = vadd.f32 %v631, %v855
      %v857 = vpop.f32.mrf.mxu0
      %858 = vmatprep.mubr.f32.mxu0 0.0
      %859 = vmatmul.mubr.f32.gmra.mxu0 %v440
      %v860 = vpop.f32.mrf.mxu0
      %v861 = vadd.f32 %v636, %v860
      %v862 = vpop.f32.mrf.mxu0
      %863 = vmatprep.mubr.f32.mxu0 0.0
      %864 = vmatmul.mubr.f32.gmra.mxu0 %v443
      %v865 = vpop.f32.mrf.mxu0
      %v866 = vadd.f32 %v641, %v865
      %v867 = vpop.f32.mrf.mxu0
      %868 = vmatprep.mubr.f32.mxu0 0.0
      %869 = vmatmul.mubr.f32.gmra.mxu0 %v446
      %v870 = vpop.f32.mrf.mxu0
      %v871 = vadd.f32 %v646, %v870
      %v872 = vpop.f32.mrf.mxu0
      %873 = vmatprep.mubr.f32.mxu0 0.0
      %874 = vmatmul.mubr.f32.gmra.mxu0 %v449
      %v875 = vpop.f32.mrf.mxu0
      %v876 = vadd.f32 %v651, %v875
      %v877 = vpop.f32.mrf.mxu0
      %878 = vmatprep.mubr.f32.mxu0 0.0
      %879 = vmatmul.mubr.f32.gmra.mxu0 %v452
      %v880 = vpop.f32.mrf.mxu0
      %v881 = vadd.f32 %v656, %v880
      %v882 = vpop.f32.mrf.mxu0
      %883 = vmatprep.mubr.f32.mxu0 0.0
      %884 = vmatmul.mubr.f32.gmra.mxu0 %v455
      %v885 = vpop.f32.mrf.mxu0
      %v886 = vadd.f32 %v661, %v885
      %v887 = vpop.f32.mrf.mxu0
      %888 = vmatprep.mubr.f32.mxu0 0.0
      %889 = vmatmul.mubr.f32.gmra.mxu0 %v458
      %v890 = vpop.f32.mrf.mxu0
      %v891 = vadd.f32 %v666, %v890
      %v892 = vpop.f32.mrf.mxu0
      %893 = vmatprep.mubr.f32.mxu0 0.0
      %894 = vmatmul.mubr.f32.gmra.mxu0 %v461
      %v895 = vpop.f32.mrf.mxu0
      %v896 = vadd.f32 %v671, %v895
      %v897 = vpop.f32.mrf.mxu0
      %898 = vmatprep.mubr.f32.mxu0 0.0
      %899 = vmatmul.mubr.f32.gmra.mxu0 %v464
      %v900 = vpop.f32.mrf.mxu0
      %v901 = vadd.f32 %v676, %v900
      %v902 = vpop.f32.mrf.mxu0
      %903 = vmatprep.mubr.f32.mxu0 0.0
      %904 = vmatmul.mubr.f32.gmra.mxu0 %v467
      %v905 = vpop.f32.mrf.mxu0
      %v906 = vadd.f32 %v681, %v905
      %v907 = vpop.f32.mrf.mxu0
      %908 = vmatprep.mubr.f32.mxu0 0.0
      %909 = vmatmul.mubr.f32.gmra.mxu0 %v470
      %v910 = vpop.f32.mrf.mxu0
      %v911 = vadd.f32 %v686, %v910
      %v912 = vpop.f32.mrf.mxu0
      %913 = vmatprep.mubr.f32.mxu0 0.0
      %914 = vmatmul.mubr.f32.gmra.mxu0 %v473
      %v915 = vpop.f32.mrf.mxu0
      %v916 = vadd.f32 %v691, %v915
      %v917 = vpop.f32.mrf.mxu0
      %918 = vmatprep.mubr.f32.mxu0 0.0
      %919 = vmatmul.mubr.f32.gmra.mxu0 %v476
      %v920 = vpop.f32.mrf.mxu0
      %v921 = vadd.f32 %v696, %v920
      %v922 = vpop.f32.mrf.mxu0
      %923 = vmatprep.mubr.f32.mxu0 0.0
      %924 = vmatmul.mubr.f32.gmra.mxu0 %v479
      %v925 = vpop.f32.mrf.mxu0
      %v926 = vadd.f32 %v701, %v925
      %v927 = vpop.f32.mrf.mxu0
      %928 = vmatprep.mubr.f32.mxu0 0.0
      %929 = vmatmul.mubr.f32.gmra.mxu0 %v482
      %v930 = vpop.f32.mrf.mxu0
      %v931 = vadd.f32 %v706, %v930
      %v932 = vpop.f32.mrf.mxu0
      %933 = vmatprep.mubr.f32.mxu0 0.0
      %934 = vmatmul.mubr.f32.gmra.mxu0 %v485
      %v935 = vpop.f32.mrf.mxu0
      %v936 = vadd.f32 %v711, %v935
      %v937 = vpop.f32.mrf.mxu0
      %938 = vmatprep.mubr.f32.mxu0 0.0
      %939 = vmatmul.mubr.f32.gmra.mxu0 %v488
      %v940 = vpop.f32.mrf.mxu0
      %v941 = vadd.f32 %v716, %v940
      %v942 = vpop.f32.mrf.mxu0
      %943 = vmatprep.mubr.f32.mxu0 0.0
      %944 = vmatmul.mubr.f32.gmra.mxu0 %v491
      %v945 = vpop.f32.mrf.mxu0
      %v946 = vadd.f32 %v721, %v945
      %v947 = vpop.f32.mrf.mxu0
      %948 = vdwg.mxu0
      %s949 = scalar_lea.vmem %s3, 16
      %v950 = vld [vmem:[%s949] sm:$0xff]
      %v952 = vsel %vm411, %v404, 0
      %v955 = vsel %vm411, %v405, 0
      %957 = vmatprep.subr.mxu0 0.0
      %958 = vmatpush1.msra.mxu0 0.0
      %959 = vmatprep.subr.mxu0 0.0
      %960 = vmatpush1.msra.mxu0 0.0
      %961 = vmatprep.subr.mxu0 0.0
      %962 = vmatpush1.msra.mxu0 0.0
      %963 = vmatprep.subr.mxu0 0.0
      %964 = vmatpush1.msra.mxu0 0.0
      %965 = vmatprep.subr.mxu0 0.0
      %966 = vmatpush1.msra.mxu0 0.0
      %967 = vmatprep.subr.mxu0 0.0
      %968 = vmatpush1.msra.mxu0 0.0
      %969 = vmatprep.subr.mxu0 0.0
      %970 = vmatpush1.msra.mxu0 0.0
      %971 = vmatprep.subr.mxu0 0.0
      %972 = vmatpush1.msra.mxu0 0.0
      %973 = vmatprep.subr.mxu0 0.0
      %974 = vmatpush1.msra.mxu0 0.0
      %975 = vmatprep.subr.mxu0 0.0
      %976 = vmatpush1.msra.mxu0 0.0
      %977 = vmatprep.subr.mxu0 0.0
      %978 = vmatpush1.msra.mxu0 0.0
      %979 = vmatprep.subr.mxu0 0.0
      %980 = vmatpush1.msra.mxu0 0.0
      %981 = vmatprep.subr.mxu0 0.0
      %982 = vmatpush1.msra.mxu0 0.0
      %983 = vmatprep.subr.mxu0 0.0
      %984 = vmatpush1.msra.mxu0 0.0
      %985 = vmatprep.subr.mxu0 0.0
      %986 = vmatpush1.msra.mxu0 0.0
      %987 = vmatprep.subr.mxu0 0.0
      %988 = vmatpush1.msra.mxu0 %v950
      %989 = vmatprep.subr.mxu0 0.0
      %990 = vmatpush2.msra.mxu0 0.0
      %991 = vmatprep.subr.mxu0 0.0
      %992 = vmatpush2.msra.mxu0 0.0
      %993 = vmatprep.subr.mxu0 0.0
      %994 = vmatpush2.msra.mxu0 0.0
      %995 = vmatprep.subr.mxu0 0.0
      %996 = vmatpush2.msra.mxu0 0.0
      %997 = vmatprep.subr.mxu0 0.0
      %998 = vmatpush2.msra.mxu0 0.0
      %999 = vmatprep.subr.mxu0 0.0
      %1000 = vmatpush2.msra.mxu0 0.0
      %1001 = vmatprep.subr.mxu0 0.0
      %1002 = vmatpush2.msra.mxu0 0.0
      %1003 = vmatprep.subr.mxu0 0.0
      %1004 = vmatpush2.msra.mxu0 0.0
      %1005 = vmatprep.subr.mxu0 0.0
      %1006 = vmatpush2.msra.mxu0 0.0
      %1007 = vmatprep.subr.mxu0 0.0
      %1008 = vmatpush2.msra.mxu0 0.0
      %1009 = vmatprep.subr.mxu0 0.0
      %1010 = vmatpush2.msra.mxu0 0.0
      %1011 = vmatprep.subr.mxu0 0.0
      %1012 = vmatpush2.msra.mxu0 0.0
      %1013 = vmatprep.subr.mxu0 0.0
      %1014 = vmatpush2.msra.mxu0 0.0
      %1015 = vmatprep.subr.mxu0 0.0
      %1016 = vmatpush2.msra.mxu0 0.0
      %1017 = vmatprep.subr.mxu0 0.0
      %1018 = vmatpush2.msra.mxu0 0.0
      %1019 = vmatprep.subr.mxu0 0.0
      %1020 = vmatpush2.msra.mxu0 0.0
      %1021 = vmatprep.mubr.f32.mxu0 0.0
      %1022 = vmatmul.mubr.f32.gmra.mxu0 %v413
      %v1023 = vpop.f32.mrf.mxu0
      %v1024 = vadd.f32 0.0, %v1023
      %v1025 = vpop.f32.mrf.mxu0
      %1026 = vmatprep.mubr.f32.mxu0 0.0
      %1027 = vmatmul.mubr.f32.gmra.mxu0 %v413
      %v1028 = vpop.f32.mrf.mxu0
      %v1029 = vadd.f32 0.0, %v1028
      %v1030 = vpop.f32.mrf.mxu0
      %1031 = vmatprep.mubr.f32.mxu0 0.0
      %1032 = vmatmul.mubr.f32.gmra.mxu0 %v416
      %v1033 = vpop.f32.mrf.mxu0
      %v1034 = vadd.f32 0.0, %v1033
      %v1035 = vpop.f32.mrf.mxu0
      %1036 = vmatprep.mubr.f32.mxu0 0.0
      %1037 = vmatmul.mubr.f32.gmra.mxu0 %v419
      %v1038 = vpop.f32.mrf.mxu0
      %v1039 = vadd.f32 0.0, %v1038
      %v1040 = vpop.f32.mrf.mxu0
      %1041 = vmatprep.mubr.f32.mxu0 0.0
      %1042 = vmatmul.mubr.f32.gmra.mxu0 %v422
      %v1043 = vpop.f32.mrf.mxu0
      %v1044 = vadd.f32 0.0, %v1043
      %v1045 = vpop.f32.mrf.mxu0
      %1046 = vmatprep.mubr.f32.mxu0 0.0
      %1047 = vmatmul.mubr.f32.gmra.mxu0 %v425
      %v1048 = vpop.f32.mrf.mxu0
      %v1049 = vadd.f32 0.0, %v1048
      %v1050 = vpop.f32.mrf.mxu0
      %1051 = vmatprep.mubr.f32.mxu0 0.0
      %1052 = vmatmul.mubr.f32.gmra.mxu0 %v428
      %v1053 = vpop.f32.mrf.mxu0
      %v1054 = vadd.f32 0.0, %v1053
      %v1055 = vpop.f32.mrf.mxu0
      %1056 = vmatprep.mubr.f32.mxu0 0.0
      %1057 = vmatmul.mubr.f32.gmra.mxu0 %v431
      %v1058 = vpop.f32.mrf.mxu0
      %v1059 = vadd.f32 0.0, %v1058
      %v1060 = vpop.f32.mrf.mxu0
      %1061 = vmatprep.mubr.f32.mxu0 0.0
      %1062 = vmatmul.mubr.f32.gmra.mxu0 %v434
      %v1063 = vpop.f32.mrf.mxu0
      %v1064 = vadd.f32 0.0, %v1063
      %v1065 = vpop.f32.mrf.mxu0
      %1066 = vmatprep.mubr.f32.mxu0 0.0
      %1067 = vmatmul.mubr.f32.gmra.mxu0 %v437
      %v1068 = vpop.f32.mrf.mxu0
      %v1069 = vadd.f32 0.0, %v1068
      %v1070 = vpop.f32.mrf.mxu0
      %1071 = vmatprep.mubr.f32.mxu0 0.0
      %1072 = vmatmul.mubr.f32.gmra.mxu0 %v440
      %v1073 = vpop.f32.mrf.mxu0
      %v1074 = vadd.f32 0.0, %v1073
      %v1075 = vpop.f32.mrf.mxu0
      %1076 = vmatprep.mubr.f32.mxu0 0.0
      %1077 = vmatmul.mubr.f32.gmra.mxu0 %v443
      %v1078 = vpop.f32.mrf.mxu0
      %v1079 = vadd.f32 0.0, %v1078
      %v1080 = vpop.f32.mrf.mxu0
      %1081 = vmatprep.mubr.f32.mxu0 0.0
      %1082 = vmatmul.mubr.f32.gmra.mxu0 %v446
      %v1083 = vpop.f32.mrf.mxu0
      %v1084 = vadd.f32 0.0, %v1083
      %v1085 = vpop.f32.mrf.mxu0
      %1086 = vmatprep.mubr.f32.mxu0 0.0
      %1087 = vmatmul.mubr.f32.gmra.mxu0 %v449
      %v1088 = vpop.f32.mrf.mxu0
      %v1089 = vadd.f32 0.0, %v1088
      %v1090 = vpop.f32.mrf.mxu0
      %1091 = vmatprep.mubr.f32.mxu0 0.0
      %1092 = vmatmul.mubr.f32.gmra.mxu0 %v452
      %v1093 = vpop.f32.mrf.mxu0
      %v1094 = vadd.f32 0.0, %v1093
      %v1095 = vpop.f32.mrf.mxu0
      %1096 = vmatprep.mubr.f32.mxu0 0.0
      %1097 = vmatmul.mubr.f32.gmra.mxu0 %v455
      %v1098 = vpop.f32.mrf.mxu0
      %v1099 = vadd.f32 0.0, %v1098
      %v1100 = vpop.f32.mrf.mxu0
      %1101 = vmatprep.mubr.f32.mxu0 0.0
      %1102 = vmatmul.mubr.f32.gmra.mxu0 %v458
      %v1103 = vpop.f32.mrf.mxu0
      %v1104 = vadd.f32 0.0, %v1103
      %v1105 = vpop.f32.mrf.mxu0
      %1106 = vmatprep.mubr.f32.mxu0 0.0
      %1107 = vmatmul.mubr.f32.gmra.mxu0 %v461
      %v1108 = vpop.f32.mrf.mxu0
      %v1109 = vadd.f32 0.0, %v1108
      %v1110 = vpop.f32.mrf.mxu0
      %1111 = vmatprep.mubr.f32.mxu0 0.0
      %1112 = vmatmul.mubr.f32.gmra.mxu0 %v464
      %v1113 = vpop.f32.mrf.mxu0
      %v1114 = vadd.f32 0.0, %v1113
      %v1115 = vpop.f32.mrf.mxu0
      %1116 = vmatprep.mubr.f32.mxu0 0.0
      %1117 = vmatmul.mubr.f32.gmra.mxu0 %v467
      %v1118 = vpop.f32.mrf.mxu0
      %v1119 = vadd.f32 0.0, %v1118
      %v1120 = vpop.f32.mrf.mxu0
      %1121 = vmatprep.mubr.f32.mxu0 0.0
      %1122 = vmatmul.mubr.f32.gmra.mxu0 %v470
      %v1123 = vpop.f32.mrf.mxu0
      %v1124 = vadd.f32 0.0, %v1123
      %v1125 = vpop.f32.mrf.mxu0
      %1126 = vmatprep.mubr.f32.mxu0 0.0
      %1127 = vmatmul.mubr.f32.gmra.mxu0 %v473
      %v1128 = vpop.f32.mrf.mxu0
      %v1129 = vadd.f32 0.0, %v1128
      %v1130 = vpop.f32.mrf.mxu0
      %1131 = vmatprep.mubr.f32.mxu0 0.0
      %1132 = vmatmul.mubr.f32.gmra.mxu0 %v476
      %v1133 = vpop.f32.mrf.mxu0
      %v1134 = vadd.f32 0.0, %v1133
      %v1135 = vpop.f32.mrf.mxu0
      %1136 = vmatprep.mubr.f32.mxu0 0.0
      %1137 = vmatmul.mubr.f32.gmra.mxu0 %v479
      %v1138 = vpop.f32.mrf.mxu0
      %v1139 = vadd.f32 0.0, %v1138
      %v1140 = vpop.f32.mrf.mxu0
      %1141 = vmatprep.mubr.f32.mxu0 0.0
      %1142 = vmatmul.mubr.f32.gmra.mxu0 %v482
      %v1143 = vpop.f32.mrf.mxu0
      %v1144 = vadd.f32 0.0, %v1143
      %v1145 = vpop.f32.mrf.mxu0
      %1146 = vmatprep.mubr.f32.mxu0 0.0
      %1147 = vmatmul.mubr.f32.gmra.mxu0 %v485
      %v1148 = vpop.f32.mrf.mxu0
      %v1149 = vadd.f32 0.0, %v1148
      %v1150 = vpop.f32.mrf.mxu0
      %1151 = vmatprep.mubr.f32.mxu0 0.0
      %1152 = vmatmul.mubr.f32.gmra.mxu0 %v488
      %v1153 = vpop.f32.mrf.mxu0
      %v1154 = vadd.f32 0.0, %v1153
      %v1155 = vpop.f32.mrf.mxu0
      %1156 = vmatprep.mubr.f32.mxu0 0.0
      %1157 = vmatmul.mubr.f32.gmra.mxu0 %v491
      %v1158 = vpop.f32.mrf.mxu0
      %v1159 = vadd.f32 0.0, %v1158
      %v1160 = vpop.f32.mrf.mxu0
      %1161 = vmatprep.mubr.f32.mxu0 0.0
      %1162 = vmatmul.mubr.f32.gmra.mxu0 %v494
      %v1163 = vpop.f32.mrf.mxu0
      %v1164 = vadd.f32 0.0, %v1163
      %v1165 = vpop.f32.mrf.mxu0
      %1166 = vmatprep.mubr.f32.mxu0 0.0
      %1167 = vmatmul.mubr.f32.gmra.mxu0 %v497
      %v1168 = vpop.f32.mrf.mxu0
      %v1169 = vadd.f32 0.0, %v1168
      %v1170 = vpop.f32.mrf.mxu0
      %1171 = vmatprep.mubr.f32.mxu0 0.0
      %1172 = vmatmul.mubr.f32.gmra.mxu0 %v952
      %v1173 = vpop.f32.mrf.mxu0
      %v1174 = vadd.f32 0.0, %v1173
      %v1175 = vpop.f32.mrf.mxu0
      %1176 = vmatprep.mubr.f32.mxu0 0.0
      %1177 = vmatmul.mubr.f32.gmra.mxu0 %v955
      %v1178 = vpop.f32.mrf.mxu0
      %v1179 = vadd.f32 0.0, %v1178
      %v1180 = vpop.f32.mrf.mxu0
      %1181 = vdwg.mxu0
      %v1182 = vadd.f32 %v791, %v1024
      %v1183 = vadd.f32 %v796, %v1029
      %v1184 = vadd.f32 %v801, %v1034
      %v1185 = vadd.f32 %v806, %v1039
      %v1186 = vadd.f32 %v811, %v1044
      %v1187 = vadd.f32 %v816, %v1049
      %v1188 = vadd.f32 %v821, %v1054
      %v1189 = vadd.f32 %v826, %v1059
      %v1190 = vadd.f32 %v831, %v1064
      %v1191 = vadd.f32 %v836, %v1069
      %v1192 = vadd.f32 %v841, %v1074
      %v1193 = vadd.f32 %v846, %v1079
      %v1194 = vadd.f32 %v851, %v1084
      %v1195 = vadd.f32 %v856, %v1089
      %v1196 = vadd.f32 %v861, %v1094
      %v1197 = vadd.f32 %v866, %v1099
      %v1198 = vadd.f32 %v871, %v1104
      %v1199 = vadd.f32 %v876, %v1109
      %v1200 = vadd.f32 %v881, %v1114
      %v1201 = vadd.f32 %v886, %v1119
      %v1202 = vadd.f32 %v891, %v1124
      %v1203 = vadd.f32 %v896, %v1129
      %v1204 = vadd.f32 %v901, %v1134
      %v1205 = vadd.f32 %v906, %v1139
      %v1206 = vadd.f32 %v911, %v1144
      %v1207 = vadd.f32 %v916, %v1149
      %v1208 = vadd.f32 %v921, %v1154
      %v1209 = vadd.f32 %v926, %v1159
      %v1210 = vadd.f32 %v931, %v1164
      %v1211 = vadd.f32 %v936, %v1169
      %v1212 = vadd.f32 %v941, %v1174
      %v1213 = vadd.f32 %v946, %v1179
      %s1214 = scalar_lea.vmem %s3, 24
      %v1215 = vld [vmem:[%s1214] sm:$0xff]
      %v1217 = vsel %vm411, %v406, 0
      %v1220 = vsel %vm411, %v407, 0
      %1222 = vmatprep.subr.mxu0 0.0
      %1223 = vmatpush1.msra.mxu0 0.0
      %1224 = vmatprep.subr.mxu0 0.0
      %1225 = vmatpush1.msra.mxu0 0.0
      %1226 = vmatprep.subr.mxu0 0.0
      %1227 = vmatpush1.msra.mxu0 0.0
      %1228 = vmatprep.subr.mxu0 0.0
      %1229 = vmatpush1.msra.mxu0 0.0
      %1230 = vmatprep.subr.mxu0 0.0
      %1231 = vmatpush1.msra.mxu0 0.0
      %1232 = vmatprep.subr.mxu0 0.0
      %1233 = vmatpush1.msra.mxu0 0.0
      %1234 = vmatprep.subr.mxu0 0.0
      %1235 = vmatpush1.msra.mxu0 0.0
      %1236 = vmatprep.subr.mxu0 0.0
      %1237 = vmatpush1.msra.mxu0 0.0
      %1238 = vmatprep.subr.mxu0 0.0
      %1239 = vmatpush1.msra.mxu0 0.0
      %1240 = vmatprep.subr.mxu0 0.0
      %1241 = vmatpush1.msra.mxu0 0.0
      %1242 = vmatprep.subr.mxu0 0.0
      %1243 = vmatpush1.msra.mxu0 0.0
      %1244 = vmatprep.subr.mxu0 0.0
      %1245 = vmatpush1.msra.mxu0 0.0
      %1246 = vmatprep.subr.mxu0 0.0
      %1247 = vmatpush1.msra.mxu0 0.0
      %1248 = vmatprep.subr.mxu0 0.0
      %1249 = vmatpush1.msra.mxu0 0.0
      %1250 = vmatprep.subr.mxu0 0.0
      %1251 = vmatpush1.msra.mxu0 0.0
      %1252 = vmatprep.subr.mxu0 0.0
      %1253 = vmatpush1.msra.mxu0 %v1215
      %1254 = vmatprep.subr.mxu0 0.0
      %1255 = vmatpush2.msra.mxu0 0.0
      %1256 = vmatprep.subr.mxu0 0.0
      %1257 = vmatpush2.msra.mxu0 0.0
      %1258 = vmatprep.subr.mxu0 0.0
      %1259 = vmatpush2.msra.mxu0 0.0
      %1260 = vmatprep.subr.mxu0 0.0
      %1261 = vmatpush2.msra.mxu0 0.0
      %1262 = vmatprep.subr.mxu0 0.0
      %1263 = vmatpush2.msra.mxu0 0.0
      %1264 = vmatprep.subr.mxu0 0.0
      %1265 = vmatpush2.msra.mxu0 0.0
      %1266 = vmatprep.subr.mxu0 0.0
      %1267 = vmatpush2.msra.mxu0 0.0
      %1268 = vmatprep.subr.mxu0 0.0
      %1269 = vmatpush2.msra.mxu0 0.0
      %1270 = vmatprep.subr.mxu0 0.0
      %1271 = vmatpush2.msra.mxu0 0.0
      %1272 = vmatprep.subr.mxu0 0.0
      %1273 = vmatpush2.msra.mxu0 0.0
      %1274 = vmatprep.subr.mxu0 0.0
      %1275 = vmatpush2.msra.mxu0 0.0
      %1276 = vmatprep.subr.mxu0 0.0
      %1277 = vmatpush2.msra.mxu0 0.0
      %1278 = vmatprep.subr.mxu0 0.0
      %1279 = vmatpush2.msra.mxu0 0.0
      %1280 = vmatprep.subr.mxu0 0.0
      %1281 = vmatpush2.msra.mxu0 0.0
      %1282 = vmatprep.subr.mxu0 0.0
      %1283 = vmatpush2.msra.mxu0 0.0
      %1284 = vmatprep.subr.mxu0 0.0
      %1285 = vmatpush2.msra.mxu0 0.0
      %1286 = vmatprep.mubr.f32.mxu0 0.0
      %1287 = vmatmul.mubr.f32.gmra.mxu0 %v416
      %v1288 = vpop.f32.mrf.mxu0
      %v1289 = vadd.f32 0.0, %v1288
      %v1290 = vpop.f32.mrf.mxu0
      %1291 = vmatprep.mubr.f32.mxu0 0.0
      %1292 = vmatmul.mubr.f32.gmra.mxu0 %v419
      %v1293 = vpop.f32.mrf.mxu0
      %v1294 = vadd.f32 0.0, %v1293
      %v1295 = vpop.f32.mrf.mxu0
      %1296 = vmatprep.mubr.f32.mxu0 0.0
      %1297 = vmatmul.mubr.f32.gmra.mxu0 %v422
      %v1298 = vpop.f32.mrf.mxu0
      %v1299 = vadd.f32 0.0, %v1298
      %v1300 = vpop.f32.mrf.mxu0
      %1301 = vmatprep.mubr.f32.mxu0 0.0
      %1302 = vmatmul.mubr.f32.gmra.mxu0 %v425
      %v1303 = vpop.f32.mrf.mxu0
      %v1304 = vadd.f32 0.0, %v1303
      %v1305 = vpop.f32.mrf.mxu0
      %1306 = vmatprep.mubr.f32.mxu0 0.0
      %1307 = vmatmul.mubr.f32.gmra.mxu0 %v428
      %v1308 = vpop.f32.mrf.mxu0
      %v1309 = vadd.f32 0.0, %v1308
      %v1310 = vpop.f32.mrf.mxu0
      %1311 = vmatprep.mubr.f32.mxu0 0.0
      %1312 = vmatmul.mubr.f32.gmra.mxu0 %v431
      %v1313 = vpop.f32.mrf.mxu0
      %v1314 = vadd.f32 0.0, %v1313
      %v1315 = vpop.f32.mrf.mxu0
      %1316 = vmatprep.mubr.f32.mxu0 0.0
      %1317 = vmatmul.mubr.f32.gmra.mxu0 %v434
      %v1318 = vpop.f32.mrf.mxu0
      %v1319 = vadd.f32 0.0, %v1318
      %v1320 = vpop.f32.mrf.mxu0
      %1321 = vmatprep.mubr.f32.mxu0 0.0
      %1322 = vmatmul.mubr.f32.gmra.mxu0 %v437
      %v1323 = vpop.f32.mrf.mxu0
      %v1324 = vadd.f32 0.0, %v1323
      %v1325 = vpop.f32.mrf.mxu0
      %1326 = vmatprep.mubr.f32.mxu0 0.0
      %1327 = vmatmul.mubr.f32.gmra.mxu0 %v440
      %v1328 = vpop.f32.mrf.mxu0
      %v1329 = vadd.f32 0.0, %v1328
      %v1330 = vpop.f32.mrf.mxu0
      %1331 = vmatprep.mubr.f32.mxu0 0.0
      %1332 = vmatmul.mubr.f32.gmra.mxu0 %v443
      %v1333 = vpop.f32.mrf.mxu0
      %v1334 = vadd.f32 0.0, %v1333
      %v1335 = vpop.f32.mrf.mxu0
      %1336 = vmatprep.mubr.f32.mxu0 0.0
      %1337 = vmatmul.mubr.f32.gmra.mxu0 %v446
      %v1338 = vpop.f32.mrf.mxu0
      %v1339 = vadd.f32 0.0, %v1338
      %v1340 = vpop.f32.mrf.mxu0
      %1341 = vmatprep.mubr.f32.mxu0 0.0
      %1342 = vmatmul.mubr.f32.gmra.mxu0 %v449
      %v1343 = vpop.f32.mrf.mxu0
      %v1344 = vadd.f32 0.0, %v1343
      %v1345 = vpop.f32.mrf.mxu0
      %1346 = vmatprep.mubr.f32.mxu0 0.0
      %1347 = vmatmul.mubr.f32.gmra.mxu0 %v452
      %v1348 = vpop.f32.mrf.mxu0
      %v1349 = vadd.f32 0.0, %v1348
      %v1350 = vpop.f32.mrf.mxu0
      %1351 = vmatprep.mubr.f32.mxu0 0.0
      %1352 = vmatmul.mubr.f32.gmra.mxu0 %v455
      %v1353 = vpop.f32.mrf.mxu0
      %v1354 = vadd.f32 0.0, %v1353
      %v1355 = vpop.f32.mrf.mxu0
      %1356 = vmatprep.mubr.f32.mxu0 0.0
      %1357 = vmatmul.mubr.f32.gmra.mxu0 %v458
      %v1358 = vpop.f32.mrf.mxu0
      %v1359 = vadd.f32 0.0, %v1358
      %v1360 = vpop.f32.mrf.mxu0
      %1361 = vmatprep.mubr.f32.mxu0 0.0
      %1362 = vmatmul.mubr.f32.gmra.mxu0 %v461
      %v1363 = vpop.f32.mrf.mxu0
      %v1364 = vadd.f32 0.0, %v1363
      %v1365 = vpop.f32.mrf.mxu0
      %1366 = vmatprep.mubr.f32.mxu0 0.0
      %1367 = vmatmul.mubr.f32.gmra.mxu0 %v464
      %v1368 = vpop.f32.mrf.mxu0
      %v1369 = vadd.f32 0.0, %v1368
      %v1370 = vpop.f32.mrf.mxu0
      %1371 = vmatprep.mubr.f32.mxu0 0.0
      %1372 = vmatmul.mubr.f32.gmra.mxu0 %v467
      %v1373 = vpop.f32.mrf.mxu0
      %v1374 = vadd.f32 0.0, %v1373
      %v1375 = vpop.f32.mrf.mxu0
      %1376 = vmatprep.mubr.f32.mxu0 0.0
      %1377 = vmatmul.mubr.f32.gmra.mxu0 %v470
      %v1378 = vpop.f32.mrf.mxu0
      %v1379 = vadd.f32 0.0, %v1378
      %v1380 = vpop.f32.mrf.mxu0
      %1381 = vmatprep.mubr.f32.mxu0 0.0
      %1382 = vmatmul.mubr.f32.gmra.mxu0 %v473
      %v1383 = vpop.f32.mrf.mxu0
      %v1384 = vadd.f32 0.0, %v1383
      %v1385 = vpop.f32.mrf.mxu0
      %1386 = vmatprep.mubr.f32.mxu0 0.0
      %1387 = vmatmul.mubr.f32.gmra.mxu0 %v476
      %v1388 = vpop.f32.mrf.mxu0
      %v1389 = vadd.f32 0.0, %v1388
      %v1390 = vpop.f32.mrf.mxu0
      %1391 = vmatprep.mubr.f32.mxu0 0.0
      %1392 = vmatmul.mubr.f32.gmra.mxu0 %v479
      %v1393 = vpop.f32.mrf.mxu0
      %v1394 = vadd.f32 0.0, %v1393
      %v1395 = vpop.f32.mrf.mxu0
      %1396 = vmatprep.mubr.f32.mxu0 0.0
      %1397 = vmatmul.mubr.f32.gmra.mxu0 %v482
      %v1398 = vpop.f32.mrf.mxu0
      %v1399 = vadd.f32 0.0, %v1398
      %v1400 = vpop.f32.mrf.mxu0
      %1401 = vmatprep.mubr.f32.mxu0 0.0
      %1402 = vmatmul.mubr.f32.gmra.mxu0 %v485
      %v1403 = vpop.f32.mrf.mxu0
      %v1404 = vadd.f32 0.0, %v1403
      %v1405 = vpop.f32.mrf.mxu0
      %1406 = vmatprep.mubr.f32.mxu0 0.0
      %1407 = vmatmul.mubr.f32.gmra.mxu0 %v488
      %v1408 = vpop.f32.mrf.mxu0
      %v1409 = vadd.f32 0.0, %v1408
      %v1410 = vpop.f32.mrf.mxu0
      %1411 = vmatprep.mubr.f32.mxu0 0.0
      %1412 = vmatmul.mubr.f32.gmra.mxu0 %v491
      %v1413 = vpop.f32.mrf.mxu0
      %v1414 = vadd.f32 0.0, %v1413
      %v1415 = vpop.f32.mrf.mxu0
      %1416 = vmatprep.mubr.f32.mxu0 0.0
      %1417 = vmatmul.mubr.f32.gmra.mxu0 %v494
      %v1418 = vpop.f32.mrf.mxu0
      %v1419 = vadd.f32 0.0, %v1418
      %v1420 = vpop.f32.mrf.mxu0
      %1421 = vmatprep.mubr.f32.mxu0 0.0
      %1422 = vmatmul.mubr.f32.gmra.mxu0 %v497
      %v1423 = vpop.f32.mrf.mxu0
      %v1424 = vadd.f32 0.0, %v1423
      %v1425 = vpop.f32.mrf.mxu0
      %1426 = vmatprep.mubr.f32.mxu0 0.0
      %1427 = vmatmul.mubr.f32.gmra.mxu0 %v952
      %v1428 = vpop.f32.mrf.mxu0
      %v1429 = vadd.f32 0.0, %v1428
      %v1430 = vpop.f32.mrf.mxu0
      %1431 = vmatprep.mubr.f32.mxu0 0.0
      %1432 = vmatmul.mubr.f32.gmra.mxu0 %v955
      %v1433 = vpop.f32.mrf.mxu0
      %v1434 = vadd.f32 0.0, %v1433
      %v1435 = vpop.f32.mrf.mxu0
      %1436 = vmatprep.mubr.f32.mxu0 0.0
      %1437 = vmatmul.mubr.f32.gmra.mxu0 %v1217
      %v1438 = vpop.f32.mrf.mxu0
      %v1439 = vadd.f32 0.0, %v1438
      %v1440 = vpop.f32.mrf.mxu0
      %1441 = vmatprep.mubr.f32.mxu0 0.0
      %1442 = vmatmul.mubr.f32.gmra.mxu0 %v1220
      %v1443 = vpop.f32.mrf.mxu0
      %v1444 = vadd.f32 0.0, %v1443
      %v1445 = vpop.f32.mrf.mxu0
      %1446 = vdwg.mxu0
      %v1447 = vadd.f32 %v1182, %v1289
      %v1448 = vadd.f32 %v1183, %v1294
      %v1449 = vadd.f32 %v1184, %v1299
      %v1450 = vadd.f32 %v1185, %v1304
      %v1451 = vadd.f32 %v1186, %v1309
      %v1452 = vadd.f32 %v1187, %v1314
      %v1453 = vadd.f32 %v1188, %v1319
      %v1454 = vadd.f32 %v1189, %v1324
      %v1455 = vadd.f32 %v1190, %v1329
      %v1456 = vadd.f32 %v1191, %v1334
      %v1457 = vadd.f32 %v1192, %v1339
      %v1458 = vadd.f32 %v1193, %v1344
      %v1459 = vadd.f32 %v1194, %v1349
      %v1460 = vadd.f32 %v1195, %v1354
      %v1461 = vadd.f32 %v1196, %v1359
      %v1462 = vadd.f32 %v1197, %v1364
      %v1463 = vadd.f32 %v1198, %v1369
      %v1464 = vadd.f32 %v1199, %v1374
      %v1465 = vadd.f32 %v1200, %v1379
      %v1466 = vadd.f32 %v1201, %v1384
      %v1467 = vadd.f32 %v1202, %v1389
      %v1468 = vadd.f32 %v1203, %v1394
      %v1469 = vadd.f32 %v1204, %v1399
      %v1470 = vadd.f32 %v1205, %v1404
      %v1471 = vadd.f32 %v1206, %v1409
      %v1472 = vadd.f32 %v1207, %v1414
      %v1473 = vadd.f32 %v1208, %v1419
      %v1474 = vadd.f32 %v1209, %v1424
      %v1475 = vadd.f32 %v1210, %v1429
      %v1476 = vadd.f32 %v1211, %v1434
      %v1477 = vadd.f32 %v1212, %v1439
      %v1478 = vadd.f32 %v1213, %v1444
      %s1479 = scalar_lea.vmem %s3, 32
      %v1480 = vld [vmem:[%s1479] sm:$0xff]
      %1481 = vmatprep.subr.mxu0 0.0
      %1482 = vmatpush1.msra.mxu0 0.0
      %1483 = vmatprep.subr.mxu0 0.0
      %1484 = vmatpush1.msra.mxu0 0.0
      %1485 = vmatprep.subr.mxu0 0.0
      %1486 = vmatpush1.msra.mxu0 0.0
      %1487 = vmatprep.subr.mxu0 0.0
      %1488 = vmatpush1.msra.mxu0 0.0
      %1489 = vmatprep.subr.mxu0 0.0
      %1490 = vmatpush1.msra.mxu0 0.0
      %1491 = vmatprep.subr.mxu0 0.0
      %1492 = vmatpush1.msra.mxu0 0.0
      %1493 = vmatprep.subr.mxu0 0.0
      %1494 = vmatpush1.msra.mxu0 0.0
      %1495 = vmatprep.subr.mxu0 0.0
      %1496 = vmatpush1.msra.mxu0 0.0
      %1497 = vmatprep.subr.mxu0 0.0
      %1498 = vmatpush1.msra.mxu0 0.0
      %1499 = vmatprep.subr.mxu0 0.0
      %1500 = vmatpush1.msra.mxu0 0.0
      %1501 = vmatprep.subr.mxu0 0.0
      %1502 = vmatpush1.msra.mxu0 0.0
      %1503 = vmatprep.subr.mxu0 0.0
      %1504 = vmatpush1.msra.mxu0 0.0
      %1505 = vmatprep.subr.mxu0 0.0
      %1506 = vmatpush1.msra.mxu0 0.0
      %1507 = vmatprep.subr.mxu0 0.0
      %1508 = vmatpush1.msra.mxu0 0.0
      %1509 = vmatprep.subr.mxu0 0.0
      %1510 = vmatpush1.msra.mxu0 0.0
      %1511 = vmatprep.subr.mxu0 0.0
      %1512 = vmatpush1.msra.mxu0 %v1480
      %1513 = vmatprep.subr.mxu0 0.0
      %1514 = vmatpush2.msra.mxu0 0.0
      %1515 = vmatprep.subr.mxu0 0.0
      %1516 = vmatpush2.msra.mxu0 0.0
      %1517 = vmatprep.subr.mxu0 0.0
      %1518 = vmatpush2.msra.mxu0 0.0
      %1519 = vmatprep.subr.mxu0 0.0
      %1520 = vmatpush2.msra.mxu0 0.0
      %1521 = vmatprep.subr.mxu0 0.0
      %1522 = vmatpush2.msra.mxu0 0.0
      %1523 = vmatprep.subr.mxu0 0.0
      %1524 = vmatpush2.msra.mxu0 0.0
      %1525 = vmatprep.subr.mxu0 0.0
      %1526 = vmatpush2.msra.mxu0 0.0
      %1527 = vmatprep.subr.mxu0 0.0
      %1528 = vmatpush2.msra.mxu0 0.0
      %1529 = vmatprep.subr.mxu0 0.0
      %1530 = vmatpush2.msra.mxu0 0.0
      %1531 = vmatprep.subr.mxu0 0.0
      %1532 = vmatpush2.msra.mxu0 0.0
      %1533 = vmatprep.subr.mxu0 0.0
      %1534 = vmatpush2.msra.mxu0 0.0
      %1535 = vmatprep.subr.mxu0 0.0
      %1536 = vmatpush2.msra.mxu0 0.0
      %1537 = vmatprep.subr.mxu0 0.0
      %1538 = vmatpush2.msra.mxu0 0.0
      %1539 = vmatprep.subr.mxu0 0.0
      %1540 = vmatpush2.msra.mxu0 0.0
      %1541 = vmatprep.subr.mxu0 0.0
      %1542 = vmatpush2.msra.mxu0 0.0
      %1543 = vmatprep.subr.mxu0 0.0
      %1544 = vmatpush2.msra.mxu0 0.0
      %1545 = vmatprep.mubr.f32.mxu0 0.0
      %1546 = vmatmul.mubr.f32.gmra.mxu0 %v422
      %v1547 = vpop.f32.mrf.mxu0
      %v1548 = vadd.f32 0.0, %v1547
      %v1549 = vpop.f32.mrf.mxu0
      %1550 = vmatprep.mubr.f32.mxu0 0.0
      %1551 = vmatmul.mubr.f32.gmra.mxu0 %v425
      %v1552 = vpop.f32.mrf.mxu0
      %v1553 = vadd.f32 0.0, %v1552
      %v1554 = vpop.f32.mrf.mxu0
      %1555 = vmatprep.mubr.f32.mxu0 0.0
      %1556 = vmatmul.mubr.f32.gmra.mxu0 %v428
      %v1557 = vpop.f32.mrf.mxu0
      %v1558 = vadd.f32 0.0, %v1557
      %v1559 = vpop.f32.mrf.mxu0
      %1560 = vmatprep.mubr.f32.mxu0 0.0
      %1561 = vmatmul.mubr.f32.gmra.mxu0 %v431
      %v1562 = vpop.f32.mrf.mxu0
      %v1563 = vadd.f32 0.0, %v1562
      %v1564 = vpop.f32.mrf.mxu0
      %1565 = vmatprep.mubr.f32.mxu0 0.0
      %1566 = vmatmul.mubr.f32.gmra.mxu0 %v434
      %v1567 = vpop.f32.mrf.mxu0
      %v1568 = vadd.f32 0.0, %v1567
      %v1569 = vpop.f32.mrf.mxu0
      %1570 = vmatprep.mubr.f32.mxu0 0.0
      %1571 = vmatmul.mubr.f32.gmra.mxu0 %v437
      %v1572 = vpop.f32.mrf.mxu0
      %v1573 = vadd.f32 0.0, %v1572
      %v1574 = vpop.f32.mrf.mxu0
      %1575 = vmatprep.mubr.f32.mxu0 0.0
      %1576 = vmatmul.mubr.f32.gmra.mxu0 %v440
      %v1577 = vpop.f32.mrf.mxu0
      %v1578 = vadd.f32 0.0, %v1577
      %v1579 = vpop.f32.mrf.mxu0
      %1580 = vmatprep.mubr.f32.mxu0 0.0
      %1581 = vmatmul.mubr.f32.gmra.mxu0 %v443
      %v1582 = vpop.f32.mrf.mxu0
      %v1583 = vadd.f32 0.0, %v1582
      %v1584 = vpop.f32.mrf.mxu0
      %1585 = vmatprep.mubr.f32.mxu0 0.0
      %1586 = vmatmul.mubr.f32.gmra.mxu0 %v446
      %v1587 = vpop.f32.mrf.mxu0
      %v1588 = vadd.f32 0.0, %v1587
      %v1589 = vpop.f32.mrf.mxu0
      %1590 = vmatprep.mubr.f32.mxu0 0.0
      %1591 = vmatmul.mubr.f32.gmra.mxu0 %v449
      %v1592 = vpop.f32.mrf.mxu0
      %v1593 = vadd.f32 0.0, %v1592
      %v1594 = vpop.f32.mrf.mxu0
      %1595 = vmatprep.mubr.f32.mxu0 0.0
      %1596 = vmatmul.mubr.f32.gmra.mxu0 %v452
      %v1597 = vpop.f32.mrf.mxu0
      %v1598 = vadd.f32 0.0, %v1597
      %v1599 = vpop.f32.mrf.mxu0
      %1600 = vmatprep.mubr.f32.mxu0 0.0
      %1601 = vmatmul.mubr.f32.gmra.mxu0 %v455
      %v1602 = vpop.f32.mrf.mxu0
      %v1603 = vadd.f32 0.0, %v1602
      %v1604 = vpop.f32.mrf.mxu0
      %1605 = vmatprep.mubr.f32.mxu0 0.0
      %1606 = vmatmul.mubr.f32.gmra.mxu0 %v458
      %v1607 = vpop.f32.mrf.mxu0
      %v1608 = vadd.f32 0.0, %v1607
      %v1609 = vpop.f32.mrf.mxu0
      %1610 = vmatprep.mubr.f32.mxu0 0.0
      %1611 = vmatmul.mubr.f32.gmra.mxu0 %v461
      %v1612 = vpop.f32.mrf.mxu0
      %v1613 = vadd.f32 0.0, %v1612
      %v1614 = vpop.f32.mrf.mxu0
      %1615 = vmatprep.mubr.f32.mxu0 0.0
      %1616 = vmatmul.mubr.f32.gmra.mxu0 %v464
      %v1617 = vpop.f32.mrf.mxu0
      %v1618 = vadd.f32 0.0, %v1617
      %v1619 = vpop.f32.mrf.mxu0
      %1620 = vmatprep.mubr.f32.mxu0 0.0
      %1621 = vmatmul.mubr.f32.gmra.mxu0 %v467
      %v1622 = vpop.f32.mrf.mxu0
      %v1623 = vadd.f32 0.0, %v1622
      %v1624 = vpop.f32.mrf.mxu0
      %1625 = vmatprep.mubr.f32.mxu0 0.0
      %1626 = vmatmul.mubr.f32.gmra.mxu0 %v470
      %v1627 = vpop.f32.mrf.mxu0
      %v1628 = vadd.f32 0.0, %v1627
      %v1629 = vpop.f32.mrf.mxu0
      %1630 = vmatprep.mubr.f32.mxu0 0.0
      %1631 = vmatmul.mubr.f32.gmra.mxu0 %v473
      %v1632 = vpop.f32.mrf.mxu0
      %v1633 = vadd.f32 0.0, %v1632
      %v1634 = vpop.f32.mrf.mxu0
      %1635 = vmatprep.mubr.f32.mxu0 0.0
      %1636 = vmatmul.mubr.f32.gmra.mxu0 %v476
      %v1637 = vpop.f32.mrf.mxu0
      %v1638 = vadd.f32 0.0, %v1637
      %v1639 = vpop.f32.mrf.mxu0
      %1640 = vmatprep.mubr.f32.mxu0 0.0
      %1641 = vmatmul.mubr.f32.gmra.mxu0 %v479
      %v1642 = vpop.f32.mrf.mxu0
      %v1643 = vadd.f32 0.0, %v1642
      %v1644 = vpop.f32.mrf.mxu0
      %1645 = vmatprep.mubr.f32.mxu0 0.0
      %1646 = vmatmul.mubr.f32.gmra.mxu0 %v482
      %v1647 = vpop.f32.mrf.mxu0
      %v1648 = vadd.f32 0.0, %v1647
      %v1649 = vpop.f32.mrf.mxu0
      %1650 = vmatprep.mubr.f32.mxu0 0.0
      %1651 = vmatmul.mubr.f32.gmra.mxu0 %v485
      %v1652 = vpop.f32.mrf.mxu0
      %v1653 = vadd.f32 0.0, %v1652
      %v1654 = vpop.f32.mrf.mxu0
      %1655 = vmatprep.mubr.f32.mxu0 0.0
      %1656 = vmatmul.mubr.f32.gmra.mxu0 %v488
      %v1657 = vpop.f32.mrf.mxu0
      %v1658 = vadd.f32 0.0, %v1657
      %v1659 = vpop.f32.mrf.mxu0
      %1660 = vmatprep.mubr.f32.mxu0 0.0
      %1661 = vmatmul.mubr.f32.gmra.mxu0 %v491
      %v1662 = vpop.f32.mrf.mxu0
      %v1663 = vadd.f32 0.0, %v1662
      %v1664 = vpop.f32.mrf.mxu0
      %1665 = vmatprep.mubr.f32.mxu0 0.0
      %1666 = vmatmul.mubr.f32.gmra.mxu0 %v494
      %v1667 = vpop.f32.mrf.mxu0
      %v1668 = vadd.f32 0.0, %v1667
      %v1669 = vpop.f32.mrf.mxu0
      %1670 = vmatprep.mubr.f32.mxu0 0.0
      %1671 = vmatmul.mubr.f32.gmra.mxu0 %v497
      %v1672 = vpop.f32.mrf.mxu0
      %v1673 = vadd.f32 0.0, %v1672
      %v1674 = vpop.f32.mrf.mxu0
      %1675 = vmatprep.mubr.f32.mxu0 0.0
      %1676 = vmatmul.mubr.f32.gmra.mxu0 %v952
      %v1677 = vpop.f32.mrf.mxu0
      %v1678 = vadd.f32 0.0, %v1677
      %v1679 = vpop.f32.mrf.mxu0
      %1680 = vmatprep.mubr.f32.mxu0 0.0
      %1681 = vmatmul.mubr.f32.gmra.mxu0 %v955
      %v1682 = vpop.f32.mrf.mxu0
      %v1683 = vadd.f32 0.0, %v1682
      %v1684 = vpop.f32.mrf.mxu0
      %1685 = vmatprep.mubr.f32.mxu0 0.0
      %1686 = vmatmul.mubr.f32.gmra.mxu0 %v1217
      %v1687 = vpop.f32.mrf.mxu0
      %v1688 = vadd.f32 0.0, %v1687
      %v1689 = vpop.f32.mrf.mxu0
      %1690 = vmatprep.mubr.f32.mxu0 0.0
      %1691 = vmatmul.mubr.f32.gmra.mxu0 %v1220
      %v1692 = vpop.f32.mrf.mxu0
      %v1693 = vadd.f32 0.0, %v1692
      %v1694 = vpop.f32.mrf.mxu0
      %1695 = vmatprep.mubr.f32.mxu0 0.0
      %1696 = vmatmul.mubr.f32.gmra.mxu0 %v413
      %v1697 = vpop.f32.mrf.mxu0
      %v1698 = vadd.f32 0.0, %v1697
      %v1699 = vpop.f32.mrf.mxu0
      %1700 = vmatprep.mubr.f32.mxu0 0.0
      %1701 = vmatmul.mubr.f32.gmra.mxu0 %v413
      %v1702 = vpop.f32.mrf.mxu0
      %v1703 = vadd.f32 0.0, %v1702
      %v1704 = vpop.f32.mrf.mxu0
      %1705 = vdwg.mxu0
      %v1706 = vadd.f32 %v1447, %v1548
      %v1707 = vadd.f32 %v1448, %v1553
      %v1708 = vadd.f32 %v1449, %v1558
      %v1709 = vadd.f32 %v1450, %v1563
      %v1710 = vadd.f32 %v1451, %v1568
      %v1711 = vadd.f32 %v1452, %v1573
      %v1712 = vadd.f32 %v1453, %v1578
      %v1713 = vadd.f32 %v1454, %v1583
      %v1714 = vadd.f32 %v1455, %v1588
      %v1715 = vadd.f32 %v1456, %v1593
      %v1716 = vadd.f32 %v1457, %v1598
      %v1717 = vadd.f32 %v1458, %v1603
      %v1718 = vadd.f32 %v1459, %v1608
      %v1719 = vadd.f32 %v1460, %v1613
      %v1720 = vadd.f32 %v1461, %v1618
      %v1721 = vadd.f32 %v1462, %v1623
      %v1722 = vadd.f32 %v1463, %v1628
      %v1723 = vadd.f32 %v1464, %v1633
      %v1724 = vadd.f32 %v1465, %v1638
      %v1725 = vadd.f32 %v1466, %v1643
      %v1726 = vadd.f32 %v1467, %v1648
      %v1727 = vadd.f32 %v1468, %v1653
      %v1728 = vadd.f32 %v1469, %v1658
      %v1729 = vadd.f32 %v1470, %v1663
      %v1730 = vadd.f32 %v1471, %v1668
      %v1731 = vadd.f32 %v1472, %v1673
      %v1732 = vadd.f32 %v1473, %v1678
      %v1733 = vadd.f32 %v1474, %v1683
      %v1734 = vadd.f32 %v1475, %v1688
      %v1735 = vadd.f32 %v1476, %v1693
      %v1736 = vadd.f32 %v1477, %v1698
      %v1737 = vadd.f32 %v1478, %v1703
      %s1738 = scalar_lea.vmem %s3, 40
      %v1739 = vld [vmem:[%s1738] sm:$0xff]
      %1740 = vmatprep.subr.mxu0 0.0
      %1741 = vmatpush1.msra.mxu0 0.0
      %1742 = vmatprep.subr.mxu0 0.0
      %1743 = vmatpush1.msra.mxu0 0.0
      %1744 = vmatprep.subr.mxu0 0.0
      %1745 = vmatpush1.msra.mxu0 0.0
      %1746 = vmatprep.subr.mxu0 0.0
      %1747 = vmatpush1.msra.mxu0 0.0
      %1748 = vmatprep.subr.mxu0 0.0
      %1749 = vmatpush1.msra.mxu0 0.0
      %1750 = vmatprep.subr.mxu0 0.0
      %1751 = vmatpush1.msra.mxu0 0.0
      %1752 = vmatprep.subr.mxu0 0.0
      %1753 = vmatpush1.msra.mxu0 0.0
      %1754 = vmatprep.subr.mxu0 0.0
      %1755 = vmatpush1.msra.mxu0 0.0
      %1756 = vmatprep.subr.mxu0 0.0
      %1757 = vmatpush1.msra.mxu0 0.0
      %1758 = vmatprep.subr.mxu0 0.0
      %1759 = vmatpush1.msra.mxu0 0.0
      %1760 = vmatprep.subr.mxu0 0.0
      %1761 = vmatpush1.msra.mxu0 0.0
      %1762 = vmatprep.subr.mxu0 0.0
      %1763 = vmatpush1.msra.mxu0 0.0
      %1764 = vmatprep.subr.mxu0 0.0
      %1765 = vmatpush1.msra.mxu0 0.0
      %1766 = vmatprep.subr.mxu0 0.0
      %1767 = vmatpush1.msra.mxu0 0.0
      %1768 = vmatprep.subr.mxu0 0.0
      %1769 = vmatpush1.msra.mxu0 0.0
      %1770 = vmatprep.subr.mxu0 0.0
      %1771 = vmatpush1.msra.mxu0 %v1739
      %1772 = vmatprep.subr.mxu0 0.0
      %1773 = vmatpush2.msra.mxu0 0.0
      %1774 = vmatprep.subr.mxu0 0.0
      %1775 = vmatpush2.msra.mxu0 0.0
      %1776 = vmatprep.subr.mxu0 0.0
      %1777 = vmatpush2.msra.mxu0 0.0
      %1778 = vmatprep.subr.mxu0 0.0
      %1779 = vmatpush2.msra.mxu0 0.0
      %1780 = vmatprep.subr.mxu0 0.0
      %1781 = vmatpush2.msra.mxu0 0.0
      %1782 = vmatprep.subr.mxu0 0.0
      %1783 = vmatpush2.msra.mxu0 0.0
      %1784 = vmatprep.subr.mxu0 0.0
      %1785 = vmatpush2.msra.mxu0 0.0
      %1786 = vmatprep.subr.mxu0 0.0
      %1787 = vmatpush2.msra.mxu0 0.0
      %1788 = vmatprep.subr.mxu0 0.0
      %1789 = vmatpush2.msra.mxu0 0.0
      %1790 = vmatprep.subr.mxu0 0.0
      %1791 = vmatpush2.msra.mxu0 0.0
      %1792 = vmatprep.subr.mxu0 0.0
      %1793 = vmatpush2.msra.mxu0 0.0
      %1794 = vmatprep.subr.mxu0 0.0
      %1795 = vmatpush2.msra.mxu0 0.0
      %1796 = vmatprep.subr.mxu0 0.0
      %1797 = vmatpush2.msra.mxu0 0.0
      %1798 = vmatprep.subr.mxu0 0.0
      %1799 = vmatpush2.msra.mxu0 0.0
      %1800 = vmatprep.subr.mxu0 0.0
      %1801 = vmatpush2.msra.mxu0 0.0
      %1802 = vmatprep.subr.mxu0 0.0
      %1803 = vmatpush2.msra.mxu0 0.0
      %1804 = vmatprep.mubr.f32.mxu0 0.0
      %1805 = vmatmul.mubr.f32.gmra.mxu0 %v428
      %v1806 = vpop.f32.mrf.mxu0
      %v1807 = vadd.f32 0.0, %v1806
      %v1808 = vpop.f32.mrf.mxu0
      %1809 = vmatprep.mubr.f32.mxu0 0.0
      %1810 = vmatmul.mubr.f32.gmra.mxu0 %v431
      %v1811 = vpop.f32.mrf.mxu0
      %v1812 = vadd.f32 0.0, %v1811
      %v1813 = vpop.f32.mrf.mxu0
      %1814 = vmatprep.mubr.f32.mxu0 0.0
      %1815 = vmatmul.mubr.f32.gmra.mxu0 %v434
      %v1816 = vpop.f32.mrf.mxu0
      %v1817 = vadd.f32 0.0, %v1816
      %v1818 = vpop.f32.mrf.mxu0
      %1819 = vmatprep.mubr.f32.mxu0 0.0
      %1820 = vmatmul.mubr.f32.gmra.mxu0 %v437
      %v1821 = vpop.f32.mrf.mxu0
      %v1822 = vadd.f32 0.0, %v1821
      %v1823 = vpop.f32.mrf.mxu0
      %1824 = vmatprep.mubr.f32.mxu0 0.0
      %1825 = vmatmul.mubr.f32.gmra.mxu0 %v440
      %v1826 = vpop.f32.mrf.mxu0
      %v1827 = vadd.f32 0.0, %v1826
      %v1828 = vpop.f32.mrf.mxu0
      %1829 = vmatprep.mubr.f32.mxu0 0.0
      %1830 = vmatmul.mubr.f32.gmra.mxu0 %v443
      %v1831 = vpop.f32.mrf.mxu0
      %v1832 = vadd.f32 0.0, %v1831
      %v1833 = vpop.f32.mrf.mxu0
      %1834 = vmatprep.mubr.f32.mxu0 0.0
      %1835 = vmatmul.mubr.f32.gmra.mxu0 %v446
      %v1836 = vpop.f32.mrf.mxu0
      %v1837 = vadd.f32 0.0, %v1836
      %v1838 = vpop.f32.mrf.mxu0
      %1839 = vmatprep.mubr.f32.mxu0 0.0
      %1840 = vmatmul.mubr.f32.gmra.mxu0 %v449
      %v1841 = vpop.f32.mrf.mxu0
      %v1842 = vadd.f32 0.0, %v1841
      %v1843 = vpop.f32.mrf.mxu0
      %1844 = vmatprep.mubr.f32.mxu0 0.0
      %1845 = vmatmul.mubr.f32.gmra.mxu0 %v452
      %v1846 = vpop.f32.mrf.mxu0
      %v1847 = vadd.f32 0.0, %v1846
      %v1848 = vpop.f32.mrf.mxu0
      %1849 = vmatprep.mubr.f32.mxu0 0.0
      %1850 = vmatmul.mubr.f32.gmra.mxu0 %v455
      %v1851 = vpop.f32.mrf.mxu0
      %v1852 = vadd.f32 0.0, %v1851
      %v1853 = vpop.f32.mrf.mxu0
      %1854 = vmatprep.mubr.f32.mxu0 0.0
      %1855 = vmatmul.mubr.f32.gmra.mxu0 %v458
      %v1856 = vpop.f32.mrf.mxu0
      %v1857 = vadd.f32 0.0, %v1856
      %v1858 = vpop.f32.mrf.mxu0
      %1859 = vmatprep.mubr.f32.mxu0 0.0
      %1860 = vmatmul.mubr.f32.gmra.mxu0 %v461
      %v1861 = vpop.f32.mrf.mxu0
      %v1862 = vadd.f32 0.0, %v1861
      %v1863 = vpop.f32.mrf.mxu0
      %1864 = vmatprep.mubr.f32.mxu0 0.0
      %1865 = vmatmul.mubr.f32.gmra.mxu0 %v464
      %v1866 = vpop.f32.mrf.mxu0
      %v1867 = vadd.f32 0.0, %v1866
      %v1868 = vpop.f32.mrf.mxu0
      %1869 = vmatprep.mubr.f32.mxu0 0.0
      %1870 = vmatmul.mubr.f32.gmra.mxu0 %v467
      %v1871 = vpop.f32.mrf.mxu0
      %v1872 = vadd.f32 0.0, %v1871
      %v1873 = vpop.f32.mrf.mxu0
      %1874 = vmatprep.mubr.f32.mxu0 0.0
      %1875 = vmatmul.mubr.f32.gmra.mxu0 %v470
      %v1876 = vpop.f32.mrf.mxu0
      %v1877 = vadd.f32 0.0, %v1876
      %v1878 = vpop.f32.mrf.mxu0
      %1879 = vmatprep.mubr.f32.mxu0 0.0
      %1880 = vmatmul.mubr.f32.gmra.mxu0 %v473
      %v1881 = vpop.f32.mrf.mxu0
      %v1882 = vadd.f32 0.0, %v1881
      %v1883 = vpop.f32.mrf.mxu0
      %1884 = vmatprep.mubr.f32.mxu0 0.0
      %1885 = vmatmul.mubr.f32.gmra.mxu0 %v476
      %v1886 = vpop.f32.mrf.mxu0
      %v1887 = vadd.f32 0.0, %v1886
      %v1888 = vpop.f32.mrf.mxu0
      %1889 = vmatprep.mubr.f32.mxu0 0.0
      %1890 = vmatmul.mubr.f32.gmra.mxu0 %v479
      %v1891 = vpop.f32.mrf.mxu0
      %v1892 = vadd.f32 0.0, %v1891
      %v1893 = vpop.f32.mrf.mxu0
      %1894 = vmatprep.mubr.f32.mxu0 0.0
      %1895 = vmatmul.mubr.f32.gmra.mxu0 %v482
      %v1896 = vpop.f32.mrf.mxu0
      %v1897 = vadd.f32 0.0, %v1896
      %v1898 = vpop.f32.mrf.mxu0
      %1899 = vmatprep.mubr.f32.mxu0 0.0
      %1900 = vmatmul.mubr.f32.gmra.mxu0 %v485
      %v1901 = vpop.f32.mrf.mxu0
      %v1902 = vadd.f32 0.0, %v1901
      %v1903 = vpop.f32.mrf.mxu0
      %1904 = vmatprep.mubr.f32.mxu0 0.0
      %1905 = vmatmul.mubr.f32.gmra.mxu0 %v488
      %v1906 = vpop.f32.mrf.mxu0
      %v1907 = vadd.f32 0.0, %v1906
      %v1908 = vpop.f32.mrf.mxu0
      %1909 = vmatprep.mubr.f32.mxu0 0.0
      %1910 = vmatmul.mubr.f32.gmra.mxu0 %v491
      %v1911 = vpop.f32.mrf.mxu0
      %v1912 = vadd.f32 0.0, %v1911
      %v1913 = vpop.f32.mrf.mxu0
      %1914 = vmatprep.mubr.f32.mxu0 0.0
      %1915 = vmatmul.mubr.f32.gmra.mxu0 %v494
      %v1916 = vpop.f32.mrf.mxu0
      %v1917 = vadd.f32 0.0, %v1916
      %v1918 = vpop.f32.mrf.mxu0
      %1919 = vmatprep.mubr.f32.mxu0 0.0
      %1920 = vmatmul.mubr.f32.gmra.mxu0 %v497
      %v1921 = vpop.f32.mrf.mxu0
      %v1922 = vadd.f32 0.0, %v1921
      %v1923 = vpop.f32.mrf.mxu0
      %1924 = vmatprep.mubr.f32.mxu0 0.0
      %1925 = vmatmul.mubr.f32.gmra.mxu0 %v952
      %v1926 = vpop.f32.mrf.mxu0
      %v1927 = vadd.f32 0.0, %v1926
      %v1928 = vpop.f32.mrf.mxu0
      %1929 = vmatprep.mubr.f32.mxu0 0.0
      %1930 = vmatmul.mubr.f32.gmra.mxu0 %v955
      %v1931 = vpop.f32.mrf.mxu0
      %v1932 = vadd.f32 0.0, %v1931
      %v1933 = vpop.f32.mrf.mxu0
      %1934 = vmatprep.mubr.f32.mxu0 0.0
      %1935 = vmatmul.mubr.f32.gmra.mxu0 %v1217
      %v1936 = vpop.f32.mrf.mxu0
      %v1937 = vadd.f32 0.0, %v1936
      %v1938 = vpop.f32.mrf.mxu0
      %1939 = vmatprep.mubr.f32.mxu0 0.0
      %1940 = vmatmul.mubr.f32.gmra.mxu0 %v1220
      %v1941 = vpop.f32.mrf.mxu0
      %v1942 = vadd.f32 0.0, %v1941
      %v1943 = vpop.f32.mrf.mxu0
      %1944 = vmatprep.mubr.f32.mxu0 0.0
      %1945 = vmatmul.mubr.f32.gmra.mxu0 %v413
      %v1946 = vpop.f32.mrf.mxu0
      %v1947 = vadd.f32 0.0, %v1946
      %v1948 = vpop.f32.mrf.mxu0
      %1949 = vmatprep.mubr.f32.mxu0 0.0
      %1950 = vmatmul.mubr.f32.gmra.mxu0 %v413
      %v1951 = vpop.f32.mrf.mxu0
      %v1952 = vadd.f32 0.0, %v1951
      %v1953 = vpop.f32.mrf.mxu0
      %1954 = vmatprep.mubr.f32.mxu0 0.0
      %1955 = vmatmul.mubr.f32.gmra.mxu0 %v413
      %v1956 = vpop.f32.mrf.mxu0
      %v1957 = vadd.f32 0.0, %v1956
      %v1958 = vpop.f32.mrf.mxu0
      %1959 = vmatprep.mubr.f32.mxu0 0.0
      %1960 = vmatmul.mubr.f32.gmra.mxu0 %v413
      %v1961 = vpop.f32.mrf.mxu0
      %v1962 = vadd.f32 0.0, %v1961
      %v1963 = vpop.f32.mrf.mxu0
      %1964 = vdwg.mxu0
      %v1965 = vadd.f32 %v1706, %v1807
      %v1966 = vadd.f32 %v1707, %v1812
      %v1967 = vadd.f32 %v1708, %v1817
      %v1968 = vadd.f32 %v1709, %v1822
      %v1969 = vadd.f32 %v1710, %v1827
      %v1970 = vadd.f32 %v1711, %v1832
      %v1971 = vadd.f32 %v1712, %v1837
      %v1972 = vadd.f32 %v1713, %v1842
      %v1973 = vadd.f32 %v1714, %v1847
      %v1974 = vadd.f32 %v1715, %v1852
      %v1975 = vadd.f32 %v1716, %v1857
      %v1976 = vadd.f32 %v1717, %v1862
      %v1977 = vadd.f32 %v1718, %v1867
      %v1978 = vadd.f32 %v1719, %v1872
      %v1979 = vadd.f32 %v1720, %v1877
      %v1980 = vadd.f32 %v1721, %v1882
      %v1981 = vadd.f32 %v1722, %v1887
      %v1982 = vadd.f32 %v1723, %v1892
      %v1983 = vadd.f32 %v1724, %v1897
      %v1984 = vadd.f32 %v1725, %v1902
      %v1985 = vadd.f32 %v1726, %v1907
      %v1986 = vadd.f32 %v1727, %v1912
      %v1987 = vadd.f32 %v1728, %v1917
      %v1988 = vadd.f32 %v1729, %v1922
      %v1989 = vadd.f32 %v1730, %v1927
      %v1990 = vadd.f32 %v1731, %v1932
      %v1991 = vadd.f32 %v1732, %v1937
      %v1992 = vadd.f32 %v1733, %v1942
      %v1993 = vadd.f32 %v1734, %v1947
      %v1994 = vadd.f32 %v1735, %v1952
      %v1995 = vadd.f32 %v1736, %v1957
      %v1996 = vadd.f32 %v1737, %v1962
      %s1997 = scalar_lea.vmem %s3, 48
      %v1998 = vld [vmem:[%s1997] sm:$0xff]
      %1999 = vmatprep.subr.mxu0 0.0
      %2000 = vmatpush1.msra.mxu0 0.0
      %2001 = vmatprep.subr.mxu0 0.0
      %2002 = vmatpush1.msra.mxu0 0.0
      %2003 = vmatprep.subr.mxu0 0.0
      %2004 = vmatpush1.msra.mxu0 0.0
      %2005 = vmatprep.subr.mxu0 0.0
      %2006 = vmatpush1.msra.mxu0 0.0
      %2007 = vmatprep.subr.mxu0 0.0
      %2008 = vmatpush1.msra.mxu0 0.0
      %2009 = vmatprep.subr.mxu0 0.0
      %2010 = vmatpush1.msra.mxu0 0.0
      %2011 = vmatprep.subr.mxu0 0.0
      %2012 = vmatpush1.msra.mxu0 0.0
      %2013 = vmatprep.subr.mxu0 0.0
      %2014 = vmatpush1.msra.mxu0 0.0
      %2015 = vmatprep.subr.mxu0 0.0
      %2016 = vmatpush1.msra.mxu0 0.0
      %2017 = vmatprep.subr.mxu0 0.0
      %2018 = vmatpush1.msra.mxu0 0.0
      %2019 = vmatprep.subr.mxu0 0.0
      %2020 = vmatpush1.msra.mxu0 0.0
      %2021 = vmatprep.subr.mxu0 0.0
      %2022 = vmatpush1.msra.mxu0 0.0
      %2023 = vmatprep.subr.mxu0 0.0
      %2024 = vmatpush1.msra.mxu0 0.0
      %2025 = vmatprep.subr.mxu0 0.0
      %2026 = vmatpush1.msra.mxu0 0.0
      %2027 = vmatprep.subr.mxu0 0.0
      %2028 = vmatpush1.msra.mxu0 0.0
      %2029 = vmatprep.subr.mxu0 0.0
      %2030 = vmatpush1.msra.mxu0 %v1998
      %2031 = vmatprep.subr.mxu0 0.0
      %2032 = vmatpush2.msra.mxu0 0.0
      %2033 = vmatprep.subr.mxu0 0.0
      %2034 = vmatpush2.msra.mxu0 0.0
      %2035 = vmatprep.subr.mxu0 0.0
      %2036 = vmatpush2.msra.mxu0 0.0
      %2037 = vmatprep.subr.mxu0 0.0
      %2038 = vmatpush2.msra.mxu0 0.0
      %2039 = vmatprep.subr.mxu0 0.0
      %2040 = vmatpush2.msra.mxu0 0.0
      %2041 = vmatprep.subr.mxu0 0.0
      %2042 = vmatpush2.msra.mxu0 0.0
      %2043 = vmatprep.subr.mxu0 0.0
      %2044 = vmatpush2.msra.mxu0 0.0
      %2045 = vmatprep.subr.mxu0 0.0
      %2046 = vmatpush2.msra.mxu0 0.0
      %2047 = vmatprep.subr.mxu0 0.0
      %2048 = vmatpush2.msra.mxu0 0.0
      %2049 = vmatprep.subr.mxu0 0.0
      %2050 = vmatpush2.msra.mxu0 0.0
      %2051 = vmatprep.subr.mxu0 0.0
      %2052 = vmatpush2.msra.mxu0 0.0
      %2053 = vmatprep.subr.mxu0 0.0
      %2054 = vmatpush2.msra.mxu0 0.0
      %2055 = vmatprep.subr.mxu0 0.0
      %2056 = vmatpush2.msra.mxu0 0.0
      %2057 = vmatprep.subr.mxu0 0.0
      %2058 = vmatpush2.msra.mxu0 0.0
      %2059 = vmatprep.subr.mxu0 0.0
      %2060 = vmatpush2.msra.mxu0 0.0
      %2061 = vmatprep.subr.mxu0 0.0
      %2062 = vmatpush2.msra.mxu0 0.0
      %2063 = vmatprep.mubr.f32.mxu0 0.0
      %2064 = vmatmul.mubr.f32.gmra.mxu0 %v434
      %v2065 = vpop.f32.mrf.mxu0
      %v2066 = vadd.f32 0.0, %v2065
      %v2067 = vpop.f32.mrf.mxu0
      %2068 = vmatprep.mubr.f32.mxu0 0.0
      %2069 = vmatmul.mubr.f32.gmra.mxu0 %v437
      %v2070 = vpop.f32.mrf.mxu0
      %v2071 = vadd.f32 0.0, %v2070
      %v2072 = vpop.f32.mrf.mxu0
      %2073 = vmatprep.mubr.f32.mxu0 0.0
      %2074 = vmatmul.mubr.f32.gmra.mxu0 %v440
      %v2075 = vpop.f32.mrf.mxu0
      %v2076 = vadd.f32 0.0, %v2075
      %v2077 = vpop.f32.mrf.mxu0
      %2078 = vmatprep.mubr.f32.mxu0 0.0
      %2079 = vmatmul.mubr.f32.gmra.mxu0 %v443
      %v2080 = vpop.f32.mrf.mxu0
      %v2081 = vadd.f32 0.0, %v2080
      %v2082 = vpop.f32.mrf.mxu0
      %2083 = vmatprep.mubr.f32.mxu0 0.0
      %2084 = vmatmul.mubr.f32.gmra.mxu0 %v446
      %v2085 = vpop.f32.mrf.mxu0
      %v2086 = vadd.f32 0.0, %v2085
      %v2087 = vpop.f32.mrf.mxu0
      %2088 = vmatprep.mubr.f32.mxu0 0.0
      %2089 = vmatmul.mubr.f32.gmra.mxu0 %v449
      %v2090 = vpop.f32.mrf.mxu0
      %v2091 = vadd.f32 0.0, %v2090
      %v2092 = vpop.f32.mrf.mxu0
      %2093 = vmatprep.mubr.f32.mxu0 0.0
      %2094 = vmatmul.mubr.f32.gmra.mxu0 %v452
      %v2095 = vpop.f32.mrf.mxu0
      %v2096 = vadd.f32 0.0, %v2095
      %v2097 = vpop.f32.mrf.mxu0
      %2098 = vmatprep.mubr.f32.mxu0 0.0
      %2099 = vmatmul.mubr.f32.gmra.mxu0 %v455
      %v2100 = vpop.f32.mrf.mxu0
      %v2101 = vadd.f32 0.0, %v2100
      %v2102 = vpop.f32.mrf.mxu0
      %2103 = vmatprep.mubr.f32.mxu0 0.0
      %2104 = vmatmul.mubr.f32.gmra.mxu0 %v458
      %v2105 = vpop.f32.mrf.mxu0
      %v2106 = vadd.f32 0.0, %v2105
      %v2107 = vpop.f32.mrf.mxu0
      %2108 = vmatprep.mubr.f32.mxu0 0.0
      %2109 = vmatmul.mubr.f32.gmra.mxu0 %v461
      %v2110 = vpop.f32.mrf.mxu0
      %v2111 = vadd.f32 0.0, %v2110
      %v2112 = vpop.f32.mrf.mxu0
      %2113 = vmatprep.mubr.f32.mxu0 0.0
      %2114 = vmatmul.mubr.f32.gmra.mxu0 %v464
      %v2115 = vpop.f32.mrf.mxu0
      %v2116 = vadd.f32 0.0, %v2115
      %v2117 = vpop.f32.mrf.mxu0
      %2118 = vmatprep.mubr.f32.mxu0 0.0
      %2119 = vmatmul.mubr.f32.gmra.mxu0 %v467
      %v2120 = vpop.f32.mrf.mxu0
      %v2121 = vadd.f32 0.0, %v2120
      %v2122 = vpop.f32.mrf.mxu0
      %2123 = vmatprep.mubr.f32.mxu0 0.0
      %2124 = vmatmul.mubr.f32.gmra.mxu0 %v470
      %v2125 = vpop.f32.mrf.mxu0
      %v2126 = vadd.f32 0.0, %v2125
      %v2127 = vpop.f32.mrf.mxu0
      %2128 = vmatprep.mubr.f32.mxu0 0.0
      %2129 = vmatmul.mubr.f32.gmra.mxu0 %v473
      %v2130 = vpop.f32.mrf.mxu0
      %v2131 = vadd.f32 0.0, %v2130
      %v2132 = vpop.f32.mrf.mxu0
      %2133 = vmatprep.mubr.f32.mxu0 0.0
      %2134 = vmatmul.mubr.f32.gmra.mxu0 %v476
      %v2135 = vpop.f32.mrf.mxu0
      %v2136 = vadd.f32 0.0, %v2135
      %v2137 = vpop.f32.mrf.mxu0
      %2138 = vmatprep.mubr.f32.mxu0 0.0
      %2139 = vmatmul.mubr.f32.gmra.mxu0 %v479
      %v2140 = vpop.f32.mrf.mxu0
      %v2141 = vadd.f32 0.0, %v2140
      %v2142 = vpop.f32.mrf.mxu0
      %2143 = vmatprep.mubr.f32.mxu0 0.0
      %2144 = vmatmul.mubr.f32.gmra.mxu0 %v482
      %v2145 = vpop.f32.mrf.mxu0
      %v2146 = vadd.f32 0.0, %v2145
      %v2147 = vpop.f32.mrf.mxu0
      %2148 = vmatprep.mubr.f32.mxu0 0.0
      %2149 = vmatmul.mubr.f32.gmra.mxu0 %v485
      %v2150 = vpop.f32.mrf.mxu0
      %v2151 = vadd.f32 0.0, %v2150
      %v2152 = vpop.f32.mrf.mxu0
      %2153 = vmatprep.mubr.f32.mxu0 0.0
      %2154 = vmatmul.mubr.f32.gmra.mxu0 %v488
      %v2155 = vpop.f32.mrf.mxu0
      %v2156 = vadd.f32 0.0, %v2155
      %v2157 = vpop.f32.mrf.mxu0
      %2158 = vmatprep.mubr.f32.mxu0 0.0
      %2159 = vmatmul.mubr.f32.gmra.mxu0 %v491
      %v2160 = vpop.f32.mrf.mxu0
      %v2161 = vadd.f32 0.0, %v2160
      %v2162 = vpop.f32.mrf.mxu0
      %2163 = vmatprep.mubr.f32.mxu0 0.0
      %2164 = vmatmul.mubr.f32.gmra.mxu0 %v494
      %v2165 = vpop.f32.mrf.mxu0
      %v2166 = vadd.f32 0.0, %v2165
      %v2167 = vpop.f32.mrf.mxu0
      %2168 = vmatprep.mubr.f32.mxu0 0.0
      %2169 = vmatmul.mubr.f32.gmra.mxu0 %v497
      %v2170 = vpop.f32.mrf.mxu0
      %v2171 = vadd.f32 0.0, %v2170
      %v2172 = vpop.f32.mrf.mxu0
      %2173 = vmatprep.mubr.f32.mxu0 0.0
      %2174 = vmatmul.mubr.f32.gmra.mxu0 %v952
      %v2175 = vpop.f32.mrf.mxu0
      %v2176 = vadd.f32 0.0, %v2175
      %v2177 = vpop.f32.mrf.mxu0
      %2178 = vmatprep.mubr.f32.mxu0 0.0
      %2179 = vmatmul.mubr.f32.gmra.mxu0 %v955
      %v2180 = vpop.f32.mrf.mxu0
      %v2181 = vadd.f32 0.0, %v2180
      %v2182 = vpop.f32.mrf.mxu0
      %2183 = vmatprep.mubr.f32.mxu0 0.0
      %2184 = vmatmul.mubr.f32.gmra.mxu0 %v1217
      %v2185 = vpop.f32.mrf.mxu0
      %v2186 = vadd.f32 0.0, %v2185
      %v2187 = vpop.f32.mrf.mxu0
      %2188 = vmatprep.mubr.f32.mxu0 0.0
      %2189 = vmatmul.mubr.f32.gmra.mxu0 %v1220
      %v2190 = vpop.f32.mrf.mxu0
      %v2191 = vadd.f32 0.0, %v2190
      %v2192 = vpop.f32.mrf.mxu0
      %2193 = vmatprep.mubr.f32.mxu0 0.0
      %2194 = vmatmul.mubr.f32.gmra.mxu0 %v413
      %v2195 = vpop.f32.mrf.mxu0
      %v2196 = vadd.f32 0.0, %v2195
      %v2197 = vpop.f32.mrf.mxu0
      %2198 = vmatprep.mubr.f32.mxu0 0.0
      %2199 = vmatmul.mubr.f32.gmra.mxu0 %v413
      %v2200 = vpop.f32.mrf.mxu0
      %v2201 = vadd.f32 0.0, %v2200
      %v2202 = vpop.f32.mrf.mxu0
      %2203 = vmatprep.mubr.f32.mxu0 0.0
      %2204 = vmatmul.mubr.f32.gmra.mxu0 %v413
      %v2205 = vpop.f32.mrf.mxu0
      %v2206 = vadd.f32 0.0, %v2205
      %v2207 = vpop.f32.mrf.mxu0
      %2208 = vmatprep.mubr.f32.mxu0 0.0
      %2209 = vmatmul.mubr.f32.gmra.mxu0 %v413
      %v2210 = vpop.f32.mrf.mxu0
      %v2211 = vadd.f32 0.0, %v2210
      %v2212 = vpop.f32.mrf.mxu0
      %2213 = vmatprep.mubr.f32.mxu0 0.0
      %2214 = vmatmul.mubr.f32.gmra.mxu0 %v413
      %v2215 = vpop.f32.mrf.mxu0
      %v2216 = vadd.f32 0.0, %v2215
      %v2217 = vpop.f32.mrf.mxu0
      %2218 = vmatprep.mubr.f32.mxu0 0.0
      %2219 = vmatmul.mubr.f32.gmra.mxu0 %v413
      %v2220 = vpop.f32.mrf.mxu0
      %v2221 = vadd.f32 0.0, %v2220
      %v2222 = vpop.f32.mrf.mxu0
      %2223 = vdwg.mxu0
      %v2224 = vadd.f32 %v1965, %v2066
      %v2225 = vadd.f32 %v1966, %v2071
      %v2226 = vadd.f32 %v1967, %v2076
      %v2227 = vadd.f32 %v1968, %v2081
      %v2228 = vadd.f32 %v1969, %v2086
      %v2229 = vadd.f32 %v1970, %v2091
      %v2230 = vadd.f32 %v1971, %v2096
      %v2231 = vadd.f32 %v1972, %v2101
      %v2232 = vadd.f32 %v1973, %v2106
      %v2233 = vadd.f32 %v1974, %v2111
      %v2234 = vadd.f32 %v1975, %v2116
      %v2235 = vadd.f32 %v1976, %v2121
      %v2236 = vadd.f32 %v1977, %v2126
      %v2237 = vadd.f32 %v1978, %v2131
      %v2238 = vadd.f32 %v1979, %v2136
      %v2239 = vadd.f32 %v1980, %v2141
      %v2240 = vadd.f32 %v1981, %v2146
      %v2241 = vadd.f32 %v1982, %v2151
      %v2242 = vadd.f32 %v1983, %v2156
      %v2243 = vadd.f32 %v1984, %v2161
      %v2244 = vadd.f32 %v1985, %v2166
      %v2245 = vadd.f32 %v1986, %v2171
      %v2246 = vadd.f32 %v1987, %v2176
      %v2247 = vadd.f32 %v1988, %v2181
      %v2248 = vadd.f32 %v1989, %v2186
      %v2249 = vadd.f32 %v1990, %v2191
      %v2250 = vadd.f32 %v1991, %v2196
      %v2251 = vadd.f32 %v1992, %v2201
      %v2252 = vadd.f32 %v1993, %v2206
      %v2253 = vadd.f32 %v1994, %v2211
      %v2254 = vadd.f32 %v1995, %v2216
      %v2255 = vadd.f32 %v1996, %v2221
      %v2256 = vld [vmem:[%s4] sm:$0x1]
      %v2258 = vlaneseq
      %v2259 = vshrl.u32 %v2258, 7
      %v2260 = vsub.s32 0, %v2259
      %v2261 = vrot.slane %v2256, %v2260
      %v2263 = vadd.f32 %v2224, %v2261
      %v2264 = vadd.f32 %v2225, %v2261
      %v2265 = vadd.f32 %v2226, %v2261
      %v2266 = vadd.f32 %v2227, %v2261
      %v2267 = vadd.f32 %v2228, %v2261
      %v2268 = vadd.f32 %v2229, %v2261
      %v2269 = vadd.f32 %v2230, %v2261
      %v2270 = vadd.f32 %v2231, %v2261
      %v2271 = vadd.f32 %v2232, %v2261
      %v2272 = vadd.f32 %v2233, %v2261
      %v2273 = vadd.f32 %v2234, %v2261
      %v2274 = vadd.f32 %v2235, %v2261
      %v2275 = vadd.f32 %v2236, %v2261
      %v2276 = vadd.f32 %v2237, %v2261
      %v2277 = vadd.f32 %v2238, %v2261
      %v2278 = vadd.f32 %v2239, %v2261
      %v2279 = vadd.f32 %v2240, %v2261
      %v2280 = vadd.f32 %v2241, %v2261
      %v2281 = vadd.f32 %v2242, %v2261
      %v2282 = vadd.f32 %v2243, %v2261
      %v2283 = vadd.f32 %v2244, %v2261
      %v2284 = vadd.f32 %v2245, %v2261
      %v2285 = vadd.f32 %v2246, %v2261
      %v2286 = vadd.f32 %v2247, %v2261
      %v2287 = vadd.f32 %v2248, %v2261
      %v2288 = vadd.f32 %v2249, %v2261
      %v2289 = vadd.f32 %v2250, %v2261
      %v2290 = vadd.f32 %v2251, %v2261
      %v2291 = vadd.f32 %v2252, %v2261
      %v2292 = vadd.f32 %v2253, %v2261
      %v2293 = vadd.f32 %v2254, %v2261
      %v2294 = vadd.f32 %v2255, %v2261
      %vm2295 = vcmask 130048
      %v2296 = vsel %vm2295, %v2263, 0.0
      %v2297 = vsel %vm2295, %v2264, 0.0
      %v2298 = vsel %vm2295, %v2265, 0.0
      %v2299 = vsel %vm2295, %v2266, 0.0
      %v2300 = vsel %vm2295, %v2267, 0.0
      %v2301 = vsel %vm2295, %v2268, 0.0
      %v2302 = vsel %vm2295, %v2269, 0.0
      %v2303 = vsel %vm2295, %v2270, 0.0
      %v2304 = vsel %vm2295, %v2271, 0.0
      %v2305 = vsel %vm2295, %v2272, 0.0
      %v2306 = vsel %vm2295, %v2273, 0.0
      %v2307 = vsel %vm2295, %v2274, 0.0
      %v2308 = vsel %vm2295, %v2275, 0.0
      %v2309 = vsel %vm2295, %v2276, 0.0
      %v2310 = vsel %vm2295, %v2277, 0.0
      %v2311 = vsel %vm2295, %v2278, 0.0
      %v2312 = vsel %vm2295, %v2279, 0.0
      %v2313 = vsel %vm2295, %v2280, 0.0
      %v2314 = vsel %vm2295, %v2281, 0.0
      %v2315 = vsel %vm2295, %v2282, 0.0
      %v2316 = vsel %vm2295, %v2283, 0.0
      %v2317 = vsel %vm2295, %v2284, 0.0
      %v2318 = vsel %vm2295, %v2285, 0.0
      %v2319 = vsel %vm2295, %v2286, 0.0
      %v2320 = vsel %vm2295, %v2287, 0.0
      %v2321 = vsel %vm2295, %v2288, 0.0
      %v2322 = vsel %vm2295, %v2289, 0.0
      %v2323 = vsel %vm2295, %v2290, 0.0
      %v2324 = vsel %vm2295, %v2291, 0.0
      %v2325 = vsel %vm2295, %v2292, 0.0
      %v2326 = vsel %vm2295, %v2293, 0.0
      %v2327 = vsel %vm2295, %v2294, 0.0
      %v2328 = vadd.f32 %v2296, %v2297
      %v2329 = vadd.f32 %v2328, %v2298
      %v2330 = vadd.f32 %v2329, %v2299
      %v2331 = vadd.f32 %v2330, %v2300
      %v2332 = vadd.f32 %v2331, %v2301
      %v2333 = vadd.f32 %v2332, %v2302
      %v2334 = vadd.f32 %v2333, %v2303
      %v2335 = vadd.f32 %v2334, %v2304
      %v2336 = vadd.f32 %v2335, %v2305
      %v2337 = vadd.f32 %v2336, %v2306
      %v2338 = vadd.f32 %v2337, %v2307
      %v2339 = vadd.f32 %v2338, %v2308
      %v2340 = vadd.f32 %v2339, %v2309
      %v2341 = vadd.f32 %v2340, %v2310
      %v2342 = vadd.f32 %v2341, %v2311
      %v2343 = vadd.f32 %v2342, %v2312
      %v2344 = vadd.f32 %v2343, %v2313
      %v2345 = vadd.f32 %v2344, %v2314
      %v2346 = vadd.f32 %v2345, %v2315
      %v2347 = vadd.f32 %v2346, %v2316
      %v2348 = vadd.f32 %v2347, %v2317
      %v2349 = vadd.f32 %v2348, %v2318
      %v2350 = vadd.f32 %v2349, %v2319
      %v2351 = vadd.f32 %v2350, %v2320
      %v2352 = vadd.f32 %v2351, %v2321
      %v2353 = vadd.f32 %v2352, %v2322
      %v2354 = vadd.f32 %v2353, %v2323
      %v2355 = vadd.f32 %v2354, %v2324
      %v2356 = vadd.f32 %v2355, %v2325
      %v2357 = vadd.f32 %v2356, %v2326
      %v2358 = vadd.f32 %v2357, %v2327
      %v2359 = vrot.slane %v2358, 4
      %v2360 = vadd.f32 %v2358, %v2359
      %v2361 = vrot.slane %v2360, 2
      %v2362 = vadd.f32 %v2360, %v2361
      %v2363 = vrot.slane %v2362, 1
      %v2364 = vadd.f32 %v2362, %v2363
      %v2365 = vmul.f32 %v2296, %v2296
      %v2366 = vmul.f32 %v2297, %v2297
      %v2367 = vmul.f32 %v2298, %v2298
      %v2368 = vmul.f32 %v2299, %v2299
      %v2369 = vmul.f32 %v2300, %v2300
      %v2370 = vmul.f32 %v2301, %v2301
      %v2371 = vmul.f32 %v2302, %v2302
      %v2372 = vmul.f32 %v2303, %v2303
      %v2373 = vmul.f32 %v2304, %v2304
      %v2374 = vmul.f32 %v2305, %v2305
      %v2375 = vmul.f32 %v2306, %v2306
      %v2376 = vmul.f32 %v2307, %v2307
      %v2377 = vmul.f32 %v2308, %v2308
      %v2378 = vmul.f32 %v2309, %v2309
      %v2379 = vmul.f32 %v2310, %v2310
      %v2380 = vmul.f32 %v2311, %v2311
      %v2381 = vmul.f32 %v2312, %v2312
      %v2382 = vmul.f32 %v2313, %v2313
      %v2383 = vmul.f32 %v2314, %v2314
      %v2384 = vmul.f32 %v2315, %v2315
      %v2385 = vmul.f32 %v2316, %v2316
      %v2386 = vmul.f32 %v2317, %v2317
      %v2387 = vmul.f32 %v2318, %v2318
      %v2388 = vmul.f32 %v2319, %v2319
      %v2389 = vmul.f32 %v2320, %v2320
      %v2390 = vmul.f32 %v2321, %v2321
      %v2391 = vmul.f32 %v2322, %v2322
      %v2392 = vmul.f32 %v2323, %v2323
      %v2393 = vmul.f32 %v2324, %v2324
      %v2394 = vmul.f32 %v2325, %v2325
      %v2395 = vmul.f32 %v2326, %v2326
      %v2396 = vmul.f32 %v2327, %v2327
      %v2397 = vadd.f32 %v2365, %v2366
      %v2398 = vadd.f32 %v2397, %v2367
      %v2399 = vadd.f32 %v2398, %v2368
      %v2400 = vadd.f32 %v2399, %v2369
      %v2401 = vadd.f32 %v2400, %v2370
      %v2402 = vadd.f32 %v2401, %v2371
      %v2403 = vadd.f32 %v2402, %v2372
      %v2404 = vadd.f32 %v2403, %v2373
      %v2405 = vadd.f32 %v2404, %v2374
      %v2406 = vadd.f32 %v2405, %v2375
      %v2407 = vadd.f32 %v2406, %v2376
      %v2408 = vadd.f32 %v2407, %v2377
      %v2409 = vadd.f32 %v2408, %v2378
      %v2410 = vadd.f32 %v2409, %v2379
      %v2411 = vadd.f32 %v2410, %v2380
      %v2412 = vadd.f32 %v2411, %v2381
      %v2413 = vadd.f32 %v2412, %v2382
      %v2414 = vadd.f32 %v2413, %v2383
      %v2415 = vadd.f32 %v2414, %v2384
      %v2416 = vadd.f32 %v2415, %v2385
      %v2417 = vadd.f32 %v2416, %v2386
      %v2418 = vadd.f32 %v2417, %v2387
      %v2419 = vadd.f32 %v2418, %v2388
      %v2420 = vadd.f32 %v2419, %v2389
      %v2421 = vadd.f32 %v2420, %v2390
      %v2422 = vadd.f32 %v2421, %v2391
      %v2423 = vadd.f32 %v2422, %v2392
      %v2424 = vadd.f32 %v2423, %v2393
      %v2425 = vadd.f32 %v2424, %v2394
      %v2426 = vadd.f32 %v2425, %v2395
      %v2427 = vadd.f32 %v2426, %v2396
      %v2428 = vrot.slane %v2427, 4
      %v2429 = vadd.f32 %v2427, %v2428
      %v2430 = vrot.slane %v2429, 2
      %v2431 = vadd.f32 %v2429, %v2430
      %v2432 = vrot.slane %v2431, 1
      %v2433 = vadd.f32 %v2431, %v2432
      %vm2434 = vcmask 1040384
      %v2435 = vsel %vm2434, %v2364, %v2433
      %2436 = vst [vmem:[%s265] sm:$0x3] %v2435
      %2437 = vxpose.xlu0.b32.start [1/16] %v2296, 128
      %2438 = vxpose.xlu0.b32.cont [2/16] %v2297, 128
      %2439 = vxpose.xlu0.b32.cont [3/16] %v2298, 128
      %2440 = vxpose.xlu0.b32.cont [4/16] %v2299, 128
      %2441 = vxpose.xlu0.b32.cont [5/16] %v2300, 128
      %2442 = vxpose.xlu0.b32.cont [6/16] %v2301, 128
      %2443 = vxpose.xlu0.b32.cont [7/16] %v2302, 128
      %2444 = vxpose.xlu0.b32.cont [8/16] %v2303, 128
      %2445 = vxpose.xlu0.b32.cont [9/16] %v2304, 128
      %2446 = vxpose.xlu0.b32.cont [10/16] %v2305, 128
      %2447 = vxpose.xlu0.b32.cont [11/16] %v2306, 128
      %2448 = vxpose.xlu0.b32.cont [12/16] %v2307, 128
      %2449 = vxpose.xlu0.b32.cont [13/16] %v2308, 128
      %2450 = vxpose.xlu0.b32.cont [14/16] %v2309, 128
      %2451 = vxpose.xlu0.b32.cont [15/16] %v2310, 128
      %2452 = vxpose.xlu0.b32.end [16/16] %v2311, 128
      %v2453 = vpop.trf.xlu0
      %v2454 = vpop.trf.xlu0
      %v2455 = vpop.trf.xlu0
      %v2456 = vpop.trf.xlu0
      %v2457 = vpop.trf.xlu0
      %v2458 = vpop.trf.xlu0
      %v2459 = vpop.trf.xlu0
      %v2460 = vpop.trf.xlu0
      %v2461 = vpop.trf.xlu0
      %v2462 = vpop.trf.xlu0
      %v2463 = vpop.trf.xlu0
      %v2464 = vpop.trf.xlu0
      %v2465 = vpop.trf.xlu0
      %v2466 = vpop.trf.xlu0
      %v2467 = vpop.trf.xlu0
      %v2468 = vpop.trf.xlu0
      %2469 = vxpose.xlu0.b32.start [1/16] %v2312, 128
      %2470 = vxpose.xlu0.b32.cont [2/16] %v2313, 128
      %2471 = vxpose.xlu0.b32.cont [3/16] %v2314, 128
      %2472 = vxpose.xlu0.b32.cont [4/16] %v2315, 128
      %2473 = vxpose.xlu0.b32.cont [5/16] %v2316, 128
      %2474 = vxpose.xlu0.b32.cont [6/16] %v2317, 128
      %2475 = vxpose.xlu0.b32.cont [7/16] %v2318, 128
      %2476 = vxpose.xlu0.b32.cont [8/16] %v2319, 128
      %2477 = vxpose.xlu0.b32.cont [9/16] %v2320, 128
      %2478 = vxpose.xlu0.b32.cont [10/16] %v2321, 128
      %2479 = vxpose.xlu0.b32.cont [11/16] %v2322, 128
      %2480 = vxpose.xlu0.b32.cont [12/16] %v2323, 128
      %2481 = vxpose.xlu0.b32.cont [13/16] %v2324, 128
      %2482 = vxpose.xlu0.b32.cont [14/16] %v2325, 128
      %2483 = vxpose.xlu0.b32.cont [15/16] %v2326, 128
      %2484 = vxpose.xlu0.b32.end [16/16] %v2327, 128
      %v2485 = vpop.trf.xlu0
      %v2486 = vpop.trf.xlu0
      %v2487 = vpop.trf.xlu0
      %v2488 = vpop.trf.xlu0
      %v2489 = vpop.trf.xlu0
      %v2490 = vpop.trf.xlu0
      %v2491 = vpop.trf.xlu0
      %v2492 = vpop.trf.xlu0
      %v2493 = vpop.trf.xlu0
      %v2494 = vpop.trf.xlu0
      %v2495 = vpop.trf.xlu0
      %v2496 = vpop.trf.xlu0
      %v2497 = vpop.trf.xlu0
      %v2498 = vpop.trf.xlu0
      %v2499 = vpop.trf.xlu0
      %v2500 = vpop.trf.xlu0
      %2501 = vst [vmem:[%s260] sm:$0xff] %v2453
      %2502 = vst [vmem:[%s260 + $0x8] sm:$0xff] %v2485
      %2503 = vst [vmem:[%s260 + $0x10] sm:$0xff] %v2454
      %2504 = vst [vmem:[%s260 + $0x18] sm:$0xff] %v2486
      %s2505 = smul.u32 2, %s18
      %p2506 = scmp.lt.s32.totalorder %s2505, 3
      %s2507 = scalar_select %p2506, %s2505, 3
      %s2508 = smul.addr %s2507, 2
      %s2509 = smul.addr %s2508, 8
      %s2510 = scalar_lea.vmem %s5, %s2509
      %p2511 = scmp.lt.s32.totalorder %s18, 1
      %s2512 = scalar_select %p2511, %s18, 1
      %s2513 = smul.addr %s2512, 2
      %s2514 = scalar_lea.vmem %s6, %s2513
      // Predicated region
      $region41: #{stacked_conv_forward.4} parent=39 // pred_check
        %p2515 = pneg %p146
      $region42: #{stacked_conv_forward.4} parent=39 // pred_check_branch
        %2517 = sbr.rel (%p2515) target = $region44
      $region43: #{stacked_conv_forward.4} parent=39 // pred_region
        %s2518 = smul.u32 2, %s18
      $region44: #{stacked_conv_forward.4} parent=39 // pred_fallthru
        _
      // Predicated region
      $region45: #{stacked_conv_forward.4} parent=39 // pred_check
        %p2519 = pneg %p172
      $region46: #{stacked_conv_forward.4} parent=39 // pred_check_branch
        %2521 = sbr.rel (%p2519) target = $region48
      $region47: #{stacked_conv_forward.4} parent=39 // pred_region
        _
      $region48: #{stacked_conv_forward.4} parent=39 // pred_fallthru
        _
    $region40: #{stacked_conv_forward.4} parent=5 // pred_fallthru
      _
    %p2522 = scmp.le.s32.totalorder 2, %s13
    // Predicated region
    $region49: #{stacked_conv_forward.4} parent=5 // pred_check
      %p2523 = pneg %p2522
    $region50: #{stacked_conv_forward.4} parent=5 // pred_check_branch
      %2525 = sbr.rel (%p2523) target = $region52
    $region51: #{stacked_conv_forward.4} parent=5 // pred_region
      %s2526 = ssub.s32 %s13, 2
      // Predicated region
      $region53: #{stacked_conv_forward.4} parent=51 // pred_check
        %p2527 = pneg %p152
      $region54: #{stacked_conv_forward.4} parent=51 // pred_check_branch
        %2529 = sbr.rel (%p2527) target = $region56
      $region55: #{stacked_conv_forward.4} parent=51 // pred_region
        %s2530 = smul.u32 2, %s19
        %p2531 = scmp.lt.s32.totalorder %s2530, 3
        %s2532 = scalar_select %p2531, %s2530, 3
        %s2533 = smul.addr %s2532, 2
        %s2534 = smul.addr %s2533, 8
        %s2535 = scalar_lea.vmem %s5, %s2534
      $region56: #{stacked_conv_forward.4} parent=51 // pred_fallthru
        _
      // Predicated region
      $region57: #{stacked_conv_forward.4} parent=51 // pred_check
        %p2536 = pneg %p178
      $region58: #{stacked_conv_forward.4} parent=51 // pred_check_branch
        %2538 = sbr.rel (%p2536) target = $region60
      $region59: #{stacked_conv_forward.4} parent=51 // pred_region
        %p2539 = scmp.lt.s32.totalorder %s19, 1
        %s2540 = scalar_select %p2539, %s19, 1
        %s2541 = smul.addr %s2540, 2
        %s2542 = scalar_lea.vmem %s6, %s2541
      $region60: #{stacked_conv_forward.4} parent=51 // pred_fallthru
        _
    $region52: #{stacked_conv_forward.4} parent=5 // pred_fallthru
      _
  $region6: #{stacked_conv_forward.4} parent=0 // loop_footer
    %s17 = sadd.s32 1, %s13
  $region7: #{stacked_conv_forward.4} parent=0 // loop_footer_branch
    %12 = sbr.rel target = $region3
  $region8: #{stacked_conv_forward.4} parent=0 // loop_exit
    _

</llo_original>
